<compile_context>
chip_gen: v7x
topology: tpu7x:2x2x1
jax: 0.10.0
libtpu: 0.0.40
codegen_flags: <defaults>
</compile_context>

<pallas_src>
import jax
import jax.numpy as jnp
from jax.experimental import pallas as pl
from jax.experimental.pallas import tpu as pltpu


# ------------------------------------------------------------------ helpers / tiling

def _round_up(x, m):
    return (x + m - 1) // m * m


def _row_tiling(m, max_tile=256):
    """Pick the largest row tile <= max_tile (multiple of 8) and the padded M."""
    row_tile = min(max_tile, _round_up(m, 8))
    m_pad = _round_up(m, row_tile)
    return row_tile, m_pad


# ----------------------------------------------------------------------------- linear

def _linear_kernel(x_ref, w_ref, b_ref, o_ref):
    # x: [row_tile, K] bf16, w: [K, n_tile] bf16, b: [1, n_tile] f32
    acc = jnp.dot(x_ref[...], w_ref[...], preferred_element_type=jnp.float32)
    o_ref[...] = (acc + b_ref[...]).astype(o_ref.dtype)


def linear(x, w, b, *, out_dtype=jnp.bfloat16):
    """x: [M, K] @ w: [K, N] + b: [1, N] -> [M, N].  bf16 MXU inputs, f32 accumulate."""
    M, K = x.shape
    N = w.shape[1]
    row_tile, M_pad = _row_tiling(M)
    x = x.astype(jnp.bfloat16)
    if M_pad != M:
        x = jnp.pad(x, ((0, M_pad - M), (0, 0)))
    # Stream the weight in lane-dense [K, n_tile] blocks (keeps VMEM small at real sizes).
    n_tile = 512 if (N > 512 and N % 512 == 0) else N
    out = pl.pallas_call(
        _linear_kernel,
        out_shape=jax.ShapeDtypeStruct((M_pad, N), out_dtype),
        grid=(M_pad // row_tile, N // n_tile),
        in_specs=[
            pl.BlockSpec((row_tile, K), lambda i, j: (i, 0)),
            pl.BlockSpec((K, n_tile), lambda i, j: (0, j)),
            pl.BlockSpec((1, n_tile), lambda i, j: (0, j)),
        ],
        out_specs=pl.BlockSpec((row_tile, n_tile), lambda i, j: (i, j)),
        compiler_params=pltpu.CompilerParams(
            dimension_semantics=("parallel", "parallel")),
    )(x, w.astype(jnp.bfloat16), b.astype(jnp.float32))
    return out[:M] if M_pad != M else out


# ------------------------------------------------------------------- (add +) layernorm

def _ln_finish(x_f32, g_ref, b_ref, o_ref):
    mean = jnp.mean(x_f32, axis=-1, keepdims=True)
    var = jnp.mean((x_f32 - mean) ** 2, axis=-1, keepdims=True)
    y = (x_f32 - mean) * jax.lax.rsqrt(var + 1e-5)
    o_ref[...] = (y * g_ref[...] + b_ref[...]).astype(o_ref.dtype)


def _ln_kernel(x_ref, g_ref, b_ref, o_ref):
    _ln_finish(x_ref[...].astype(jnp.float32), g_ref, b_ref, o_ref)


def _add_ln_kernel(x_ref, r_ref, g_ref, b_ref, o_ref):
    x = x_ref[...].astype(jnp.float32) + r_ref[...].astype(jnp.float32)
    _ln_finish(x, g_ref, b_ref, o_ref)


def _ln_call(kernel, xs, g, b, out_dtype):
    M, D = xs[0].shape
    row_tile, M_pad = _row_tiling(M)
    if M_pad != M:
        xs = [jnp.pad(x, ((0, M_pad - M), (0, 0))) for x in xs]
    data_specs = [pl.BlockSpec((row_tile, D), lambda i: (i, 0)) for _ in xs]
    out = pl.pallas_call(
        kernel,
        out_shape=jax.ShapeDtypeStruct((M_pad, D), out_dtype),
        grid=(M_pad // row_tile,),
        in_specs=data_specs + [pl.BlockSpec((1, D), lambda i: (0, 0))] * 2,
        out_specs=pl.BlockSpec((row_tile, D), lambda i: (i, 0)),
        compiler_params=pltpu.CompilerParams(dimension_semantics=("parallel",)),
    )(*xs, g.astype(jnp.float32), b.astype(jnp.float32))
    return out[:M] if M_pad != M else out


def layernorm(x, g, b, out_dtype=jnp.bfloat16):
    return _ln_call(_ln_kernel, [x], g, b, out_dtype)


def add_layernorm(x, residual, g, b, out_dtype=jnp.bfloat16):
    """LayerNorm(x + residual) fused in one kernel (BART post-LN)."""
    return _ln_call(_add_ln_kernel, [x, residual], g, b, out_dtype)


# -------------------------------------------------------------------------- attention

def _attn_kernel(q_ref, k_ref, v_ref, bias_ref, o_ref):
    # q/k/v block: [1, H, S, hd] bf16 (q already scaled by head_dim**-0.5 via weights)
    # bias block: [1, 1, S] f32 additive key mask (masked -> -1e9)
    q = q_ref[0]                                               # [H, S, hd]
    k = k_ref[0]
    v = v_ref[0]
    scores = jnp.einsum("hqd,hkd->hqk", q, k,
                        preferred_element_type=jnp.float32)    # [H, S, S] f32
    scores = scores + bias_ref[0]                              # broadcast [1, S]
    scores = scores - jnp.max(scores, axis=-1, keepdims=True)
    p = jnp.exp(scores)
    p = p * pl.reciprocal(jnp.sum(p, axis=-1, keepdims=True), approx=True)
    o = jnp.einsum("hqk,hkd->hqd", p.astype(v.dtype), v,
                   preferred_element_type=jnp.float32)         # [H, S, hd]
    o_ref[0] = o.astype(o_ref.dtype)


def attention(q, k, v, bias):
    """q,k,v: [B, H, S, hd] bf16, bias: [B, 1, S] f32 -> [B, H, S, hd] bf16."""
    B, H, S, hd = q.shape
    blk = pl.BlockSpec((1, H, S, hd), lambda b: (b, 0, 0, 0))
    return pl.pallas_call(
        _attn_kernel,
        out_shape=jax.ShapeDtypeStruct((B, H, S, hd), jnp.bfloat16),
        grid=(B,),
        in_specs=[blk, blk, blk, pl.BlockSpec((1, 1, S), lambda b: (b, 0, 0))],
        out_specs=blk,
        compiler_params=pltpu.CompilerParams(dimension_semantics=("parallel",)),
    )(q, k, v, bias)


# ------------------------------------------------------------ BART encoder (JAX glue)

def _self_attention(h2d, mask_bias, lp, n_heads, B, S):
    D = h2d.shape[-1]
    hd = D // n_heads
    qkv = linear(h2d, lp["qkv_w"], lp["qkv_b"])                # one fused [D,3D] matmul
    q, k, v = jnp.split(qkv, 3, axis=-1)

    def split_heads(t):
        return t.reshape(B, S, n_heads, hd).transpose(0, 2, 1, 3)

    o = attention(split_heads(q), split_heads(k), split_heads(v), mask_bias)
    o = o.transpose(0, 2, 1, 3).reshape(B * S, D)
    return linear(o, lp["o_w"], lp["o_b"])


def _encoder_layer(h2d, mask_bias, lp, n_heads, B, S):
    # self-attention block (post-LN, like BART); residual-add fused into the LN kernel
    attn_out = _self_attention(h2d, mask_bias, lp, n_heads, B, S)
    h2d = add_layernorm(attn_out, h2d, lp["ln1_g"], lp["ln1_b"])
    # feed-forward block
    ffn = linear(h2d, lp["fc1_w"], lp["fc1_b"])
    # TODO(synk): exact-erf GELU kept outside the kernel (erf lowering in Mosaic is not
    # guaranteed); PyTorch F.gelu default is the exact erf form.
    ffn = jax.nn.gelu(ffn.astype(jnp.float32), approximate=False).astype(jnp.bfloat16)
    ffn = linear(ffn, lp["fc2_w"], lp["fc2_b"])
    h2d = add_layernorm(ffn, h2d, lp["ln2_g"], lp["ln2_b"])
    return h2d


def bart_encoder_forward(params, input_ids, attention_mask, n_heads):
    """Returns last_hidden_state [B, S, D] (f32)."""
    B, S = input_ids.shape
    D = params["embed_tokens"].shape[1]
    # embed_scale = 1.0 (BART default scale_embedding=False); learned pos-emb offset 2
    emb = jnp.take(params["embed_tokens"], input_ids, axis=0)            # [B, S, D]
    pos = params["embed_positions"][2:2 + S]
    h2d = (emb + pos[None, :, :]).reshape(B * S, D)                      # f32
    h2d = layernorm(h2d, params["emb_ln_g"], params["emb_ln_b"])         # bf16 out
    # additive attention bias, masked keys -> -1e9 (broadcast over heads & queries)
    mask_bias = (attention_mask.astype(jnp.float32) - 1.0)[:, None, :] * 1e9  # [B,1,S]
    for lp in params["layers"]:
        h2d = _encoder_layer(h2d, mask_bias, lp, n_heads, B, S)
    return h2d.reshape(B, S, D).astype(jnp.float32)


# --------------------------------------------------------------- CoEP Encoder.forward

def coep_encoder_forward(kg_params, ctx_params, input_ids, input_masks, segment_ids,
                         kg_input_ids, kg_input_masks, n_heads, output_attentions=None):
    del segment_ids, output_attentions  # unused by the reference forward
    attentions = None
    bsz, dim, ln = kg_input_ids.shape
    kg_ids = kg_input_ids.reshape(bsz * dim, ln)
    kg_masks = kg_input_masks.reshape(bsz * dim, ln)

    kg_hidden = bart_encoder_forward(kg_params, kg_ids, kg_masks, n_heads)  # [bsz*dim,ln,D]

    # EOS extraction: hidden state at position sum(mask)-1 per row (masked_select equiv.)
    eos_idx = jnp.sum(kg_masks.astype(jnp.int32), axis=1) - 1               # [bsz*dim]
    kg_re = jnp.take_along_axis(kg_hidden, eos_idx[:, None, None], axis=1)[:, 0, :]
    kg_re = kg_re.reshape(bsz, dim, -1)

    ctx_hidden = bart_encoder_forward(ctx_params, input_ids, input_masks, n_heads)

    encoder_hidden_states = jnp.concatenate([kg_re, ctx_hidden], axis=1)
    encoder_attention_mask = jnp.concatenate(
        [jnp.ones((bsz, dim), dtype=jnp.int32), input_masks.astype(jnp.int32)], axis=1
    )
    return {
        "encoder_hidden_states": encoder_hidden_states,
        "encoder_attention_mask": encoder_attention_mask,
        "kg_hidden_states": kg_hidden.reshape(bsz, dim, ln, -1),
        "attentions": attentions,
    }


# -------------------------------------------------------------------------- param init

def init_bart_params(key, *, vocab, max_pos, d_model, ffn, n_layers, n_heads):
    keys = iter(jax.random.split(key, 2 + 6 * n_layers))

    def nrm(shape):
        return jax.random.normal(next(keys), shape, dtype=jnp.float32) * 0.02

    def zeros(n):
        return jnp.zeros((1, n), jnp.float32)

    head_dim = d_model // n_heads
    scale = head_dim ** -0.5   # BartAttention scaling, folded into Q weights/bias

    params = {
        "embed_tokens": nrm((vocab, d_model)),
        "embed_positions": nrm((max_pos + 2, d_model)),   # learned pos-emb, offset 2
        "emb_ln_g": jnp.ones((1, d_model), jnp.float32),
        "emb_ln_b": zeros(d_model),
        "layers": [],
    }
    for _ in range(n_layers):
        q_w = nrm((d_model, d_model))
        k_w = nrm((d_model, d_model))
        v_w = nrm((d_model, d_model))
        o_w = nrm((d_model, d_model))
        fc1_w = nrm((d_model, ffn))
        fc2_w = nrm((ffn, d_model))
        q_b = zeros(d_model)
        k_b = zeros(d_model)
        v_b = zeros(d_model)
        lp = {
            "qkv_w": jnp.concatenate([q_w * scale, k_w, v_w], axis=1).astype(jnp.bfloat16),
            "qkv_b": jnp.concatenate([q_b * scale, k_b, v_b], axis=1),
            "o_w": o_w.astype(jnp.bfloat16), "o_b": zeros(d_model),
            "ln1_g": jnp.ones((1, d_model), jnp.float32), "ln1_b": zeros(d_model),
            "fc1_w": fc1_w.astype(jnp.bfloat16), "fc1_b": zeros(ffn),
            "fc2_w": fc2_w.astype(jnp.bfloat16), "fc2_b": zeros(d_model),
            "ln2_g": jnp.ones((1, d_model), jnp.float32), "ln2_b": zeros(d_model),
        }
        params["layers"].append(lp)
    return params


# ------------------------------------------------------------------------------- main

if __name__ == "__main__":
    # TODO(synk): real module loads pretrained BART state_dicts; here weights are synthetic.
    bsz, dim, ln = 2, 4, 8
    vocab, d_model, ffn_dim, n_heads, n_layers, max_pos = 100, 32, 64, 4, 2, 64

    root = jax.random.PRNGKey(0)
    k_kg, k_ctx, k_ids, k_kgids, k_len, k_kglen = jax.random.split(root, 6)

    kg_params = init_bart_params(k_kg, vocab=vocab, max_pos=max_pos, d_model=d_model,
                                 ffn=ffn_dim, n_layers=n_layers, n_heads=n_heads)
    ctx_params = init_bart_params(k_ctx, vocab=vocab, max_pos=max_pos, d_model=d_model,
                                  ffn=ffn_dim, n_layers=n_layers, n_heads=n_heads)

    input_ids = jax.random.randint(k_ids, (bsz, ln), 0, vocab, dtype=jnp.int32)
    lengths = jax.random.randint(k_len, (bsz,), 3, ln + 1, dtype=jnp.int32)
    input_masks = (jnp.arange(ln)[None, :] < lengths[:, None]).astype(jnp.int32)
    segment_ids = jnp.zeros((bsz, ln), jnp.int32)

    kg_input_ids = jax.random.randint(k_kgids, (bsz, dim, ln), 0, vocab, dtype=jnp.int32)
    kg_lengths = jax.random.randint(k_kglen, (bsz, dim), 2, ln + 1, dtype=jnp.int32)
    kg_input_masks = (jnp.arange(ln)[None, None, :] < kg_lengths[..., None]).astype(jnp.int32)

    fwd = jax.jit(coep_encoder_forward,
                  static_argnames=("n_heads", "output_attentions"))
    out = fwd(kg_params, ctx_params, input_ids, input_masks, segment_ids,
              kg_input_ids, kg_input_masks, n_heads=n_heads, output_attentions=True)

    jax.block_until_ready(out["encoder_hidden_states"])
    jax.block_until_ready(out["encoder_attention_mask"])
    jax.block_until_ready(out["kg_hidden_states"])

    assert out["encoder_hidden_states"].shape == (bsz, dim + ln, d_model)
    assert out["encoder_attention_mask"].shape == (bsz, dim + ln)
    assert out["kg_hidden_states"].shape == (bsz, dim, ln, d_model)
    assert out["attentions"] is None

    print("KERNEL_OK")
</pallas_src>

<mosaic_0001>
module attributes {stable_mosaic.version = 11 : i64} {
  func.func @_linear_kernel(%arg0: i32, %arg1: i32, %arg2: memref<64x32xbf16, #tpu.memory_space<vmem>>, %arg3: memref<32x96xbf16, #tpu.memory_space<vmem>>, %arg4: memref<1x96xf32, #tpu.memory_space<vmem>>, %arg5: memref<64x96xbf16, #tpu.memory_space<vmem>>) attributes {dimension_semantics = [#tpu.dimension_semantics<parallel>, #tpu.dimension_semantics<parallel>], iteration_bounds = array<i64: 1, 1>, scalar_prefetch = 0 : i64, scratch_operands = 0 : i64, tpu.core_type = #tpu.core_type<tc>, window_params = [{transform_indices = @transform_0, window_bounds = array<i64: 64, 32>}, {transform_indices = @transform_1, window_bounds = array<i64: 32, 96>}, {transform_indices = @transform_2, window_bounds = array<i64: 1, 96>}, {transform_indices = @transform_3, window_bounds = array<i64: 64, 96>}]} {
    %c0 = arith.constant 0 : index
    %c0_0 = arith.constant 0 : index
    %0 = vector.load %arg2[%c0, %c0_0] : memref<64x32xbf16, #tpu.memory_space<vmem>>, vector<64x32xbf16>
    %c0_1 = arith.constant 0 : index
    %c0_2 = arith.constant 0 : index
    %1 = vector.load %arg3[%c0_1, %c0_2] : memref<32x96xbf16, #tpu.memory_space<vmem>>, vector<32x96xbf16>
    %cst = arith.constant dense<0.000000e+00> : vector<64x96xf32>
    %2 = tpu.matmul %0, %1, %cst {dimension_numbers = #tpu.dot_dimension_numbers<[1], [0], [0], [1], [0, 0, 1, 1], [], []>} : vector<64x32xbf16>, vector<32x96xbf16>, vector<64x96xf32> -> vector<64x96xf32>
    %c0_3 = arith.constant 0 : index
    %c0_4 = arith.constant 0 : index
    %3 = vector.load %arg4[%c0_3, %c0_4] : memref<1x96xf32, #tpu.memory_space<vmem>>, vector<1x96xf32>
    %4 = vector.broadcast %3 : vector<1x96xf32> to vector<64x96xf32>
    %5 = arith.addf %2, %4 : vector<64x96xf32>
    %6 = arith.truncf %5 : vector<64x96xf32> to vector<64x96xbf16>
    %c0_5 = arith.constant 0 : index
    %c0_6 = arith.constant 0 : index
    %7 = vector.load %arg5[%c0_5, %c0_6] : memref<64x96xbf16, #tpu.memory_space<vmem>>, vector<64x96xbf16>
    tpu.vector_store %arg5[%c0_5, %c0_6], %6 {strides = array<i32>} : memref<64x96xbf16, #tpu.memory_space<vmem>>, vector<64x96xbf16>,
    return
  }
  func.func @transform_0(%arg0: i32, %arg1: i32) -> (i32, i32) {
    %c0_i32 = arith.constant 0 : i32
    %c0_i32_0 = arith.constant 0 : i32
    return %arg0, %c0_i32 : i32, i32
  }
  func.func @transform_1(%arg0: i32, %arg1: i32) -> (i32, i32) {
    %c0_i32 = arith.constant 0 : i32
    %c0_i32_0 = arith.constant 0 : i32
    return %c0_i32, %arg1 : i32, i32
  }
  func.func @transform_2(%arg0: i32, %arg1: i32) -> (i32, i32) {
    %c0_i32 = arith.constant 0 : i32
    %c0_i32_0 = arith.constant 0 : i32
    return %c0_i32, %arg1 : i32, i32
  }
  func.func @transform_3(%arg0: i32, %arg1: i32) -> (i32, i32) {
    %c0_i32 = arith.constant 0 : i32
    return %arg0, %arg1 : i32, i32
  }
}

module attributes {stable_mosaic.version = 11 : i64} {
  func.func @_ln_kernel(%arg0: i32, %arg1: memref<64x32xf32, #tpu.memory_space<vmem>>, %arg2: memref<1x32xf32, #tpu.memory_space<vmem>>, %arg3: memref<1x32xf32, #tpu.memory_space<vmem>>, %arg4: memref<64x32xbf16, #tpu.memory_space<vmem>>) attributes {dimension_semantics = [#tpu.dimension_semantics<parallel>], iteration_bounds = array<i64: 1>, scalar_prefetch = 0 : i64, scratch_operands = 0 : i64, tpu.core_type = #tpu.core_type<tc>, window_params = [{transform_indices = @transform_0, window_bounds = array<i64: 64, 32>}, {pipeline_mode = #tpu.pipeline_mode<synchronous>, transform_indices = @transform_1, window_bounds = array<i64: 1, 32>}, {pipeline_mode = #tpu.pipeline_mode<synchronous>, transform_indices = @transform_2, window_bounds = array<i64: 1, 32>}, {transform_indices = @transform_3, window_bounds = array<i64: 64, 32>}]} {
    %c0 = arith.constant 0 : index
    %c0_0 = arith.constant 0 : index
    %0 = vector.load %arg1[%c0, %c0_0] : memref<64x32xf32, #tpu.memory_space<vmem>>, vector<64x32xf32>
    %cst = arith.constant dense<0.000000e+00> : vector<64xf32>
    %1 = vector.multi_reduction <add>, %0, %cst [1] : vector<64x32xf32> to vector<64xf32>
    %2 = vector.shape_cast %1 : vector<64xf32> to vector<64x1xf32>
    %cst_1 = arith.constant 3.200000e+01 : f32
    %3 = vector.broadcast %cst_1 : f32 to vector<64x1xf32>
    %4 = arith.divf %2, %3 : vector<64x1xf32>
    %5 = vector.broadcast %4 : vector<64x1xf32> to vector<64x32xf32>
    %6 = arith.subf %0, %5 : vector<64x32xf32>
    %7 = arith.mulf %6, %6 : vector<64x32xf32>
    %cst_2 = arith.constant dense<0.000000e+00> : vector<64xf32>
    %8 = vector.multi_reduction <add>, %7, %cst_2 [1] : vector<64x32xf32> to vector<64xf32>
    %9 = vector.shape_cast %8 : vector<64xf32> to vector<64x1xf32>
    %cst_3 = arith.constant 3.200000e+01 : f32
    %10 = vector.broadcast %cst_3 : f32 to vector<64x1xf32>
    %11 = arith.divf %9, %10 : vector<64x1xf32>
    %12 = vector.broadcast %4 : vector<64x1xf32> to vector<64x32xf32>
    %13 = arith.subf %0, %12 : vector<64x32xf32>
    %cst_4 = arith.constant 9.99999974E-6 : f32
    %14 = vector.broadcast %cst_4 : f32 to vector<64x1xf32>
    %15 = arith.addf %11, %14 : vector<64x1xf32>
    %16 = math.rsqrt %15 : vector<64x1xf32>
    %17 = vector.broadcast %16 : vector<64x1xf32> to vector<64x32xf32>
    %18 = arith.mulf %13, %17 : vector<64x32xf32>
    %c0_5 = arith.constant 0 : index
    %c0_6 = arith.constant 0 : index
    %19 = vector.load %arg2[%c0_5, %c0_6] : memref<1x32xf32, #tpu.memory_space<vmem>>, vector<1x32xf32>
    %20 = vector.broadcast %19 : vector<1x32xf32> to vector<64x32xf32>
    %21 = arith.mulf %18, %20 : vector<64x32xf32>
    %c0_7 = arith.constant 0 : index
    %c0_8 = arith.constant 0 : index
    %22 = vector.load %arg3[%c0_7, %c0_8] : memref<1x32xf32, #tpu.memory_space<vmem>>, vector<1x32xf32>
    %23 = vector.broadcast %22 : vector<1x32xf32> to vector<64x32xf32>
    %24 = arith.addf %21, %23 : vector<64x32xf32>
    %25 = arith.truncf %24 : vector<64x32xf32> to vector<64x32xbf16>
    %c0_9 = arith.constant 0 : index
    %c0_10 = arith.constant 0 : index
    %26 = vector.load %arg4[%c0_9, %c0_10] : memref<64x32xbf16, #tpu.memory_space<vmem>>, vector<64x32xbf16>
    tpu.vector_store %arg4[%c0_9, %c0_10], %25 {strides = array<i32>} : memref<64x32xbf16, #tpu.memory_space<vmem>>, vector<64x32xbf16>,
    return
  }
  func.func @transform_0(%arg0: i32) -> (i32, i32) {
    %c0_i32 = arith.constant 0 : i32
    %c0_i32_0 = arith.constant 0 : i32
    return %arg0, %c0_i32 : i32, i32
  }
  func.func @transform_1(%arg0: i32) -> (i32, i32) {
    %c0_i32 = arith.constant 0 : i32
    %c0_i32_0 = arith.constant 0 : i32
    %c0_i32_1 = arith.constant 0 : i32
    return %c0_i32, %c0_i32_0 : i32, i32
  }
  func.func @transform_2(%arg0: i32) -> (i32, i32) {
    %c0_i32 = arith.constant 0 : i32
    %c0_i32_0 = arith.constant 0 : i32
    %c0_i32_1 = arith.constant 0 : i32
    return %c0_i32, %c0_i32_0 : i32, i32
  }
  func.func @transform_3(%arg0: i32) -> (i32, i32) {
    %c0_i32 = arith.constant 0 : i32
    %c0_i32_0 = arith.constant 0 : i32
    return %arg0, %c0_i32 : i32, i32
  }
}

module attributes {stable_mosaic.version = 11 : i64} {
  func.func @_attn_kernel(%arg0: i32, %arg1: memref<1x4x8x8xbf16, #tpu.memory_space<vmem>>, %arg2: memref<1x4x8x8xbf16, #tpu.memory_space<vmem>>, %arg3: memref<1x4x8x8xbf16, #tpu.memory_space<vmem>>, %arg4: memref<1x1x8xf32, #tpu.memory_space<vmem>>, %arg5: memref<1x4x8x8xbf16, #tpu.memory_space<vmem>>) attributes {dimension_semantics = [#tpu.dimension_semantics<parallel>], iteration_bounds = array<i64: 8>, scalar_prefetch = 0 : i64, scratch_operands = 0 : i64, tpu.core_type = #tpu.core_type<tc>, window_params = [{transform_indices = @transform_0, window_bounds = array<i64: 1, 4, 8, 8>}, {transform_indices = @transform_1, window_bounds = array<i64: 1, 4, 8, 8>}, {transform_indices = @transform_2, window_bounds = array<i64: 1, 4, 8, 8>}, {transform_indices = @transform_3, window_bounds = array<i64: 1, 1, 8>}, {transform_indices = @transform_4, window_bounds = array<i64: 1, 4, 8, 8>}]} {
    %c0 = arith.constant 0 : index
    %c0_0 = arith.constant 0 : index
    %c0_1 = arith.constant 0 : index
    %c0_2 = arith.constant 0 : index
    %0 = vector.load %arg1[%c0, %c0_0, %c0_1, %c0_2] : memref<1x4x8x8xbf16, #tpu.memory_space<vmem>>, vector<1x4x8x8xbf16>
    %1 = vector.shape_cast %0 : vector<1x4x8x8xbf16> to vector<4x8x8xbf16>
    %c0_3 = arith.constant 0 : index
    %c0_4 = arith.constant 0 : index
    %c0_5 = arith.constant 0 : index
    %c0_6 = arith.constant 0 : index
    %2 = vector.load %arg2[%c0_3, %c0_4, %c0_5, %c0_6] : memref<1x4x8x8xbf16, #tpu.memory_space<vmem>>, vector<1x4x8x8xbf16>
    %3 = vector.shape_cast %2 : vector<1x4x8x8xbf16> to vector<4x8x8xbf16>
    %c0_7 = arith.constant 0 : index
    %c0_8 = arith.constant 0 : index
    %c0_9 = arith.constant 0 : index
    %c0_10 = arith.constant 0 : index
    %4 = vector.load %arg3[%c0_7, %c0_8, %c0_9, %c0_10] : memref<1x4x8x8xbf16, #tpu.memory_space<vmem>>, vector<1x4x8x8xbf16>
    %5 = vector.shape_cast %4 : vector<1x4x8x8xbf16> to vector<4x8x8xbf16>
    "tpu.trace_start"() <{level = 10 : i32, message = "hqd,hkd->hqk"}> : () -> ()
    %cst = arith.constant dense<0.000000e+00> : vector<4x8x8xf32>
    %6 = tpu.matmul %1, %3, %cst {dimension_numbers = #tpu.dot_dimension_numbers<[2], [2], [1], [1], [0, 0, 0, 1, 1, 1], [0], [0]>} : vector<4x8x8xbf16>, vector<4x8x8xbf16>, vector<4x8x8xf32> -> vector<4x8x8xf32>
    "tpu.trace_stop"() : () -> ()
    %c0_11 = arith.constant 0 : index
    %c0_12 = arith.constant 0 : index
    %c0_13 = arith.constant 0 : index
    %7 = vector.load %arg4[%c0_11, %c0_12, %c0_13] : memref<1x1x8xf32, #tpu.memory_space<vmem>>, vector<1x1x8xf32>
    %8 = vector.shape_cast %7 : vector<1x1x8xf32> to vector<1x8xf32>
    %9 = vector.shape_cast %8 : vector<1x8xf32> to vector<1x1x8xf32>
    %10 = vector.broadcast %9 : vector<1x1x8xf32> to vector<4x8x8xf32>
    %11 = arith.addf %6, %10 : vector<4x8x8xf32>
    %cst_14 = arith.constant dense<0xFF800000> : vector<4x8xf32>
    %12 = vector.multi_reduction <maximumf>, %11, %cst_14 [2] : vector<4x8x8xf32> to vector<4x8xf32>
    %13 = vector.shape_cast %12 : vector<4x8xf32> to vector<4x8x1xf32>
    %14 = vector.broadcast %13 : vector<4x8x1xf32> to vector<4x8x8xf32>
    %15 = arith.subf %11, %14 : vector<4x8x8xf32>
    %16 = math.exp %15 : vector<4x8x8xf32>
    %cst_15 = arith.constant dense<0.000000e+00> : vector<4x8xf32>
    %17 = vector.multi_reduction <add>, %16, %cst_15 [2] : vector<4x8x8xf32> to vector<4x8xf32>
    %18 = vector.shape_cast %17 : vector<4x8xf32> to vector<4x8x1xf32>
    %19 = tpu.reciprocal %18 {approx = true} : vector<4x8x1xf32> -> vector<4x8x1xf32>
    %20 = vector.broadcast %19 : vector<4x8x1xf32> to vector<4x8x8xf32>
    %21 = arith.mulf %16, %20 : vector<4x8x8xf32>
    %22 = arith.truncf %21 : vector<4x8x8xf32> to vector<4x8x8xbf16>
    "tpu.trace_start"() <{level = 10 : i32, message = "hqk,hkd->hqd"}> : () -> ()
    %cst_16 = arith.constant dense<0.000000e+00> : vector<4x8x8xf32>
    %23 = tpu.matmul %22, %5, %cst_16 {dimension_numbers = #tpu.dot_dimension_numbers<[2], [1], [1], [2], [0, 0, 0, 1, 1, 2], [0], [0]>} : vector<4x8x8xbf16>, vector<4x8x8xbf16>, vector<4x8x8xf32> -> vector<4x8x8xf32>
    "tpu.trace_stop"() : () -> ()
    %24 = arith.truncf %23 : vector<4x8x8xf32> to vector<4x8x8xbf16>
    %c0_17 = arith.constant 0 : index
    %c0_18 = arith.constant 0 : index
    %c0_19 = arith.constant 0 : index
    %c0_20 = arith.constant 0 : index
    %25 = vector.load %arg5[%c0_17, %c0_18, %c0_19, %c0_20] : memref<1x4x8x8xbf16, #tpu.memory_space<vmem>>, vector<1x4x8x8xbf16>
    %26 = vector.shape_cast %25 : vector<1x4x8x8xbf16> to vector<4x8x8xbf16>
    %27 = vector.shape_cast %24 : vector<4x8x8xbf16> to vector<1x4x8x8xbf16>
    tpu.vector_store %arg5[%c0_17, %c0_18, %c0_19, %c0_20], %27 {strides = array<i32>} : memref<1x4x8x8xbf16, #tpu.memory_space<vmem>>, vector<1x4x8x8xbf16>,
    return
  }
  func.func @transform_0(%arg0: i32) -> (i32, i32, i32, i32) {
    %c0_i32 = arith.constant 0 : i32
    %c0_i32_0 = arith.constant 0 : i32
    %c0_i32_1 = arith.constant 0 : i32
    %c0_i32_2 = arith.constant 0 : i32
    return %arg0, %c0_i32, %c0_i32_0, %c0_i32_1 : i32, i32, i32, i32
  }
  func.func @transform_1(%arg0: i32) -> (i32, i32, i32, i32) {
    %c0_i32 = arith.constant 0 : i32
    %c0_i32_0 = arith.constant 0 : i32
    %c0_i32_1 = arith.constant 0 : i32
    %c0_i32_2 = arith.constant 0 : i32
    return %arg0, %c0_i32, %c0_i32_0, %c0_i32_1 : i32, i32, i32, i32
  }
  func.func @transform_2(%arg0: i32) -> (i32, i32, i32, i32) {
    %c0_i32 = arith.constant 0 : i32
    %c0_i32_0 = arith.constant 0 : i32
    %c0_i32_1 = arith.constant 0 : i32
    %c0_i32_2 = arith.constant 0 : i32
    return %arg0, %c0_i32, %c0_i32_0, %c0_i32_1 : i32, i32, i32, i32
  }
  func.func @transform_3(%arg0: i32) -> (i32, i32, i32) {
    %c0_i32 = arith.constant 0 : i32
    %c0_i32_0 = arith.constant 0 : i32
    %c0_i32_1 = arith.constant 0 : i32
    return %arg0, %c0_i32, %c0_i32_0 : i32, i32, i32
  }
  func.func @transform_4(%arg0: i32) -> (i32, i32, i32, i32) {
    %c0_i32 = arith.constant 0 : i32
    %c0_i32_0 = arith.constant 0 : i32
    %c0_i32_1 = arith.constant 0 : i32
    %c0_i32_2 = arith.constant 0 : i32
    return %arg0, %c0_i32, %c0_i32_0, %c0_i32_1 : i32, i32, i32, i32
  }
}

module attributes {stable_mosaic.version = 11 : i64} {
  func.func @_linear_kernel(%arg0: i32, %arg1: i32, %arg2: memref<64x32xbf16, #tpu.memory_space<vmem>>, %arg3: memref<32x32xbf16, #tpu.memory_space<vmem>>, %arg4: memref<1x32xf32, #tpu.memory_space<vmem>>, %arg5: memref<64x32xbf16, #tpu.memory_space<vmem>>) attributes {dimension_semantics = [#tpu.dimension_semantics<parallel>, #tpu.dimension_semantics<parallel>], iteration_bounds = array<i64: 1, 1>, scalar_prefetch = 0 : i64, scratch_operands = 0 : i64, tpu.core_type = #tpu.core_type<tc>, window_params = [{transform_indices = @transform_0, window_bounds = array<i64: 64, 32>}, {transform_indices = @transform_1, window_bounds = array<i64: 32, 32>}, {transform_indices = @transform_2, window_bounds = array<i64: 1, 32>}, {transform_indices = @transform_3, window_bounds = array<i64: 64, 32>}]} {
    %c0 = arith.constant 0 : index
    %c0_0 = arith.constant 0 : index
    %0 = vector.load %arg2[%c0, %c0_0] : memref<64x32xbf16, #tpu.memory_space<vmem>>, vector<64x32xbf16>
    %c0_1 = arith.constant 0 : index
    %c0_2 = arith.constant 0 : index
    %1 = vector.load %arg3[%c0_1, %c0_2] : memref<32x32xbf16, #tpu.memory_space<vmem>>, vector<32x32xbf16>
    %cst = arith.constant dense<0.000000e+00> : vector<64x32xf32>
    %2 = tpu.matmul %0, %1, %cst {dimension_numbers = #tpu.dot_dimension_numbers<[1], [0], [0], [1], [0, 0, 1, 1], [], []>} : vector<64x32xbf16>, vector<32x32xbf16>, vector<64x32xf32> -> vector<64x32xf32>
    %c0_3 = arith.constant 0 : index
    %c0_4 = arith.constant 0 : index
    %3 = vector.load %arg4[%c0_3, %c0_4] : memref<1x32xf32, #tpu.memory_space<vmem>>, vector<1x32xf32>
    %4 = vector.broadcast %3 : vector<1x32xf32> to vector<64x32xf32>
    %5 = arith.addf %2, %4 : vector<64x32xf32>
    %6 = arith.truncf %5 : vector<64x32xf32> to vector<64x32xbf16>
    %c0_5 = arith.constant 0 : index
    %c0_6 = arith.constant 0 : index
    %7 = vector.load %arg5[%c0_5, %c0_6] : memref<64x32xbf16, #tpu.memory_space<vmem>>, vector<64x32xbf16>
    tpu.vector_store %arg5[%c0_5, %c0_6], %6 {strides = array<i32>} : memref<64x32xbf16, #tpu.memory_space<vmem>>, vector<64x32xbf16>,
    return
  }
  func.func @transform_0(%arg0: i32, %arg1: i32) -> (i32, i32) {
    %c0_i32 = arith.constant 0 : i32
    %c0_i32_0 = arith.constant 0 : i32
    return %arg0, %c0_i32 : i32, i32
  }
  func.func @transform_1(%arg0: i32, %arg1: i32) -> (i32, i32) {
    %c0_i32 = arith.constant 0 : i32
    %c0_i32_0 = arith.constant 0 : i32
    return %c0_i32, %arg1 : i32, i32
  }
  func.func @transform_2(%arg0: i32, %arg1: i32) -> (i32, i32) {
    %c0_i32 = arith.constant 0 : i32
    %c0_i32_0 = arith.constant 0 : i32
    return %c0_i32, %arg1 : i32, i32
  }
  func.func @transform_3(%arg0: i32, %arg1: i32) -> (i32, i32) {
    %c0_i32 = arith.constant 0 : i32
    return %arg0, %arg1 : i32, i32
  }
}

module attributes {stable_mosaic.version = 11 : i64} {
  func.func @_linear_kernel(%arg0: i32, %arg1: i32, %arg2: memref<64x32xbf16, #tpu.memory_space<vmem>>, %arg3: memref<32x64xbf16, #tpu.memory_space<vmem>>, %arg4: memref<1x64xf32, #tpu.memory_space<vmem>>, %arg5: memref<64x64xbf16, #tpu.memory_space<vmem>>) attributes {dimension_semantics = [#tpu.dimension_semantics<parallel>, #tpu.dimension_semantics<parallel>], iteration_bounds = array<i64: 1, 1>, scalar_prefetch = 0 : i64, scratch_operands = 0 : i64, tpu.core_type = #tpu.core_type<tc>, window_params = [{transform_indices = @transform_0, window_bounds = array<i64: 64, 32>}, {transform_indices = @transform_1, window_bounds = array<i64: 32, 64>}, {transform_indices = @transform_2, window_bounds = array<i64: 1, 64>}, {transform_indices = @transform_3, window_bounds = array<i64: 64, 64>}]} {
    %c0 = arith.constant 0 : index
    %c0_0 = arith.constant 0 : index
    %0 = vector.load %arg2[%c0, %c0_0] : memref<64x32xbf16, #tpu.memory_space<vmem>>, vector<64x32xbf16>
    %c0_1 = arith.constant 0 : index
    %c0_2 = arith.constant 0 : index
    %1 = vector.load %arg3[%c0_1, %c0_2] : memref<32x64xbf16, #tpu.memory_space<vmem>>, vector<32x64xbf16>
    %cst = arith.constant dense<0.000000e+00> : vector<64x64xf32>
    %2 = tpu.matmul %0, %1, %cst {dimension_numbers = #tpu.dot_dimension_numbers<[1], [0], [0], [1], [0, 0, 1, 1], [], []>} : vector<64x32xbf16>, vector<32x64xbf16>, vector<64x64xf32> -> vector<64x64xf32>
    %c0_3 = arith.constant 0 : index
    %c0_4 = arith.constant 0 : index
    %3 = vector.load %arg4[%c0_3, %c0_4] : memref<1x64xf32, #tpu.memory_space<vmem>>, vector<1x64xf32>
    %4 = vector.broadcast %3 : vector<1x64xf32> to vector<64x64xf32>
    %5 = arith.addf %2, %4 : vector<64x64xf32>
    %6 = arith.truncf %5 : vector<64x64xf32> to vector<64x64xbf16>
    %c0_5 = arith.constant 0 : index
    %c0_6 = arith.constant 0 : index
    %7 = vector.load %arg5[%c0_5, %c0_6] : memref<64x64xbf16, #tpu.memory_space<vmem>>, vector<64x64xbf16>
    tpu.vector_store %arg5[%c0_5, %c0_6], %6 {strides = array<i32>} : memref<64x64xbf16, #tpu.memory_space<vmem>>, vector<64x64xbf16>,
    return
  }
  func.func @transform_0(%arg0: i32, %arg1: i32) -> (i32, i32) {
    %c0_i32 = arith.constant 0 : i32
    %c0_i32_0 = arith.constant 0 : i32
    return %arg0, %c0_i32 : i32, i32
  }
  func.func @transform_1(%arg0: i32, %arg1: i32) -> (i32, i32) {
    %c0_i32 = arith.constant 0 : i32
    %c0_i32_0 = arith.constant 0 : i32
    return %c0_i32, %arg1 : i32, i32
  }
  func.func @transform_2(%arg0: i32, %arg1: i32) -> (i32, i32) {
    %c0_i32 = arith.constant 0 : i32
    %c0_i32_0 = arith.constant 0 : i32
    return %c0_i32, %arg1 : i32, i32
  }
  func.func @transform_3(%arg0: i32, %arg1: i32) -> (i32, i32) {
    %c0_i32 = arith.constant 0 : i32
    return %arg0, %arg1 : i32, i32
  }
}

module attributes {stable_mosaic.version = 11 : i64} {
  func.func @_add_ln_kernel(%arg0: i32, %arg1: memref<64x32xbf16, #tpu.memory_space<vmem>>, %arg2: memref<64x32xbf16, #tpu.memory_space<vmem>>, %arg3: memref<1x32xf32, #tpu.memory_space<vmem>>, %arg4: memref<1x32xf32, #tpu.memory_space<vmem>>, %arg5: memref<64x32xbf16, #tpu.memory_space<vmem>>) attributes {dimension_semantics = [#tpu.dimension_semantics<parallel>], iteration_bounds = array<i64: 1>, scalar_prefetch = 0 : i64, scratch_operands = 0 : i64, tpu.core_type = #tpu.core_type<tc>, window_params = [{transform_indices = @transform_0, window_bounds = array<i64: 64, 32>}, {transform_indices = @transform_1, window_bounds = array<i64: 64, 32>}, {pipeline_mode = #tpu.pipeline_mode<synchronous>, transform_indices = @transform_2, window_bounds = array<i64: 1, 32>}, {pipeline_mode = #tpu.pipeline_mode<synchronous>, transform_indices = @transform_3, window_bounds = array<i64: 1, 32>}, {transform_indices = @transform_4, window_bounds = array<i64: 64, 32>}]} {
    %c0 = arith.constant 0 : index
    %c0_0 = arith.constant 0 : index
    %0 = vector.load %arg1[%c0, %c0_0] : memref<64x32xbf16, #tpu.memory_space<vmem>>, vector<64x32xbf16>
    %1 = arith.extf %0 : vector<64x32xbf16> to vector<64x32xf32>
    %c0_1 = arith.constant 0 : index
    %c0_2 = arith.constant 0 : index
    %2 = vector.load %arg2[%c0_1, %c0_2] : memref<64x32xbf16, #tpu.memory_space<vmem>>, vector<64x32xbf16>
    %3 = arith.extf %2 : vector<64x32xbf16> to vector<64x32xf32>
    %4 = arith.addf %1, %3 : vector<64x32xf32>
    %cst = arith.constant dense<0.000000e+00> : vector<64xf32>
    %5 = vector.multi_reduction <add>, %4, %cst [1] : vector<64x32xf32> to vector<64xf32>
    %6 = vector.shape_cast %5 : vector<64xf32> to vector<64x1xf32>
    %cst_3 = arith.constant 3.200000e+01 : f32
    %7 = vector.broadcast %cst_3 : f32 to vector<64x1xf32>
    %8 = arith.divf %6, %7 : vector<64x1xf32>
    %9 = vector.broadcast %8 : vector<64x1xf32> to vector<64x32xf32>
    %10 = arith.subf %4, %9 : vector<64x32xf32>
    %11 = arith.mulf %10, %10 : vector<64x32xf32>
    %cst_4 = arith.constant dense<0.000000e+00> : vector<64xf32>
    %12 = vector.multi_reduction <add>, %11, %cst_4 [1] : vector<64x32xf32> to vector<64xf32>
    %13 = vector.shape_cast %12 : vector<64xf32> to vector<64x1xf32>
    %cst_5 = arith.constant 3.200000e+01 : f32
    %14 = vector.broadcast %cst_5 : f32 to vector<64x1xf32>
    %15 = arith.divf %13, %14 : vector<64x1xf32>
    %16 = vector.broadcast %8 : vector<64x1xf32> to vector<64x32xf32>
    %17 = arith.subf %4, %16 : vector<64x32xf32>
    %cst_6 = arith.constant 9.99999974E-6 : f32
    %18 = vector.broadcast %cst_6 : f32 to vector<64x1xf32>
    %19 = arith.addf %15, %18 : vector<64x1xf32>
    %20 = math.rsqrt %19 : vector<64x1xf32>
    %21 = vector.broadcast %20 : vector<64x1xf32> to vector<64x32xf32>
    %22 = arith.mulf %17, %21 : vector<64x32xf32>
    %c0_7 = arith.constant 0 : index
    %c0_8 = arith.constant 0 : index
    %23 = vector.load %arg3[%c0_7, %c0_8] : memref<1x32xf32, #tpu.memory_space<vmem>>, vector<1x32xf32>
    %24 = vector.broadcast %23 : vector<1x32xf32> to vector<64x32xf32>
    %25 = arith.mulf %22, %24 : vector<64x32xf32>
    %c0_9 = arith.constant 0 : index
    %c0_10 = arith.constant 0 : index
    %26 = vector.load %arg4[%c0_9, %c0_10] : memref<1x32xf32, #tpu.memory_space<vmem>>, vector<1x32xf32>
    %27 = vector.broadcast %26 : vector<1x32xf32> to vector<64x32xf32>
    %28 = arith.addf %25, %27 : vector<64x32xf32>
    %29 = arith.truncf %28 : vector<64x32xf32> to vector<64x32xbf16>
    %c0_11 = arith.constant 0 : index
    %c0_12 = arith.constant 0 : index
    %30 = vector.load %arg5[%c0_11, %c0_12] : memref<64x32xbf16, #tpu.memory_space<vmem>>, vector<64x32xbf16>
    tpu.vector_store %arg5[%c0_11, %c0_12], %29 {strides = array<i32>} : memref<64x32xbf16, #tpu.memory_space<vmem>>, vector<64x32xbf16>,
    return
  }
  func.func @transform_0(%arg0: i32) -> (i32, i32) {
    %c0_i32 = arith.constant 0 : i32
    %c0_i32_0 = arith.constant 0 : i32
    return %arg0, %c0_i32 : i32, i32
  }
  func.func @transform_1(%arg0: i32) -> (i32, i32) {
    %c0_i32 = arith.constant 0 : i32
    %c0_i32_0 = arith.constant 0 : i32
    return %arg0, %c0_i32 : i32, i32
  }
  func.func @transform_2(%arg0: i32) -> (i32, i32) {
    %c0_i32 = arith.constant 0 : i32
    %c0_i32_0 = arith.constant 0 : i32
    %c0_i32_1 = arith.constant 0 : i32
    return %c0_i32, %c0_i32_0 : i32, i32
  }
  func.func @transform_3(%arg0: i32) -> (i32, i32) {
    %c0_i32 = arith.constant 0 : i32
    %c0_i32_0 = arith.constant 0 : i32
    %c0_i32_1 = arith.constant 0 : i32
    return %c0_i32, %c0_i32_0 : i32, i32
  }
  func.func @transform_4(%arg0: i32) -> (i32, i32) {
    %c0_i32 = arith.constant 0 : i32
    %c0_i32_0 = arith.constant 0 : i32
    return %arg0, %c0_i32 : i32, i32
  }
}

module attributes {stable_mosaic.version = 11 : i64} {
  func.func @_linear_kernel(%arg0: i32, %arg1: i32, %arg2: memref<64x64xbf16, #tpu.memory_space<vmem>>, %arg3: memref<64x32xbf16, #tpu.memory_space<vmem>>, %arg4: memref<1x32xf32, #tpu.memory_space<vmem>>, %arg5: memref<64x32xbf16, #tpu.memory_space<vmem>>) attributes {dimension_semantics = [#tpu.dimension_semantics<parallel>, #tpu.dimension_semantics<parallel>], iteration_bounds = array<i64: 1, 1>, scalar_prefetch = 0 : i64, scratch_operands = 0 : i64, tpu.core_type = #tpu.core_type<tc>, window_params = [{transform_indices = @transform_0, window_bounds = array<i64: 64, 64>}, {transform_indices = @transform_1, window_bounds = array<i64: 64, 32>}, {transform_indices = @transform_2, window_bounds = array<i64: 1, 32>}, {transform_indices = @transform_3, window_bounds = array<i64: 64, 32>}]} {
    %c0 = arith.constant 0 : index
    %c0_0 = arith.constant 0 : index
    %0 = vector.load %arg2[%c0, %c0_0] : memref<64x64xbf16, #tpu.memory_space<vmem>>, vector<64x64xbf16>
    %c0_1 = arith.constant 0 : index
    %c0_2 = arith.constant 0 : index
    %1 = vector.load %arg3[%c0_1, %c0_2] : memref<64x32xbf16, #tpu.memory_space<vmem>>, vector<64x32xbf16>
    %cst = arith.constant dense<0.000000e+00> : vector<64x32xf32>
    %2 = tpu.matmul %0, %1, %cst {dimension_numbers = #tpu.dot_dimension_numbers<[1], [0], [0], [1], [0, 0, 1, 1], [], []>} : vector<64x64xbf16>, vector<64x32xbf16>, vector<64x32xf32> -> vector<64x32xf32>
    %c0_3 = arith.constant 0 : index
    %c0_4 = arith.constant 0 : index
    %3 = vector.load %arg4[%c0_3, %c0_4] : memref<1x32xf32, #tpu.memory_space<vmem>>, vector<1x32xf32>
    %4 = vector.broadcast %3 : vector<1x32xf32> to vector<64x32xf32>
    %5 = arith.addf %2, %4 : vector<64x32xf32>
    %6 = arith.truncf %5 : vector<64x32xf32> to vector<64x32xbf16>
    %c0_5 = arith.constant 0 : index
    %c0_6 = arith.constant 0 : index
    %7 = vector.load %arg5[%c0_5, %c0_6] : memref<64x32xbf16, #tpu.memory_space<vmem>>, vector<64x32xbf16>
    tpu.vector_store %arg5[%c0_5, %c0_6], %6 {strides = array<i32>} : memref<64x32xbf16, #tpu.memory_space<vmem>>, vector<64x32xbf16>,
    return
  }
  func.func @transform_0(%arg0: i32, %arg1: i32) -> (i32, i32) {
    %c0_i32 = arith.constant 0 : i32
    %c0_i32_0 = arith.constant 0 : i32
    return %arg0, %c0_i32 : i32, i32
  }
  func.func @transform_1(%arg0: i32, %arg1: i32) -> (i32, i32) {
    %c0_i32 = arith.constant 0 : i32
    %c0_i32_0 = arith.constant 0 : i32
    return %c0_i32, %arg1 : i32, i32
  }
  func.func @transform_2(%arg0: i32, %arg1: i32) -> (i32, i32) {
    %c0_i32 = arith.constant 0 : i32
    %c0_i32_0 = arith.constant 0 : i32
    return %c0_i32, %arg1 : i32, i32
  }
  func.func @transform_3(%arg0: i32, %arg1: i32) -> (i32, i32) {
    %c0_i32 = arith.constant 0 : i32
    return %arg0, %arg1 : i32, i32
  }
}

module attributes {stable_mosaic.version = 11 : i64} {
  func.func @_linear_kernel(%arg0: i32, %arg1: i32, %arg2: memref<16x32xbf16, #tpu.memory_space<vmem>>, %arg3: memref<32x96xbf16, #tpu.memory_space<vmem>>, %arg4: memref<1x96xf32, #tpu.memory_space<vmem>>, %arg5: memref<16x96xbf16, #tpu.memory_space<vmem>>) attributes {dimension_semantics = [#tpu.dimension_semantics<parallel>, #tpu.dimension_semantics<parallel>], iteration_bounds = array<i64: 1, 1>, scalar_prefetch = 0 : i64, scratch_operands = 0 : i64, tpu.core_type = #tpu.core_type<tc>, window_params = [{transform_indices = @transform_0, window_bounds = array<i64: 16, 32>}, {transform_indices = @transform_1, window_bounds = array<i64: 32, 96>}, {transform_indices = @transform_2, window_bounds = array<i64: 1, 96>}, {transform_indices = @transform_3, window_bounds = array<i64: 16, 96>}]} {
    %c0 = arith.constant 0 : index
    %c0_0 = arith.constant 0 : index
    %0 = vector.load %arg2[%c0, %c0_0] : memref<16x32xbf16, #tpu.memory_space<vmem>>, vector<16x32xbf16>
    %c0_1 = arith.constant 0 : index
    %c0_2 = arith.constant 0 : index
    %1 = vector.load %arg3[%c0_1, %c0_2] : memref<32x96xbf16, #tpu.memory_space<vmem>>, vector<32x96xbf16>
    %cst = arith.constant dense<0.000000e+00> : vector<16x96xf32>
    %2 = tpu.matmul %0, %1, %cst {dimension_numbers = #tpu.dot_dimension_numbers<[1], [0], [0], [1], [0, 0, 1, 1], [], []>} : vector<16x32xbf16>, vector<32x96xbf16>, vector<16x96xf32> -> vector<16x96xf32>
    %c0_3 = arith.constant 0 : index
    %c0_4 = arith.constant 0 : index
    %3 = vector.load %arg4[%c0_3, %c0_4] : memref<1x96xf32, #tpu.memory_space<vmem>>, vector<1x96xf32>
    %4 = vector.broadcast %3 : vector<1x96xf32> to vector<16x96xf32>
    %5 = arith.addf %2, %4 : vector<16x96xf32>
    %6 = arith.truncf %5 : vector<16x96xf32> to vector<16x96xbf16>
    %c0_5 = arith.constant 0 : index
    %c0_6 = arith.constant 0 : index
    %7 = vector.load %arg5[%c0_5, %c0_6] : memref<16x96xbf16, #tpu.memory_space<vmem>>, vector<16x96xbf16>
    tpu.vector_store %arg5[%c0_5, %c0_6], %6 {strides = array<i32>} : memref<16x96xbf16, #tpu.memory_space<vmem>>, vector<16x96xbf16>,
    return
  }
  func.func @transform_0(%arg0: i32, %arg1: i32) -> (i32, i32) {
    %c0_i32 = arith.constant 0 : i32
    %c0_i32_0 = arith.constant 0 : i32
    return %arg0, %c0_i32 : i32, i32
  }
  func.func @transform_1(%arg0: i32, %arg1: i32) -> (i32, i32) {
    %c0_i32 = arith.constant 0 : i32
    %c0_i32_0 = arith.constant 0 : i32
    return %c0_i32, %arg1 : i32, i32
  }
  func.func @transform_2(%arg0: i32, %arg1: i32) -> (i32, i32) {
    %c0_i32 = arith.constant 0 : i32
    %c0_i32_0 = arith.constant 0 : i32
    return %c0_i32, %arg1 : i32, i32
  }
  func.func @transform_3(%arg0: i32, %arg1: i32) -> (i32, i32) {
    %c0_i32 = arith.constant 0 : i32
    return %arg0, %arg1 : i32, i32
  }
}

module attributes {stable_mosaic.version = 11 : i64} {
  func.func @_ln_kernel(%arg0: i32, %arg1: memref<16x32xf32, #tpu.memory_space<vmem>>, %arg2: memref<1x32xf32, #tpu.memory_space<vmem>>, %arg3: memref<1x32xf32, #tpu.memory_space<vmem>>, %arg4: memref<16x32xbf16, #tpu.memory_space<vmem>>) attributes {dimension_semantics = [#tpu.dimension_semantics<parallel>], iteration_bounds = array<i64: 1>, scalar_prefetch = 0 : i64, scratch_operands = 0 : i64, tpu.core_type = #tpu.core_type<tc>, window_params = [{transform_indices = @transform_0, window_bounds = array<i64: 16, 32>}, {pipeline_mode = #tpu.pipeline_mode<synchronous>, transform_indices = @transform_1, window_bounds = array<i64: 1, 32>}, {pipeline_mode = #tpu.pipeline_mode<synchronous>, transform_indices = @transform_2, window_bounds = array<i64: 1, 32>}, {transform_indices = @transform_3, window_bounds = array<i64: 16, 32>}]} {
    %c0 = arith.constant 0 : index
    %c0_0 = arith.constant 0 : index
    %0 = vector.load %arg1[%c0, %c0_0] : memref<16x32xf32, #tpu.memory_space<vmem>>, vector<16x32xf32>
    %cst = arith.constant dense<0.000000e+00> : vector<16xf32>
    %1 = vector.multi_reduction <add>, %0, %cst [1] : vector<16x32xf32> to vector<16xf32>
    %2 = vector.shape_cast %1 : vector<16xf32> to vector<16x1xf32>
    %cst_1 = arith.constant 3.200000e+01 : f32
    %3 = vector.broadcast %cst_1 : f32 to vector<16x1xf32>
    %4 = arith.divf %2, %3 : vector<16x1xf32>
    %5 = vector.broadcast %4 : vector<16x1xf32> to vector<16x32xf32>
    %6 = arith.subf %0, %5 : vector<16x32xf32>
    %7 = arith.mulf %6, %6 : vector<16x32xf32>
    %cst_2 = arith.constant dense<0.000000e+00> : vector<16xf32>
    %8 = vector.multi_reduction <add>, %7, %cst_2 [1] : vector<16x32xf32> to vector<16xf32>
    %9 = vector.shape_cast %8 : vector<16xf32> to vector<16x1xf32>
    %cst_3 = arith.constant 3.200000e+01 : f32
    %10 = vector.broadcast %cst_3 : f32 to vector<16x1xf32>
    %11 = arith.divf %9, %10 : vector<16x1xf32>
    %12 = vector.broadcast %4 : vector<16x1xf32> to vector<16x32xf32>
    %13 = arith.subf %0, %12 : vector<16x32xf32>
    %cst_4 = arith.constant 9.99999974E-6 : f32
    %14 = vector.broadcast %cst_4 : f32 to vector<16x1xf32>
    %15 = arith.addf %11, %14 : vector<16x1xf32>
    %16 = math.rsqrt %15 : vector<16x1xf32>
    %17 = vector.broadcast %16 : vector<16x1xf32> to vector<16x32xf32>
    %18 = arith.mulf %13, %17 : vector<16x32xf32>
    %c0_5 = arith.constant 0 : index
    %c0_6 = arith.constant 0 : index
    %19 = vector.load %arg2[%c0_5, %c0_6] : memref<1x32xf32, #tpu.memory_space<vmem>>, vector<1x32xf32>
    %20 = vector.broadcast %19 : vector<1x32xf32> to vector<16x32xf32>
    %21 = arith.mulf %18, %20 : vector<16x32xf32>
    %c0_7 = arith.constant 0 : index
    %c0_8 = arith.constant 0 : index
    %22 = vector.load %arg3[%c0_7, %c0_8] : memref<1x32xf32, #tpu.memory_space<vmem>>, vector<1x32xf32>
    %23 = vector.broadcast %22 : vector<1x32xf32> to vector<16x32xf32>
    %24 = arith.addf %21, %23 : vector<16x32xf32>
    %25 = arith.truncf %24 : vector<16x32xf32> to vector<16x32xbf16>
    %c0_9 = arith.constant 0 : index
    %c0_10 = arith.constant 0 : index
    %26 = vector.load %arg4[%c0_9, %c0_10] : memref<16x32xbf16, #tpu.memory_space<vmem>>, vector<16x32xbf16>
    tpu.vector_store %arg4[%c0_9, %c0_10], %25 {strides = array<i32>} : memref<16x32xbf16, #tpu.memory_space<vmem>>, vector<16x32xbf16>,
    return
  }
  func.func @transform_0(%arg0: i32) -> (i32, i32) {
    %c0_i32 = arith.constant 0 : i32
    %c0_i32_0 = arith.constant 0 : i32
    return %arg0, %c0_i32 : i32, i32
  }
  func.func @transform_1(%arg0: i32) -> (i32, i32) {
    %c0_i32 = arith.constant 0 : i32
    %c0_i32_0 = arith.constant 0 : i32
    %c0_i32_1 = arith.constant 0 : i32
    return %c0_i32, %c0_i32_0 : i32, i32
  }
  func.func @transform_2(%arg0: i32) -> (i32, i32) {
    %c0_i32 = arith.constant 0 : i32
    %c0_i32_0 = arith.constant 0 : i32
    %c0_i32_1 = arith.constant 0 : i32
    return %c0_i32, %c0_i32_0 : i32, i32
  }
  func.func @transform_3(%arg0: i32) -> (i32, i32) {
    %c0_i32 = arith.constant 0 : i32
    %c0_i32_0 = arith.constant 0 : i32
    return %arg0, %c0_i32 : i32, i32
  }
}

module attributes {stable_mosaic.version = 11 : i64} {
  func.func @_attn_kernel(%arg0: i32, %arg1: memref<1x4x8x8xbf16, #tpu.memory_space<vmem>>, %arg2: memref<1x4x8x8xbf16, #tpu.memory_space<vmem>>, %arg3: memref<1x4x8x8xbf16, #tpu.memory_space<vmem>>, %arg4: memref<1x1x8xf32, #tpu.memory_space<vmem>>, %arg5: memref<1x4x8x8xbf16, #tpu.memory_space<vmem>>) attributes {dimension_semantics = [#tpu.dimension_semantics<parallel>], iteration_bounds = array<i64: 2>, scalar_prefetch = 0 : i64, scratch_operands = 0 : i64, tpu.core_type = #tpu.core_type<tc>, window_params = [{transform_indices = @transform_0, window_bounds = array<i64: 1, 4, 8, 8>}, {transform_indices = @transform_1, window_bounds = array<i64: 1, 4, 8, 8>}, {transform_indices = @transform_2, window_bounds = array<i64: 1, 4, 8, 8>}, {transform_indices = @transform_3, window_bounds = array<i64: 1, 1, 8>}, {transform_indices = @transform_4, window_bounds = array<i64: 1, 4, 8, 8>}]} {
    %c0 = arith.constant 0 : index
    %c0_0 = arith.constant 0 : index
    %c0_1 = arith.constant 0 : index
    %c0_2 = arith.constant 0 : index
    %0 = vector.load %arg1[%c0, %c0_0, %c0_1, %c0_2] : memref<1x4x8x8xbf16, #tpu.memory_space<vmem>>, vector<1x4x8x8xbf16>
    %1 = vector.shape_cast %0 : vector<1x4x8x8xbf16> to vector<4x8x8xbf16>
    %c0_3 = arith.constant 0 : index
    %c0_4 = arith.constant 0 : index
    %c0_5 = arith.constant 0 : index
    %c0_6 = arith.constant 0 : index
    %2 = vector.load %arg2[%c0_3, %c0_4, %c0_5, %c0_6] : memref<1x4x8x8xbf16, #tpu.memory_space<vmem>>, vector<1x4x8x8xbf16>
    %3 = vector.shape_cast %2 : vector<1x4x8x8xbf16> to vector<4x8x8xbf16>
    %c0_7 = arith.constant 0 : index
    %c0_8 = arith.constant 0 : index
    %c0_9 = arith.constant 0 : index
    %c0_10 = arith.constant 0 : index
    %4 = vector.load %arg3[%c0_7, %c0_8, %c0_9, %c0_10] : memref<1x4x8x8xbf16, #tpu.memory_space<vmem>>, vector<1x4x8x8xbf16>
    %5 = vector.shape_cast %4 : vector<1x4x8x8xbf16> to vector<4x8x8xbf16>
    "tpu.trace_start"() <{level = 10 : i32, message = "hqd,hkd->hqk"}> : () -> ()
    %cst = arith.constant dense<0.000000e+00> : vector<4x8x8xf32>
    %6 = tpu.matmul %1, %3, %cst {dimension_numbers = #tpu.dot_dimension_numbers<[2], [2], [1], [1], [0, 0, 0, 1, 1, 1], [0], [0]>} : vector<4x8x8xbf16>, vector<4x8x8xbf16>, vector<4x8x8xf32> -> vector<4x8x8xf32>
    "tpu.trace_stop"() : () -> ()
    %c0_11 = arith.constant 0 : index
    %c0_12 = arith.constant 0 : index
    %c0_13 = arith.constant 0 : index
    %7 = vector.load %arg4[%c0_11, %c0_12, %c0_13] : memref<1x1x8xf32, #tpu.memory_space<vmem>>, vector<1x1x8xf32>
    %8 = vector.shape_cast %7 : vector<1x1x8xf32> to vector<1x8xf32>
    %9 = vector.shape_cast %8 : vector<1x8xf32> to vector<1x1x8xf32>
    %10 = vector.broadcast %9 : vector<1x1x8xf32> to vector<4x8x8xf32>
    %11 = arith.addf %6, %10 : vector<4x8x8xf32>
    %cst_14 = arith.constant dense<0xFF800000> : vector<4x8xf32>
    %12 = vector.multi_reduction <maximumf>, %11, %cst_14 [2] : vector<4x8x8xf32> to vector<4x8xf32>
    %13 = vector.shape_cast %12 : vector<4x8xf32> to vector<4x8x1xf32>
    %14 = vector.broadcast %13 : vector<4x8x1xf32> to vector<4x8x8xf32>
    %15 = arith.subf %11, %14 : vector<4x8x8xf32>
    %16 = math.exp %15 : vector<4x8x8xf32>
    %cst_15 = arith.constant dense<0.000000e+00> : vector<4x8xf32>
    %17 = vector.multi_reduction <add>, %16, %cst_15 [2] : vector<4x8x8xf32> to vector<4x8xf32>
    %18 = vector.shape_cast %17 : vector<4x8xf32> to vector<4x8x1xf32>
    %19 = tpu.reciprocal %18 {approx = true} : vector<4x8x1xf32> -> vector<4x8x1xf32>
    %20 = vector.broadcast %19 : vector<4x8x1xf32> to vector<4x8x8xf32>
    %21 = arith.mulf %16, %20 : vector<4x8x8xf32>
    %22 = arith.truncf %21 : vector<4x8x8xf32> to vector<4x8x8xbf16>
    "tpu.trace_start"() <{level = 10 : i32, message = "hqk,hkd->hqd"}> : () -> ()
    %cst_16 = arith.constant dense<0.000000e+00> : vector<4x8x8xf32>
    %23 = tpu.matmul %22, %5, %cst_16 {dimension_numbers = #tpu.dot_dimension_numbers<[2], [1], [1], [2], [0, 0, 0, 1, 1, 2], [0], [0]>} : vector<4x8x8xbf16>, vector<4x8x8xbf16>, vector<4x8x8xf32> -> vector<4x8x8xf32>
    "tpu.trace_stop"() : () -> ()
    %24 = arith.truncf %23 : vector<4x8x8xf32> to vector<4x8x8xbf16>
    %c0_17 = arith.constant 0 : index
    %c0_18 = arith.constant 0 : index
    %c0_19 = arith.constant 0 : index
    %c0_20 = arith.constant 0 : index
    %25 = vector.load %arg5[%c0_17, %c0_18, %c0_19, %c0_20] : memref<1x4x8x8xbf16, #tpu.memory_space<vmem>>, vector<1x4x8x8xbf16>
    %26 = vector.shape_cast %25 : vector<1x4x8x8xbf16> to vector<4x8x8xbf16>
    %27 = vector.shape_cast %24 : vector<4x8x8xbf16> to vector<1x4x8x8xbf16>
    tpu.vector_store %arg5[%c0_17, %c0_18, %c0_19, %c0_20], %27 {strides = array<i32>} : memref<1x4x8x8xbf16, #tpu.memory_space<vmem>>, vector<1x4x8x8xbf16>,
    return
  }
  func.func @transform_0(%arg0: i32) -> (i32, i32, i32, i32) {
    %c0_i32 = arith.constant 0 : i32
    %c0_i32_0 = arith.constant 0 : i32
    %c0_i32_1 = arith.constant 0 : i32
    %c0_i32_2 = arith.constant 0 : i32
    return %arg0, %c0_i32, %c0_i32_0, %c0_i32_1 : i32, i32, i32, i32
  }
  func.func @transform_1(%arg0: i32) -> (i32, i32, i32, i32) {
    %c0_i32 = arith.constant 0 : i32
    %c0_i32_0 = arith.constant 0 : i32
    %c0_i32_1 = arith.constant 0 : i32
    %c0_i32_2 = arith.constant 0 : i32
    return %arg0, %c0_i32, %c0_i32_0, %c0_i32_1 : i32, i32, i32, i32
  }
  func.func @transform_2(%arg0: i32) -> (i32, i32, i32, i32) {
    %c0_i32 = arith.constant 0 : i32
    %c0_i32_0 = arith.constant 0 : i32
    %c0_i32_1 = arith.constant 0 : i32
    %c0_i32_2 = arith.constant 0 : i32
    return %arg0, %c0_i32, %c0_i32_0, %c0_i32_1 : i32, i32, i32, i32
  }
  func.func @transform_3(%arg0: i32) -> (i32, i32, i32) {
    %c0_i32 = arith.constant 0 : i32
    %c0_i32_0 = arith.constant 0 : i32
    %c0_i32_1 = arith.constant 0 : i32
    return %arg0, %c0_i32, %c0_i32_0 : i32, i32, i32
  }
  func.func @transform_4(%arg0: i32) -> (i32, i32, i32, i32) {
    %c0_i32 = arith.constant 0 : i32
    %c0_i32_0 = arith.constant 0 : i32
    %c0_i32_1 = arith.constant 0 : i32
    %c0_i32_2 = arith.constant 0 : i32
    return %arg0, %c0_i32, %c0_i32_0, %c0_i32_1 : i32, i32, i32, i32
  }
}

module attributes {stable_mosaic.version = 11 : i64} {
  func.func @_linear_kernel(%arg0: i32, %arg1: i32, %arg2: memref<16x32xbf16, #tpu.memory_space<vmem>>, %arg3: memref<32x32xbf16, #tpu.memory_space<vmem>>, %arg4: memref<1x32xf32, #tpu.memory_space<vmem>>, %arg5: memref<16x32xbf16, #tpu.memory_space<vmem>>) attributes {dimension_semantics = [#tpu.dimension_semantics<parallel>, #tpu.dimension_semantics<parallel>], iteration_bounds = array<i64: 1, 1>, scalar_prefetch = 0 : i64, scratch_operands = 0 : i64, tpu.core_type = #tpu.core_type<tc>, window_params = [{transform_indices = @transform_0, window_bounds = array<i64: 16, 32>}, {transform_indices = @transform_1, window_bounds = array<i64: 32, 32>}, {transform_indices = @transform_2, window_bounds = array<i64: 1, 32>}, {transform_indices = @transform_3, window_bounds = array<i64: 16, 32>}]} {
    %c0 = arith.constant 0 : index
    %c0_0 = arith.constant 0 : index
    %0 = vector.load %arg2[%c0, %c0_0] : memref<16x32xbf16, #tpu.memory_space<vmem>>, vector<16x32xbf16>
    %c0_1 = arith.constant 0 : index
    %c0_2 = arith.constant 0 : index
    %1 = vector.load %arg3[%c0_1, %c0_2] : memref<32x32xbf16, #tpu.memory_space<vmem>>, vector<32x32xbf16>
    %cst = arith.constant dense<0.000000e+00> : vector<16x32xf32>
    %2 = tpu.matmul %0, %1, %cst {dimension_numbers = #tpu.dot_dimension_numbers<[1], [0], [0], [1], [0, 0, 1, 1], [], []>} : vector<16x32xbf16>, vector<32x32xbf16>, vector<16x32xf32> -> vector<16x32xf32>
    %c0_3 = arith.constant 0 : index
    %c0_4 = arith.constant 0 : index
    %3 = vector.load %arg4[%c0_3, %c0_4] : memref<1x32xf32, #tpu.memory_space<vmem>>, vector<1x32xf32>
    %4 = vector.broadcast %3 : vector<1x32xf32> to vector<16x32xf32>
    %5 = arith.addf %2, %4 : vector<16x32xf32>
    %6 = arith.truncf %5 : vector<16x32xf32> to vector<16x32xbf16>
    %c0_5 = arith.constant 0 : index
    %c0_6 = arith.constant 0 : index
    %7 = vector.load %arg5[%c0_5, %c0_6] : memref<16x32xbf16, #tpu.memory_space<vmem>>, vector<16x32xbf16>
    tpu.vector_store %arg5[%c0_5, %c0_6], %6 {strides = array<i32>} : memref<16x32xbf16, #tpu.memory_space<vmem>>, vector<16x32xbf16>,
    return
  }
  func.func @transform_0(%arg0: i32, %arg1: i32) -> (i32, i32) {
    %c0_i32 = arith.constant 0 : i32
    %c0_i32_0 = arith.constant 0 : i32
    return %arg0, %c0_i32 : i32, i32
  }
  func.func @transform_1(%arg0: i32, %arg1: i32) -> (i32, i32) {
    %c0_i32 = arith.constant 0 : i32
    %c0_i32_0 = arith.constant 0 : i32
    return %c0_i32, %arg1 : i32, i32
  }
  func.func @transform_2(%arg0: i32, %arg1: i32) -> (i32, i32) {
    %c0_i32 = arith.constant 0 : i32
    %c0_i32_0 = arith.constant 0 : i32
    return %c0_i32, %arg1 : i32, i32
  }
  func.func @transform_3(%arg0: i32, %arg1: i32) -> (i32, i32) {
    %c0_i32 = arith.constant 0 : i32
    return %arg0, %arg1 : i32, i32
  }
}

module attributes {stable_mosaic.version = 11 : i64} {
  func.func @_linear_kernel(%arg0: i32, %arg1: i32, %arg2: memref<16x32xbf16, #tpu.memory_space<vmem>>, %arg3: memref<32x64xbf16, #tpu.memory_space<vmem>>, %arg4: memref<1x64xf32, #tpu.memory_space<vmem>>, %arg5: memref<16x64xbf16, #tpu.memory_space<vmem>>) attributes {dimension_semantics = [#tpu.dimension_semantics<parallel>, #tpu.dimension_semantics<parallel>], iteration_bounds = array<i64: 1, 1>, scalar_prefetch = 0 : i64, scratch_operands = 0 : i64, tpu.core_type = #tpu.core_type<tc>, window_params = [{transform_indices = @transform_0, window_bounds = array<i64: 16, 32>}, {transform_indices = @transform_1, window_bounds = array<i64: 32, 64>}, {transform_indices = @transform_2, window_bounds = array<i64: 1, 64>}, {transform_indices = @transform_3, window_bounds = array<i64: 16, 64>}]} {
    %c0 = arith.constant 0 : index
    %c0_0 = arith.constant 0 : index
    %0 = vector.load %arg2[%c0, %c0_0] : memref<16x32xbf16, #tpu.memory_space<vmem>>, vector<16x32xbf16>
    %c0_1 = arith.constant 0 : index
    %c0_2 = arith.constant 0 : index
    %1 = vector.load %arg3[%c0_1, %c0_2] : memref<32x64xbf16, #tpu.memory_space<vmem>>, vector<32x64xbf16>
    %cst = arith.constant dense<0.000000e+00> : vector<16x64xf32>
    %2 = tpu.matmul %0, %1, %cst {dimension_numbers = #tpu.dot_dimension_numbers<[1], [0], [0], [1], [0, 0, 1, 1], [], []>} : vector<16x32xbf16>, vector<32x64xbf16>, vector<16x64xf32> -> vector<16x64xf32>
    %c0_3 = arith.constant 0 : index
    %c0_4 = arith.constant 0 : index
    %3 = vector.load %arg4[%c0_3, %c0_4] : memref<1x64xf32, #tpu.memory_space<vmem>>, vector<1x64xf32>
    %4 = vector.broadcast %3 : vector<1x64xf32> to vector<16x64xf32>
    %5 = arith.addf %2, %4 : vector<16x64xf32>
    %6 = arith.truncf %5 : vector<16x64xf32> to vector<16x64xbf16>
    %c0_5 = arith.constant 0 : index
    %c0_6 = arith.constant 0 : index
    %7 = vector.load %arg5[%c0_5, %c0_6] : memref<16x64xbf16, #tpu.memory_space<vmem>>, vector<16x64xbf16>
    tpu.vector_store %arg5[%c0_5, %c0_6], %6 {strides = array<i32>} : memref<16x64xbf16, #tpu.memory_space<vmem>>, vector<16x64xbf16>,
    return
  }
  func.func @transform_0(%arg0: i32, %arg1: i32) -> (i32, i32) {
    %c0_i32 = arith.constant 0 : i32
    %c0_i32_0 = arith.constant 0 : i32
    return %arg0, %c0_i32 : i32, i32
  }
  func.func @transform_1(%arg0: i32, %arg1: i32) -> (i32, i32) {
    %c0_i32 = arith.constant 0 : i32
    %c0_i32_0 = arith.constant 0 : i32
    return %c0_i32, %arg1 : i32, i32
  }
  func.func @transform_2(%arg0: i32, %arg1: i32) -> (i32, i32) {
    %c0_i32 = arith.constant 0 : i32
    %c0_i32_0 = arith.constant 0 : i32
    return %c0_i32, %arg1 : i32, i32
  }
  func.func @transform_3(%arg0: i32, %arg1: i32) -> (i32, i32) {
    %c0_i32 = arith.constant 0 : i32
    return %arg0, %arg1 : i32, i32
  }
}

module attributes {stable_mosaic.version = 11 : i64} {
  func.func @_add_ln_kernel(%arg0: i32, %arg1: memref<16x32xbf16, #tpu.memory_space<vmem>>, %arg2: memref<16x32xbf16, #tpu.memory_space<vmem>>, %arg3: memref<1x32xf32, #tpu.memory_space<vmem>>, %arg4: memref<1x32xf32, #tpu.memory_space<vmem>>, %arg5: memref<16x32xbf16, #tpu.memory_space<vmem>>) attributes {dimension_semantics = [#tpu.dimension_semantics<parallel>], iteration_bounds = array<i64: 1>, scalar_prefetch = 0 : i64, scratch_operands = 0 : i64, tpu.core_type = #tpu.core_type<tc>, window_params = [{transform_indices = @transform_0, window_bounds = array<i64: 16, 32>}, {transform_indices = @transform_1, window_bounds = array<i64: 16, 32>}, {pipeline_mode = #tpu.pipeline_mode<synchronous>, transform_indices = @transform_2, window_bounds = array<i64: 1, 32>}, {pipeline_mode = #tpu.pipeline_mode<synchronous>, transform_indices = @transform_3, window_bounds = array<i64: 1, 32>}, {transform_indices = @transform_4, window_bounds = array<i64: 16, 32>}]} {
    %c0 = arith.constant 0 : index
    %c0_0 = arith.constant 0 : index
    %0 = vector.load %arg1[%c0, %c0_0] : memref<16x32xbf16, #tpu.memory_space<vmem>>, vector<16x32xbf16>
    %1 = arith.extf %0 : vector<16x32xbf16> to vector<16x32xf32>
    %c0_1 = arith.constant 0 : index
    %c0_2 = arith.constant 0 : index
    %2 = vector.load %arg2[%c0_1, %c0_2] : memref<16x32xbf16, #tpu.memory_space<vmem>>, vector<16x32xbf16>
    %3 = arith.extf %2 : vector<16x32xbf16> to vector<16x32xf32>
    %4 = arith.addf %1, %3 : vector<16x32xf32>
    %cst = arith.constant dense<0.000000e+00> : vector<16xf32>
    %5 = vector.multi_reduction <add>, %4, %cst [1] : vector<16x32xf32> to vector<16xf32>
    %6 = vector.shape_cast %5 : vector<16xf32> to vector<16x1xf32>
    %cst_3 = arith.constant 3.200000e+01 : f32
    %7 = vector.broadcast %cst_3 : f32 to vector<16x1xf32>
    %8 = arith.divf %6, %7 : vector<16x1xf32>
    %9 = vector.broadcast %8 : vector<16x1xf32> to vector<16x32xf32>
    %10 = arith.subf %4, %9 : vector<16x32xf32>
    %11 = arith.mulf %10, %10 : vector<16x32xf32>
    %cst_4 = arith.constant dense<0.000000e+00> : vector<16xf32>
    %12 = vector.multi_reduction <add>, %11, %cst_4 [1] : vector<16x32xf32> to vector<16xf32>
    %13 = vector.shape_cast %12 : vector<16xf32> to vector<16x1xf32>
    %cst_5 = arith.constant 3.200000e+01 : f32
    %14 = vector.broadcast %cst_5 : f32 to vector<16x1xf32>
    %15 = arith.divf %13, %14 : vector<16x1xf32>
    %16 = vector.broadcast %8 : vector<16x1xf32> to vector<16x32xf32>
    %17 = arith.subf %4, %16 : vector<16x32xf32>
    %cst_6 = arith.constant 9.99999974E-6 : f32
    %18 = vector.broadcast %cst_6 : f32 to vector<16x1xf32>
    %19 = arith.addf %15, %18 : vector<16x1xf32>
    %20 = math.rsqrt %19 : vector<16x1xf32>
    %21 = vector.broadcast %20 : vector<16x1xf32> to vector<16x32xf32>
    %22 = arith.mulf %17, %21 : vector<16x32xf32>
    %c0_7 = arith.constant 0 : index
    %c0_8 = arith.constant 0 : index
    %23 = vector.load %arg3[%c0_7, %c0_8] : memref<1x32xf32, #tpu.memory_space<vmem>>, vector<1x32xf32>
    %24 = vector.broadcast %23 : vector<1x32xf32> to vector<16x32xf32>
    %25 = arith.mulf %22, %24 : vector<16x32xf32>
    %c0_9 = arith.constant 0 : index
    %c0_10 = arith.constant 0 : index
    %26 = vector.load %arg4[%c0_9, %c0_10] : memref<1x32xf32, #tpu.memory_space<vmem>>, vector<1x32xf32>
    %27 = vector.broadcast %26 : vector<1x32xf32> to vector<16x32xf32>
    %28 = arith.addf %25, %27 : vector<16x32xf32>
    %29 = arith.truncf %28 : vector<16x32xf32> to vector<16x32xbf16>
    %c0_11 = arith.constant 0 : index
    %c0_12 = arith.constant 0 : index
    %30 = vector.load %arg5[%c0_11, %c0_12] : memref<16x32xbf16, #tpu.memory_space<vmem>>, vector<16x32xbf16>
    tpu.vector_store %arg5[%c0_11, %c0_12], %29 {strides = array<i32>} : memref<16x32xbf16, #tpu.memory_space<vmem>>, vector<16x32xbf16>,
    return
  }
  func.func @transform_0(%arg0: i32) -> (i32, i32) {
    %c0_i32 = arith.constant 0 : i32
    %c0_i32_0 = arith.constant 0 : i32
    return %arg0, %c0_i32 : i32, i32
  }
  func.func @transform_1(%arg0: i32) -> (i32, i32) {
    %c0_i32 = arith.constant 0 : i32
    %c0_i32_0 = arith.constant 0 : i32
    return %arg0, %c0_i32 : i32, i32
  }
  func.func @transform_2(%arg0: i32) -> (i32, i32) {
    %c0_i32 = arith.constant 0 : i32
    %c0_i32_0 = arith.constant 0 : i32
    %c0_i32_1 = arith.constant 0 : i32
    return %c0_i32, %c0_i32_0 : i32, i32
  }
  func.func @transform_3(%arg0: i32) -> (i32, i32) {
    %c0_i32 = arith.constant 0 : i32
    %c0_i32_0 = arith.constant 0 : i32
    %c0_i32_1 = arith.constant 0 : i32
    return %c0_i32, %c0_i32_0 : i32, i32
  }
  func.func @transform_4(%arg0: i32) -> (i32, i32) {
    %c0_i32 = arith.constant 0 : i32
    %c0_i32_0 = arith.constant 0 : i32
    return %arg0, %c0_i32 : i32, i32
  }
}

module attributes {stable_mosaic.version = 11 : i64} {
  func.func @_linear_kernel(%arg0: i32, %arg1: i32, %arg2: memref<16x64xbf16, #tpu.memory_space<vmem>>, %arg3: memref<64x32xbf16, #tpu.memory_space<vmem>>, %arg4: memref<1x32xf32, #tpu.memory_space<vmem>>, %arg5: memref<16x32xbf16, #tpu.memory_space<vmem>>) attributes {dimension_semantics = [#tpu.dimension_semantics<parallel>, #tpu.dimension_semantics<parallel>], iteration_bounds = array<i64: 1, 1>, scalar_prefetch = 0 : i64, scratch_operands = 0 : i64, tpu.core_type = #tpu.core_type<tc>, window_params = [{transform_indices = @transform_0, window_bounds = array<i64: 16, 64>}, {transform_indices = @transform_1, window_bounds = array<i64: 64, 32>}, {transform_indices = @transform_2, window_bounds = array<i64: 1, 32>}, {transform_indices = @transform_3, window_bounds = array<i64: 16, 32>}]} {
    %c0 = arith.constant 0 : index
    %c0_0 = arith.constant 0 : index
    %0 = vector.load %arg2[%c0, %c0_0] : memref<16x64xbf16, #tpu.memory_space<vmem>>, vector<16x64xbf16>
    %c0_1 = arith.constant 0 : index
    %c0_2 = arith.constant 0 : index
    %1 = vector.load %arg3[%c0_1, %c0_2] : memref<64x32xbf16, #tpu.memory_space<vmem>>, vector<64x32xbf16>
    %cst = arith.constant dense<0.000000e+00> : vector<16x32xf32>
    %2 = tpu.matmul %0, %1, %cst {dimension_numbers = #tpu.dot_dimension_numbers<[1], [0], [0], [1], [0, 0, 1, 1], [], []>} : vector<16x64xbf16>, vector<64x32xbf16>, vector<16x32xf32> -> vector<16x32xf32>
    %c0_3 = arith.constant 0 : index
    %c0_4 = arith.constant 0 : index
    %3 = vector.load %arg4[%c0_3, %c0_4] : memref<1x32xf32, #tpu.memory_space<vmem>>, vector<1x32xf32>
    %4 = vector.broadcast %3 : vector<1x32xf32> to vector<16x32xf32>
    %5 = arith.addf %2, %4 : vector<16x32xf32>
    %6 = arith.truncf %5 : vector<16x32xf32> to vector<16x32xbf16>
    %c0_5 = arith.constant 0 : index
    %c0_6 = arith.constant 0 : index
    %7 = vector.load %arg5[%c0_5, %c0_6] : memref<16x32xbf16, #tpu.memory_space<vmem>>, vector<16x32xbf16>
    tpu.vector_store %arg5[%c0_5, %c0_6], %6 {strides = array<i32>} : memref<16x32xbf16, #tpu.memory_space<vmem>>, vector<16x32xbf16>,
    return
  }
  func.func @transform_0(%arg0: i32, %arg1: i32) -> (i32, i32) {
    %c0_i32 = arith.constant 0 : i32
    %c0_i32_0 = arith.constant 0 : i32
    return %arg0, %c0_i32 : i32, i32
  }
  func.func @transform_1(%arg0: i32, %arg1: i32) -> (i32, i32) {
    %c0_i32 = arith.constant 0 : i32
    %c0_i32_0 = arith.constant 0 : i32
    return %c0_i32, %arg1 : i32, i32
  }
  func.func @transform_2(%arg0: i32, %arg1: i32) -> (i32, i32) {
    %c0_i32 = arith.constant 0 : i32
    %c0_i32_0 = arith.constant 0 : i32
    return %c0_i32, %arg1 : i32, i32
  }
  func.func @transform_3(%arg0: i32, %arg1: i32) -> (i32, i32) {
    %c0_i32 = arith.constant 0 : i32
    return %arg0, %arg1 : i32, i32
  }
}

</mosaic_0001>

<llo_original>
// kernel: coep_encoder_forward.31
$region0: #{coep_encoder_forward.31}
  #allocation0 [shape = 'u32[]', space=smem, size = 0x4, offset = 0x4, fixed_abs, tag = 'smem constant byte address 0x4 - core index']
  #allocation1 [shape = 'u32[144,128]{1,0:T(1,128)}', space=vmem, size = 0x12000, scoped, tag = 'internal scratch']
  %s0 = inlined_call_operand.vmem [shape: bf16[64,32], index: 0, kind: input, shape index: {}]
  %s1 = inlined_call_operand.vmem [shape: bf16[32,96], index: 1, kind: input, shape index: {}]
  %s2 = inlined_call_operand.vmem [shape: f32[1,96], index: 2, kind: input, shape index: {}]
  %s3 = inlined_call_operand.vmem [shape: bf16[64,96], index: 3, kind: output, shape index: {}]
  %s4 = sld [smem:[#allocation0]]
  $region22: #{coep_encoder_forward.31} parent=0
    _
  %s6 = ssub.s32 1, %s4
  %s7 = scalar_select 0, %s6, %s4
  // Predicated region
  $region2: #{coep_encoder_forward.31} parent=0 // pred_check
    _
  $region3: #{coep_encoder_forward.31} parent=0 // pred_check_branch
    %9 = sbr.rel (0) target = $region5
  $region4: #{coep_encoder_forward.31} parent=0 // pred_region
    _
  $region5: #{coep_encoder_forward.31} parent=0 // pred_fallthru
    _
  // Predicated region
  $region6: #{coep_encoder_forward.31} parent=0 // pred_check
    _
  $region7: #{coep_encoder_forward.31} parent=0 // pred_check_branch
    %11 = sbr.rel (0) target = $region9
  $region8: #{coep_encoder_forward.31} parent=0 // pred_region
    _
  $region9: #{coep_encoder_forward.31} parent=0 // pred_fallthru
    _
  // Predicated region
  $region10: #{coep_encoder_forward.31} parent=0 // pred_check
    _
  $region11: #{coep_encoder_forward.31} parent=0 // pred_check_branch
    %13 = sbr.rel (0) target = $region13
  $region12: #{coep_encoder_forward.31} parent=0 // pred_region
    _
  $region13: #{coep_encoder_forward.31} parent=0 // pred_fallthru
    _
  %v15 = vld [vmem:[%s0] sm:$0xf]
  %v16 = vld [vmem:[%s0 + $0x4] sm:$0xf]
  %v17 = vld [vmem:[%s0 + $0x8] sm:$0xf]
  %v18 = vld [vmem:[%s0 + $0xc] sm:$0xf]
  %v19 = vld [vmem:[%s0 + $0x10] sm:$0xf]
  %v20 = vld [vmem:[%s0 + $0x14] sm:$0xf]
  %v21 = vld [vmem:[%s0 + $0x18] sm:$0xf]
  %v22 = vld [vmem:[%s0 + $0x1c] sm:$0xf]
  %v23 = vld [vmem:[%s1] sm:$0xf]
  %v24 = vld [vmem:[%s1 + $0x4] sm:$0xf]
  %v25 = vld [vmem:[%s1 + $0x8] sm:$0xf]
  %v26 = vld [vmem:[%s1 + $0xc] sm:$0xf]
  %v27 = vld [vmem:[%s2] sm:$0x1]
  %v29 = vlaneseq
  %v30 = vshrl.u32 %v29, 7
  %v31 = vsub.s32 0, %v30
  %v32 = vrot.slane %v27, %v31
  %v42 = vunpack.c.l.b16 %v15
  %v43 = vunpack.c.l.b16 %v16
  %v44 = vunpack.c.l.b16 %v17
  %v45 = vunpack.c.l.b16 %v18
  %v46 = vunpack.c.l.b16 %v19
  %v47 = vunpack.c.l.b16 %v20
  %v48 = vunpack.c.l.b16 %v21
  %v49 = vunpack.c.l.b16 %v22
  %v50 = vpack.c.b16 %v43, %v42
  %v51 = vpack.c.b16 %v45, %v44
  %v52 = vpack.c.b16 %v47, %v46
  %v53 = vpack.c.b16 %v49, %v48
  %v58 = vunpack.c.l.b16 %v23
  %v59 = vunpack.c.l.b16 %v24
  %v60 = vunpack.c.l.b16 %v25
  %v61 = vunpack.c.l.b16 %v26
  %v62 = vpack.c.b16 %v59, %v58
  %v63 = vpack.c.b16 %v61, %v60
  %vm66 = vcmask 261120
  %v68 = vsel %vm66, %v50, 0
  %v71 = vsel %vm66, %v51, 0
  %v74 = vsel %vm66, %v52, 0
  %v77 = vsel %vm66, %v53, 0
  %79 = vmatprep.subr.bf16.mxu0 0
  %80 = vmatpush1.bf16.msra.mxu0 %v62
  %81 = vmatprep.subr.bf16.mxu0 0
  %82 = vmatpush1.bf16.msra.mxu0 %v63
  %83 = vmatprep.subr.bf16.mxu0 0
  %84 = vmatpush1.bf16.msra.mxu0 0
  %85 = vmatprep.subr.bf16.mxu0 0
  %86 = vmatpush1.bf16.msra.mxu0 0
  %87 = vmatprep.subr.bf16.mxu0 0
  %88 = vmatpush1.bf16.msra.mxu0 0
  %89 = vmatprep.subr.bf16.mxu0 0
  %90 = vmatpush1.bf16.msra.mxu0 0
  %91 = vmatprep.subr.bf16.mxu0 0
  %92 = vmatpush1.bf16.msra.mxu0 0
  %93 = vmatprep.subr.bf16.mxu0 0
  %94 = vmatpush1.bf16.msra.mxu0 0
  %95 = vmatprep.subr.bf16.mxu0 0
  %96 = vmatpush1.bf16.msra.mxu0 0
  %97 = vmatprep.subr.bf16.mxu0 0
  %98 = vmatpush1.bf16.msra.mxu0 0
  %99 = vmatprep.subr.bf16.mxu0 0
  %100 = vmatpush1.bf16.msra.mxu0 0
  %101 = vmatprep.subr.bf16.mxu0 0
  %102 = vmatpush1.bf16.msra.mxu0 0
  %103 = vmatprep.subr.bf16.mxu0 0
  %104 = vmatpush1.bf16.msra.mxu0 0
  %105 = vmatprep.subr.bf16.mxu0 0
  %106 = vmatpush1.bf16.msra.mxu0 0
  %107 = vmatprep.subr.bf16.mxu0 0
  %108 = vmatpush1.bf16.msra.mxu0 0
  %109 = vmatprep.subr.bf16.mxu0 0
  %110 = vmatpush1.bf16.msra.mxu0 0
  %111 = vmatprep.mubr.bf16.mxu0 0
  %112 = vmatmul.mubr.bf16.gmra.mrb[0].mxu0 %v68
  %v113 = vpop.f32.mrb[0].mxu0
  %v114 = vadd.f32 %v32, %v113
  %v115 = vpop.f32.mrb[0].mxu0
  %v116 = vpop.f32.mrb[0].mxu0
  %v117 = vadd.f32 %v32, %v116
  %v118 = vpop.f32.mrb[0].mxu0
  %119 = vmatprep.mubr.bf16.mxu0 0
  %120 = vmatmul.mubr.bf16.gmra.mrb[0].mxu0 %v71
  %v121 = vpop.f32.mrb[0].mxu0
  %v122 = vadd.f32 %v32, %v121
  %v123 = vpop.f32.mrb[0].mxu0
  %v124 = vpop.f32.mrb[0].mxu0
  %v125 = vadd.f32 %v32, %v124
  %v126 = vpop.f32.mrb[0].mxu0
  %127 = vmatprep.mubr.bf16.mxu0 0
  %128 = vmatmul.mubr.bf16.gmra.mrb[0].mxu0 %v74
  %v129 = vpop.f32.mrb[0].mxu0
  %v130 = vadd.f32 %v32, %v129
  %v131 = vpop.f32.mrb[0].mxu0
  %v132 = vpop.f32.mrb[0].mxu0
  %v133 = vadd.f32 %v32, %v132
  %v134 = vpop.f32.mrb[0].mxu0
  %135 = vmatprep.mubr.bf16.mxu0 0
  %136 = vmatmul.mubr.bf16.gmra.mrb[0].mxu0 %v77
  %v137 = vpop.f32.mrb[0].mxu0
  %v138 = vadd.f32 %v32, %v137
  %v139 = vpop.f32.mrb[0].mxu0
  %v140 = vpop.f32.mrb[0].mxu0
  %v141 = vadd.f32 %v32, %v140
  %v142 = vpop.f32.mrb[0].mxu0
  %143 = vdwg.mxu0
  %v144 = vpack.c.bf16 %v117, %v114
  %v145 = vpack.c.bf16 %v125, %v122
  %v146 = vpack.c.bf16 %v133, %v130
  %v147 = vpack.c.bf16 %v141, %v138
  %v152 = vunpack.c.l.b16 %v144
  %v153 = vunpack.c.h.b16 %v144
  %v154 = vunpack.c.l.b16 %v145
  %v155 = vunpack.c.h.b16 %v145
  %v156 = vunpack.c.l.b16 %v146
  %v157 = vunpack.c.h.b16 %v146
  %v158 = vunpack.c.l.b16 %v147
  %v159 = vunpack.c.h.b16 %v147
  %v160 = vpack.c.b16 %v152, %v152
  %v161 = vpack.c.b16 %v153, %v153
  %v162 = vpack.c.b16 %v154, %v154
  %v163 = vpack.c.b16 %v155, %v155
  %v164 = vpack.c.b16 %v156, %v156
  %v165 = vpack.c.b16 %v157, %v157
  %v166 = vpack.c.b16 %v158, %v158
  %v167 = vpack.c.b16 %v159, %v159
  %vm176 = vcmask 781312
  %177 = vst.msk [vmem:[%s3] sm:$0xf] %vm176, %v160
  %178 = vst.msk [vmem:[%s3 + $0x4] sm:$0xf] %vm176, %v161
  %179 = vst.msk [vmem:[%s3 + $0x8] sm:$0xf] %vm176, %v162
  %180 = vst.msk [vmem:[%s3 + $0xc] sm:$0xf] %vm176, %v163
  %181 = vst.msk [vmem:[%s3 + $0x10] sm:$0xf] %vm176, %v164
  %182 = vst.msk [vmem:[%s3 + $0x14] sm:$0xf] %vm176, %v165
  %183 = vst.msk [vmem:[%s3 + $0x18] sm:$0xf] %vm176, %v166
  %184 = vst.msk [vmem:[%s3 + $0x1c] sm:$0xf] %vm176, %v167
  // Predicated region
  $region14: #{coep_encoder_forward.31} parent=0 // pred_check
    _
  $region15: #{coep_encoder_forward.31} parent=0 // pred_check_branch
    %186 = sbr.rel (0) target = $region17
  $region16: #{coep_encoder_forward.31} parent=0 // pred_region
    _
  $region17: #{coep_encoder_forward.31} parent=0 // pred_fallthru
    _
  // Predicated region
  $region18: #{coep_encoder_forward.31} parent=0 // pred_check
    _
  $region19: #{coep_encoder_forward.31} parent=0 // pred_check_branch
    %188 = sbr.rel (0) target = $region21
  $region20: #{coep_encoder_forward.31} parent=0 // pred_region
    _
  $region21: #{coep_encoder_forward.31} parent=0 // pred_fallthru
    _

// kernel: coep_encoder_forward.30
$region0: #{coep_encoder_forward.30}
  #allocation0 [shape = 'u32[]', space=smem, size = 0x4, offset = 0x4, fixed_abs, tag = 'smem constant byte address 0x4 - core index']
  #allocation1 [shape = 'u32[144,128]{1,0:T(1,128)}', space=vmem, size = 0x12000, scoped, tag = 'internal scratch']
  %s0 = inlined_call_operand.vmem [shape: f32[64,32], index: 0, kind: input, shape index: {}]
  %s1 = inlined_call_operand.vmem [shape: f32[1,32], index: 1, kind: input, shape index: {}]
  %s2 = inlined_call_operand.vmem [shape: f32[1,32], index: 2, kind: input, shape index: {}]
  %s3 = inlined_call_operand.vmem [shape: bf16[64,32], index: 3, kind: output, shape index: {}]
  %s4 = sld [smem:[#allocation0]]
  $region22: #{coep_encoder_forward.30} parent=0
    _
  %s6 = ssub.s32 1, %s4
  %s7 = scalar_select 0, %s6, %s4
  // Predicated region
  $region2: #{coep_encoder_forward.30} parent=0 // pred_check
    _
  $region3: #{coep_encoder_forward.30} parent=0 // pred_check_branch
    %9 = sbr.rel (0) target = $region5
  $region4: #{coep_encoder_forward.30} parent=0 // pred_region
    _
  $region5: #{coep_encoder_forward.30} parent=0 // pred_fallthru
    _
  // Predicated region
  $region6: #{coep_encoder_forward.30} parent=0 // pred_check
    _
  $region7: #{coep_encoder_forward.30} parent=0 // pred_check_branch
    %11 = sbr.rel (0) target = $region9
  $region8: #{coep_encoder_forward.30} parent=0 // pred_region
    _
  $region9: #{coep_encoder_forward.30} parent=0 // pred_fallthru
    _
  // Predicated region
  $region10: #{coep_encoder_forward.30} parent=0 // pred_check
    _
  $region11: #{coep_encoder_forward.30} parent=0 // pred_check_branch
    %13 = sbr.rel (0) target = $region13
  $region12: #{coep_encoder_forward.30} parent=0 // pred_region
    _
  $region13: #{coep_encoder_forward.30} parent=0 // pred_fallthru
    _
  %v14 = vld [vmem:[%s0] sm:$0xff]
  %v15 = vld [vmem:[%s0 + $0x8] sm:$0xff]
  %v16 = vld [vmem:[%s0 + $0x10] sm:$0xff]
  %v17 = vld [vmem:[%s0 + $0x18] sm:$0xff]
  %v18 = vld [vmem:[%s0 + $0x20] sm:$0xff]
  %v19 = vld [vmem:[%s0 + $0x28] sm:$0xff]
  %v20 = vld [vmem:[%s0 + $0x30] sm:$0xff]
  %v21 = vld [vmem:[%s0 + $0x38] sm:$0xff]
  %vm22 = vcmask 261120
  %v23 = vsel %vm22, %v14, 0.0
  %24 = vadd.xlane.f32.xlu0 %v23
  %v25 = vpop.xlane.xlu0 %24
  %v26 = vsel %vm22, %v15, 0.0
  %27 = vadd.xlane.f32.xlu0 %v26
  %v28 = vpop.xlane.xlu0 %27
  %v29 = vsel %vm22, %v16, 0.0
  %30 = vadd.xlane.f32.xlu0 %v29
  %v31 = vpop.xlane.xlu0 %30
  %v32 = vsel %vm22, %v17, 0.0
  %33 = vadd.xlane.f32.xlu0 %v32
  %v34 = vpop.xlane.xlu0 %33
  %v35 = vsel %vm22, %v18, 0.0
  %36 = vadd.xlane.f32.xlu0 %v35
  %v37 = vpop.xlane.xlu0 %36
  %v38 = vsel %vm22, %v19, 0.0
  %39 = vadd.xlane.f32.xlu0 %v38
  %v40 = vpop.xlane.xlu0 %39
  %v41 = vsel %vm22, %v20, 0.0
  %42 = vadd.xlane.f32.xlu0 %v41
  %v43 = vpop.xlane.xlu0 %42
  %v44 = vsel %vm22, %v21, 0.0
  %45 = vadd.xlane.f32.xlu0 %v44
  %v46 = vpop.xlane.xlu0 %45
  %v47 = vrcp.pop 32.0
  %v48 = vmul.f32 %v25, %v47
  %v49 = vmul.f32 %v28, %v47
  %v50 = vmul.f32 %v31, %v47
  %v51 = vmul.f32 %v34, %v47
  %v52 = vmul.f32 %v37, %v47
  %v53 = vmul.f32 %v40, %v47
  %v54 = vmul.f32 %v43, %v47
  %v55 = vmul.f32 %v46, %v47
  %v56 = vsub.f32 %v14, %v48
  %v57 = vsub.f32 %v15, %v49
  %v58 = vsub.f32 %v16, %v50
  %v59 = vsub.f32 %v17, %v51
  %v60 = vsub.f32 %v18, %v52
  %v61 = vsub.f32 %v19, %v53
  %v62 = vsub.f32 %v20, %v54
  %v63 = vsub.f32 %v21, %v55
  %v64 = vmul.f32 %v56, %v56
  %v65 = vmul.f32 %v57, %v57
  %v66 = vmul.f32 %v58, %v58
  %v67 = vmul.f32 %v59, %v59
  %v68 = vmul.f32 %v60, %v60
  %v69 = vmul.f32 %v61, %v61
  %v70 = vmul.f32 %v62, %v62
  %v71 = vmul.f32 %v63, %v63
  %v72 = vsel %vm22, %v64, 0.0
  %73 = vadd.xlane.f32.xlu0 %v72
  %v74 = vpop.xlane.xlu0 %73
  %v75 = vsel %vm22, %v65, 0.0
  %76 = vadd.xlane.f32.xlu0 %v75
  %v77 = vpop.xlane.xlu0 %76
  %v78 = vsel %vm22, %v66, 0.0
  %79 = vadd.xlane.f32.xlu0 %v78
  %v80 = vpop.xlane.xlu0 %79
  %v81 = vsel %vm22, %v67, 0.0
  %82 = vadd.xlane.f32.xlu0 %v81
  %v83 = vpop.xlane.xlu0 %82
  %v84 = vsel %vm22, %v68, 0.0
  %85 = vadd.xlane.f32.xlu0 %v84
  %v86 = vpop.xlane.xlu0 %85
  %v87 = vsel %vm22, %v69, 0.0
  %88 = vadd.xlane.f32.xlu0 %v87
  %v89 = vpop.xlane.xlu0 %88
  %v90 = vsel %vm22, %v70, 0.0
  %91 = vadd.xlane.f32.xlu0 %v90
  %v92 = vpop.xlane.xlu0 %91
  %v93 = vsel %vm22, %v71, 0.0
  %94 = vadd.xlane.f32.xlu0 %v93
  %v95 = vpop.xlane.xlu0 %94
  %v96 = vmul.f32 %v74, %v47
  %v97 = vmul.f32 %v77, %v47
  %v98 = vmul.f32 %v80, %v47
  %v99 = vmul.f32 %v83, %v47
  %v100 = vmul.f32 %v86, %v47
  %v101 = vmul.f32 %v89, %v47
  %v102 = vmul.f32 %v92, %v47
  %v103 = vmul.f32 %v95, %v47
  %v104 = vadd.f32 %v96, 1e-05
  %v105 = vadd.f32 %v97, 1e-05
  %v106 = vadd.f32 %v98, 1e-05
  %v107 = vadd.f32 %v99, 1e-05
  %v108 = vadd.f32 %v100, 1e-05
  %v109 = vadd.f32 %v101, 1e-05
  %v110 = vadd.f32 %v102, 1e-05
  %v111 = vadd.f32 %v103, 1e-05
  %v112 = vrsqrt.pop %v104
  %v113 = vrsqrt.pop %v105
  %v114 = vrsqrt.pop %v106
  %v115 = vrsqrt.pop %v107
  %v116 = vrsqrt.pop %v108
  %v117 = vrsqrt.pop %v109
  %v118 = vrsqrt.pop %v110
  %v119 = vrsqrt.pop %v111
  %v120 = vmul.f32 %v56, %v112
  %v121 = vmul.f32 %v57, %v113
  %v122 = vmul.f32 %v58, %v114
  %v123 = vmul.f32 %v59, %v115
  %v124 = vmul.f32 %v60, %v116
  %v125 = vmul.f32 %v61, %v117
  %v126 = vmul.f32 %v62, %v118
  %v127 = vmul.f32 %v63, %v119
  %v128 = vld [vmem:[%s1] sm:$0x1]
  %v130 = vlaneseq
  %v131 = vshrl.u32 %v130, 7
  %v132 = vsub.s32 0, %v131
  %v133 = vrot.slane %v128, %v132
  %v135 = vmul.f32 %v120, %v133
  %v136 = vmul.f32 %v121, %v133
  %v137 = vmul.f32 %v122, %v133
  %v138 = vmul.f32 %v123, %v133
  %v139 = vmul.f32 %v124, %v133
  %v140 = vmul.f32 %v125, %v133
  %v141 = vmul.f32 %v126, %v133
  %v142 = vmul.f32 %v127, %v133
  %v143 = vld [vmem:[%s2] sm:$0x1]
  %v145 = vlaneseq
  %v146 = vshrl.u32 %v145, 7
  %v147 = vsub.s32 0, %v146
  %v148 = vrot.slane %v143, %v147
  %v150 = vadd.f32 %v135, %v148
  %v151 = vadd.f32 %v136, %v148
  %v152 = vadd.f32 %v137, %v148
  %v153 = vadd.f32 %v138, %v148
  %v154 = vadd.f32 %v139, %v148
  %v155 = vadd.f32 %v140, %v148
  %v156 = vadd.f32 %v141, %v148
  %v157 = vadd.f32 %v142, %v148
  %v158 = vpack.c.bf16 %v151, %v150
  %v159 = vpack.c.bf16 %v153, %v152
  %v160 = vpack.c.bf16 %v155, %v154
  %v161 = vpack.c.bf16 %v157, %v156
  %v166 = vunpack.c.l.b16 %v158
  %v167 = vunpack.c.h.b16 %v158
  %v168 = vunpack.c.l.b16 %v159
  %v169 = vunpack.c.h.b16 %v159
  %v170 = vunpack.c.l.b16 %v160
  %v171 = vunpack.c.h.b16 %v160
  %v172 = vunpack.c.l.b16 %v161
  %v173 = vunpack.c.h.b16 %v161
  %v174 = vpack.c.b16 %v166, %v166
  %v175 = vpack.c.b16 %v167, %v167
  %v176 = vpack.c.b16 %v168, %v168
  %v177 = vpack.c.b16 %v169, %v169
  %v178 = vpack.c.b16 %v170, %v170
  %v179 = vpack.c.b16 %v171, %v171
  %v180 = vpack.c.b16 %v172, %v172
  %v181 = vpack.c.b16 %v173, %v173
  %vm190 = vcmask 257024
  %191 = vst.msk [vmem:[%s3] sm:$0xf] %vm190, %v174
  %192 = vst.msk [vmem:[%s3 + $0x4] sm:$0xf] %vm190, %v175
  %193 = vst.msk [vmem:[%s3 + $0x8] sm:$0xf] %vm190, %v176
  %194 = vst.msk [vmem:[%s3 + $0xc] sm:$0xf] %vm190, %v177
  %195 = vst.msk [vmem:[%s3 + $0x10] sm:$0xf] %vm190, %v178
  %196 = vst.msk [vmem:[%s3 + $0x14] sm:$0xf] %vm190, %v179
  %197 = vst.msk [vmem:[%s3 + $0x18] sm:$0xf] %vm190, %v180
  %198 = vst.msk [vmem:[%s3 + $0x1c] sm:$0xf] %vm190, %v181
  // Predicated region
  $region14: #{coep_encoder_forward.30} parent=0 // pred_check
    _
  $region15: #{coep_encoder_forward.30} parent=0 // pred_check_branch
    %200 = sbr.rel (0) target = $region17
  $region16: #{coep_encoder_forward.30} parent=0 // pred_region
    _
  $region17: #{coep_encoder_forward.30} parent=0 // pred_fallthru
    _
  // Predicated region
  $region18: #{coep_encoder_forward.30} parent=0 // pred_check
    _
  $region19: #{coep_encoder_forward.30} parent=0 // pred_check_branch
    %202 = sbr.rel (0) target = $region21
  $region20: #{coep_encoder_forward.30} parent=0 // pred_region
    _
  $region21: #{coep_encoder_forward.30} parent=0 // pred_fallthru
    _

// kernel: coep_encoder_forward.32
$region0: #{coep_encoder_forward.32}
  #allocation0 [shape = 'u32[]', space=smem, size = 0x4, offset = 0x4, fixed_abs, tag = 'smem constant byte address 0x4 - core index']
  #allocation1 [shape = 'u32[144,128]{1,0:T(1,128)}', space=vmem, size = 0x12000, scoped, tag = 'internal scratch']
  %s0 = inlined_call_operand.vmem [shape: bf16[8,4,8,8], index: 0, kind: input, shape index: {}]
  %s1 = inlined_call_operand.vmem [shape: bf16[8,4,8,8], index: 1, kind: input, shape index: {}]
  %s2 = inlined_call_operand.vmem [shape: bf16[8,4,8,8], index: 2, kind: input, shape index: {}]
  %s3 = inlined_call_operand.vmem [shape: f32[8,1,8], index: 3, kind: input, shape index: {}]
  %s4 = inlined_call_operand.vmem [shape: bf16[8,4,8,8], index: 4, kind: output, shape index: {}]
  %s5 = sld [smem:[#allocation0]]
  $region49: #{coep_encoder_forward.32} parent=0
    _
  %s7 = ssub.s32 1, %s5
  %s8 = scalar_select 0, %s7, %s5
  loop: start=0, step=1, limit=10
  $region2: #{coep_encoder_forward.32} parent=0 // loop_pre_header
    _
  $region3: #{coep_encoder_forward.32} parent=0 // loop_header
    %s10 = sphi 0, %s14
    %p11 = scmp.ge.s32.totalorder %s10, 10
    %s20 = sphi 0, %s22
    %s23 = sphi 0, %s20
    %s24 = sphi 0, %s23
    %s40 = sphi 0, %s24
    %s46 = sphi 0, %s48
    %s49 = sphi 0, %s46
    %s50 = sphi 0, %s49
    %s66 = sphi 0, %s50
    %s72 = sphi 0, %s74
    %s75 = sphi 0, %s72
    %s76 = sphi 0, %s75
    %s92 = sphi 0, %s76
    %s98 = sphi 0, %s100
    %s101 = sphi 0, %s98
    %s102 = sphi 0, %s101
    %s118 = sphi 0, %s102
    %s124 = sphi 0, %s126
    %s127 = sphi 0, %s124
    %s128 = sphi 0, %s127
    %s144 = sphi 0, %s128
  $region4: #{coep_encoder_forward.32} parent=0 // loop_header_branch
    %13 = sbr.rel (%p11) target = $region8
  $region5: #{coep_encoder_forward.32} parent=0 // loop_body
    %s15 = ssub.s32 %s10, 1
    %s16 = ssub.s32 %s10, 2
    %s17 = sadd.s32 %s10, 1
    %s18 = ssub.s32 %s10, %s17
    %p19 = scmp.eq.s32.totalorder %s18, 0
    %s21 = sadd.s32 %s20, 1
    %s22 = scalar_select %p19, %s20, %s21
    %p25 = pneg %p19
    %p26 = scmp.eq.s32.totalorder %s10, 7
    %p27 = por %p25, %p26
    %p28 = scmp.ne.s32.totalorder %s20, %s23
    %p29 = scmp.eq.s32.totalorder %s10, 0
    %p30 = por %p28, %p29
    %p31 = scmp.ne.s32.totalorder %s20, %s23
    %p32 = scmp.eq.s32.totalorder %s15, 7
    %p33 = por %p31, %p32
    %p34 = scmp.ne.s32.totalorder %s23, %s24
    %p35 = scmp.eq.s32.totalorder %s15, 0
    %p36 = por %p34, %p35
    %p37 = scmp.ne.s32.totalorder %s23, %s24
    %p38 = scmp.eq.s32.totalorder %s16, 7
    %p39 = por %p37, %p38
    %p41 = scmp.ne.s32.totalorder %s24, %s40
    %p42 = scmp.eq.s32.totalorder %s16, 0
    %p43 = por %p41, %p42
    %s44 = ssub.s32 %s10, %s17
    %p45 = scmp.eq.s32.totalorder %s44, 0
    %s47 = sadd.s32 %s46, 1
    %s48 = scalar_select %p45, %s46, %s47
    %p51 = pneg %p45
    %p52 = scmp.eq.s32.totalorder %s10, 7
    %p53 = por %p51, %p52
    %p54 = scmp.ne.s32.totalorder %s46, %s49
    %p55 = scmp.eq.s32.totalorder %s10, 0
    %p56 = por %p54, %p55
    %p57 = scmp.ne.s32.totalorder %s46, %s49
    %p58 = scmp.eq.s32.totalorder %s15, 7
    %p59 = por %p57, %p58
    %p60 = scmp.ne.s32.totalorder %s49, %s50
    %p61 = scmp.eq.s32.totalorder %s15, 0
    %p62 = por %p60, %p61
    %p63 = scmp.ne.s32.totalorder %s49, %s50
    %p64 = scmp.eq.s32.totalorder %s16, 7
    %p65 = por %p63, %p64
    %p67 = scmp.ne.s32.totalorder %s50, %s66
    %p68 = scmp.eq.s32.totalorder %s16, 0
    %p69 = por %p67, %p68
    %s70 = ssub.s32 %s10, %s17
    %p71 = scmp.eq.s32.totalorder %s70, 0
    %s73 = sadd.s32 %s72, 1
    %s74 = scalar_select %p71, %s72, %s73
    %p77 = pneg %p71
    %p78 = scmp.eq.s32.totalorder %s10, 7
    %p79 = por %p77, %p78
    %p80 = scmp.ne.s32.totalorder %s72, %s75
    %p81 = scmp.eq.s32.totalorder %s10, 0
    %p82 = por %p80, %p81
    %p83 = scmp.ne.s32.totalorder %s72, %s75
    %p84 = scmp.eq.s32.totalorder %s15, 7
    %p85 = por %p83, %p84
    %p86 = scmp.ne.s32.totalorder %s75, %s76
    %p87 = scmp.eq.s32.totalorder %s15, 0
    %p88 = por %p86, %p87
    %p89 = scmp.ne.s32.totalorder %s75, %s76
    %p90 = scmp.eq.s32.totalorder %s16, 7
    %p91 = por %p89, %p90
    %p93 = scmp.ne.s32.totalorder %s76, %s92
    %p94 = scmp.eq.s32.totalorder %s16, 0
    %p95 = por %p93, %p94
    %s96 = ssub.s32 %s10, %s17
    %p97 = scmp.eq.s32.totalorder %s96, 0
    %s99 = sadd.s32 %s98, 1
    %s100 = scalar_select %p97, %s98, %s99
    %p103 = pneg %p97
    %p104 = scmp.eq.s32.totalorder %s10, 7
    %p105 = por %p103, %p104
    %p106 = scmp.ne.s32.totalorder %s98, %s101
    %p107 = scmp.eq.s32.totalorder %s10, 0
    %p108 = por %p106, %p107
    %p109 = scmp.ne.s32.totalorder %s98, %s101
    %p110 = scmp.eq.s32.totalorder %s15, 7
    %p111 = por %p109, %p110
    %p112 = scmp.ne.s32.totalorder %s101, %s102
    %p113 = scmp.eq.s32.totalorder %s15, 0
    %p114 = por %p112, %p113
    %p115 = scmp.ne.s32.totalorder %s101, %s102
    %p116 = scmp.eq.s32.totalorder %s16, 7
    %p117 = por %p115, %p116
    %p119 = scmp.ne.s32.totalorder %s102, %s118
    %p120 = scmp.eq.s32.totalorder %s16, 0
    %p121 = por %p119, %p120
    %s122 = ssub.s32 %s10, %s17
    %p123 = scmp.eq.s32.totalorder %s122, 0
    %s125 = sadd.s32 %s124, 1
    %s126 = scalar_select %p123, %s124, %s125
    %p129 = pneg %p123
    %p130 = scmp.eq.s32.totalorder %s10, 7
    %p131 = por %p129, %p130
    %p132 = scmp.ne.s32.totalorder %s124, %s127
    %p133 = scmp.eq.s32.totalorder %s10, 0
    %p134 = por %p132, %p133
    %p135 = scmp.ne.s32.totalorder %s124, %s127
    %p136 = scmp.eq.s32.totalorder %s15, 7
    %p137 = por %p135, %p136
    %p138 = scmp.ne.s32.totalorder %s127, %s128
    %p139 = scmp.eq.s32.totalorder %s15, 0
    %p140 = por %p138, %p139
    %p141 = scmp.ne.s32.totalorder %s127, %s128
    %p142 = scmp.eq.s32.totalorder %s16, 7
    %p143 = por %p141, %p142
    %p145 = scmp.ne.s32.totalorder %s128, %s144
    %p146 = scmp.eq.s32.totalorder %s16, 0
    %p147 = por %p145, %p146
    %p148 = scmp.le.s32.totalorder 1, %s10
    %p149 = scmp.lt.s32.totalorder %s10, 9
    %p150 = pnand %p148, %p149
    %p151 = pneg %p150
    // Predicated region
    $region9: #{coep_encoder_forward.32} parent=5 // pred_check
      _
    $region10: #{coep_encoder_forward.32} parent=5 // pred_check_branch
      %153 = sbr.rel (%p150) target = $region12
    $region11: #{coep_encoder_forward.32} parent=5 // pred_region
      %s154 = ssub.s32 %s10, 1
    $region12: #{coep_encoder_forward.32} parent=5 // pred_fallthru
      _
    %p155 = scmp.lt.s32.totalorder %s10, 8
    // Predicated region
    $region13: #{coep_encoder_forward.32} parent=5 // pred_check
      %p156 = pneg %p155
    $region14: #{coep_encoder_forward.32} parent=5 // pred_check_branch
      %158 = sbr.rel (%p156) target = $region16
    $region15: #{coep_encoder_forward.32} parent=5 // pred_region
      // Predicated region
      $region17: #{coep_encoder_forward.32} parent=15 // pred_check
        %p159 = pneg %p30
      $region18: #{coep_encoder_forward.32} parent=15 // pred_check_branch
        %161 = sbr.rel (%p159) target = $region20
      $region19: #{coep_encoder_forward.32} parent=15 // pred_region
        %p162 = scmp.lt.s32.totalorder %s10, 7
        %s163 = scalar_select %p162, %s10, 7
        %s164 = smul.addr %s163, 4
        %s165 = smul.addr %s164, 4
        %s166 = scalar_lea.vmem %s0, %s165
      $region20: #{coep_encoder_forward.32} parent=15 // pred_fallthru
        _
      // Predicated region
      $region21: #{coep_encoder_forward.32} parent=15 // pred_check
        %p167 = pneg %p56
      $region22: #{coep_encoder_forward.32} parent=15 // pred_check_branch
        %169 = sbr.rel (%p167) target = $region24
      $region23: #{coep_encoder_forward.32} parent=15 // pred_region
        %p170 = scmp.lt.s32.totalorder %s10, 7
        %s171 = scalar_select %p170, %s10, 7
        %s172 = smul.addr %s171, 4
        %s173 = smul.addr %s172, 4
        %s174 = scalar_lea.vmem %s1, %s173
      $region24: #{coep_encoder_forward.32} parent=15 // pred_fallthru
        _
      // Predicated region
      $region25: #{coep_encoder_forward.32} parent=15 // pred_check
        %p175 = pneg %p82
      $region26: #{coep_encoder_forward.32} parent=15 // pred_check_branch
        %177 = sbr.rel (%p175) target = $region28
      $region27: #{coep_encoder_forward.32} parent=15 // pred_region
        %p178 = scmp.lt.s32.totalorder %s10, 7
        %s179 = scalar_select %p178, %s10, 7
        %s180 = smul.addr %s179, 4
        %s181 = smul.addr %s180, 4
        %s182 = scalar_lea.vmem %s2, %s181
      $region28: #{coep_encoder_forward.32} parent=15 // pred_fallthru
        _
      // Predicated region
      $region29: #{coep_encoder_forward.32} parent=15 // pred_check
        %p183 = pneg %p108
      $region30: #{coep_encoder_forward.32} parent=15 // pred_check_branch
        %185 = sbr.rel (%p183) target = $region32
      $region31: #{coep_encoder_forward.32} parent=15 // pred_region
        %p186 = scmp.lt.s32.totalorder %s10, 7
        %s187 = scalar_select %p186, %s10, 7
        %s188 = scalar_lea.vmem %s3, %s187
      $region32: #{coep_encoder_forward.32} parent=15 // pred_fallthru
        _
    $region16: #{coep_encoder_forward.32} parent=5 // pred_fallthru
      _
    %p189 = scmp.le.s32.totalorder 1, %s10
    %p190 = scmp.lt.s32.totalorder %s10, 9
    %p191 = pnand %p189, %p190
    %p192 = pneg %p191
    // Predicated region
    $region33: #{coep_encoder_forward.32} parent=5 // pred_check
      _
    $region34: #{coep_encoder_forward.32} parent=5 // pred_check_branch
      %194 = sbr.rel (%p191) target = $region36
    $region35: #{coep_encoder_forward.32} parent=5 // pred_region
      %s195 = ssub.s32 %s10, 1
      %p196 = scmp.lt.s32.totalorder %s15, 7
      %s197 = scalar_select %p196, %s15, 7
      %s198 = smul.addr %s197, 4
      %s199 = smul.addr %s198, 4
      %s200 = scalar_lea.vmem %s0, %s199
      %p201 = pneg %p36
      %p202 = pneg %p33
      %p203 = scmp.lt.s32.totalorder %s15, 7
      %s204 = scalar_select %p203, %s15, 7
      %s205 = smul.addr %s204, 4
      %s206 = smul.addr %s205, 4
      %s207 = scalar_lea.vmem %s1, %s206
      %p208 = pneg %p62
      %p209 = pneg %p59
      %p210 = scmp.lt.s32.totalorder %s15, 7
      %s211 = scalar_select %p210, %s15, 7
      %s212 = smul.addr %s211, 4
      %s213 = smul.addr %s212, 4
      %s214 = scalar_lea.vmem %s2, %s213
      %p215 = pneg %p88
      %p216 = pneg %p85
      %p217 = scmp.lt.s32.totalorder %s15, 7
      %s218 = scalar_select %p217, %s15, 7
      %s219 = scalar_lea.vmem %s3, %s218
      %p220 = pneg %p114
      %p221 = pneg %p111
      %p222 = pneg %p140
      %p223 = pneg %p137
      %p224 = scmp.lt.s32.totalorder %s15, 7
      %s225 = scalar_select %p224, %s15, 7
      %s226 = smul.addr %s225, 4
      %s227 = smul.addr %s226, 4
      %s228 = scalar_lea.vmem %s4, %s227
      %p229 = scmp.lt.s32.totalorder %s15, 7
      %s230 = scalar_select %p229, %s15, 7
      %s231 = smul.addr %s230, 4
      %s232 = smul.addr %s231, 4
      %s233 = scalar_lea.vmem %s0, %s232
      %p234 = scmp.lt.s32.totalorder %s15, 7
      %s235 = scalar_select %p234, %s15, 7
      %s236 = smul.addr %s235, 4
      %s237 = smul.addr %s236, 4
      %s238 = scalar_lea.vmem %s1, %s237
      %p239 = scmp.lt.s32.totalorder %s15, 7
      %s240 = scalar_select %p239, %s15, 7
      %s241 = smul.addr %s240, 4
      %s242 = smul.addr %s241, 4
      %s243 = scalar_lea.vmem %s2, %s242
      %p244 = scmp.lt.s32.totalorder %s15, 7
      %s245 = scalar_select %p244, %s15, 7
      %s246 = scalar_lea.vmem %s3, %s245
      %p247 = scmp.lt.s32.totalorder %s15, 7
      %s248 = scalar_select %p247, %s15, 7
      %s249 = smul.addr %s248, 4
      %s250 = smul.addr %s249, 4
      %s251 = scalar_lea.vmem %s4, %s250
      %v253 = vld [vmem:[%s233] sm:$0xf]
      %v254 = vld [vmem:[%s233 + $0x4] sm:$0xf]
      %v255 = vld [vmem:[%s233 + $0x8] sm:$0xf]
      %v256 = vld [vmem:[%s233 + $0xc] sm:$0xf]
      %v257 = vld [vmem:[%s238] sm:$0xf]
      %v258 = vld [vmem:[%s238 + $0x4] sm:$0xf]
      %v259 = vld [vmem:[%s238 + $0x8] sm:$0xf]
      %v260 = vld [vmem:[%s238 + $0xc] sm:$0xf]
      %v261 = vld [vmem:[%s243] sm:$0xf]
      %v262 = vld [vmem:[%s243 + $0x4] sm:$0xf]
      %v263 = vld [vmem:[%s243 + $0x8] sm:$0xf]
      %v264 = vld [vmem:[%s243 + $0xc] sm:$0xf]
      %v265 = vld [vmem:[%s246] sm:$0x1]
      %v267 = vlaneseq
      %v268 = vshrl.u32 %v267, 7
      %v269 = vsub.s32 0, %v268
      %v270 = vrot.slane %v265, %v269
      %vm272 = vcmask 64512
      %v274 = vsel %vm272, %v253, 0
      %v277 = vsel %vm272, %v257, 0
      %279 = vmatprep.subr.bf16.mxu0 0
      %280 = vmatpush1.bf16.xpose.msra.mxu0 %v277
      %281 = vmatprep.subr.bf16.mxu0 0
      %282 = vmatpush1.bf16.xpose.msra.mxu0 0
      %283 = vmatprep.subr.bf16.mxu0 0
      %284 = vmatpush1.bf16.xpose.msra.mxu0 0
      %285 = vmatprep.subr.bf16.mxu0 0
      %286 = vmatpush1.bf16.xpose.msra.mxu0 0
      %287 = vmatprep.subr.bf16.mxu0 0
      %288 = vmatpush1.bf16.xpose.msra.mxu0 0
      %289 = vmatprep.subr.bf16.mxu0 0
      %290 = vmatpush1.bf16.xpose.msra.mxu0 0
      %291 = vmatprep.subr.bf16.mxu0 0
      %292 = vmatpush1.bf16.xpose.msra.mxu0 0
      %293 = vmatprep.subr.bf16.mxu0 0
      %294 = vmatpush1.bf16.xpose.msra.mxu0 0
      %295 = vmatprep.subr.bf16.mxu0 0
      %296 = vmatpush1.bf16.xpose.msra.mxu0 0
      %297 = vmatprep.subr.bf16.mxu0 0
      %298 = vmatpush1.bf16.xpose.msra.mxu0 0
      %299 = vmatprep.subr.bf16.mxu0 0
      %300 = vmatpush1.bf16.xpose.msra.mxu0 0
      %301 = vmatprep.subr.bf16.mxu0 0
      %302 = vmatpush1.bf16.xpose.msra.mxu0 0
      %303 = vmatprep.subr.bf16.mxu0 0
      %304 = vmatpush1.bf16.xpose.msra.mxu0 0
      %305 = vmatprep.subr.bf16.mxu0 0
      %306 = vmatpush1.bf16.xpose.msra.mxu0 0
      %307 = vmatprep.subr.bf16.mxu0 0
      %308 = vmatpush1.bf16.xpose.msra.mxu0 0
      %309 = vmatprep.subr.bf16.mxu0 0
      %310 = vmatpush1.bf16.xpose.msra.mxu0 0
      %311 = vmatprep.mubr.bf16.mxu0 0
      %312 = vmatmul.mubr.bf16.gmra.mrb[0].mxu0 %v274
      %v313 = vpop.f32.mrb[0].mxu0
      %v314 = vadd.f32 %v270, %v313
      %v315 = vpop.f32.mrb[0].mxu0
      %v316 = vpop.f32.mrb[0].mxu0
      %v317 = vpop.f32.mrb[0].mxu0
      %318 = vdwg.mxu0
      %v320 = vsel %vm272, %v254, 0
      %v323 = vsel %vm272, %v258, 0
      %325 = vmatprep.subr.bf16.mxu0 0
      %326 = vmatpush1.bf16.xpose.msra.mxu0 %v323
      %327 = vmatprep.subr.bf16.mxu0 0
      %328 = vmatpush1.bf16.xpose.msra.mxu0 0
      %329 = vmatprep.subr.bf16.mxu0 0
      %330 = vmatpush1.bf16.xpose.msra.mxu0 0
      %331 = vmatprep.subr.bf16.mxu0 0
      %332 = vmatpush1.bf16.xpose.msra.mxu0 0
      %333 = vmatprep.subr.bf16.mxu0 0
      %334 = vmatpush1.bf16.xpose.msra.mxu0 0
      %335 = vmatprep.subr.bf16.mxu0 0
      %336 = vmatpush1.bf16.xpose.msra.mxu0 0
      %337 = vmatprep.subr.bf16.mxu0 0
      %338 = vmatpush1.bf16.xpose.msra.mxu0 0
      %339 = vmatprep.subr.bf16.mxu0 0
      %340 = vmatpush1.bf16.xpose.msra.mxu0 0
      %341 = vmatprep.subr.bf16.mxu0 0
      %342 = vmatpush1.bf16.xpose.msra.mxu0 0
      %343 = vmatprep.subr.bf16.mxu0 0
      %344 = vmatpush1.bf16.xpose.msra.mxu0 0
      %345 = vmatprep.subr.bf16.mxu0 0
      %346 = vmatpush1.bf16.xpose.msra.mxu0 0
      %347 = vmatprep.subr.bf16.mxu0 0
      %348 = vmatpush1.bf16.xpose.msra.mxu0 0
      %349 = vmatprep.subr.bf16.mxu0 0
      %350 = vmatpush1.bf16.xpose.msra.mxu0 0
      %351 = vmatprep.subr.bf16.mxu0 0
      %352 = vmatpush1.bf16.xpose.msra.mxu0 0
      %353 = vmatprep.subr.bf16.mxu0 0
      %354 = vmatpush1.bf16.xpose.msra.mxu0 0
      %355 = vmatprep.subr.bf16.mxu0 0
      %356 = vmatpush1.bf16.xpose.msra.mxu0 0
      %357 = vmatprep.mubr.bf16.mxu0 0
      %358 = vmatmul.mubr.bf16.gmra.mrb[0].mxu0 %v320
      %v359 = vpop.f32.mrb[0].mxu0
      %v360 = vadd.f32 %v270, %v359
      %v361 = vpop.f32.mrb[0].mxu0
      %v362 = vpop.f32.mrb[0].mxu0
      %v363 = vpop.f32.mrb[0].mxu0
      %364 = vdwg.mxu0
      %v366 = vsel %vm272, %v255, 0
      %v369 = vsel %vm272, %v259, 0
      %371 = vmatprep.subr.bf16.mxu0 0
      %372 = vmatpush1.bf16.xpose.msra.mxu0 %v369
      %373 = vmatprep.subr.bf16.mxu0 0
      %374 = vmatpush1.bf16.xpose.msra.mxu0 0
      %375 = vmatprep.subr.bf16.mxu0 0
      %376 = vmatpush1.bf16.xpose.msra.mxu0 0
      %377 = vmatprep.subr.bf16.mxu0 0
      %378 = vmatpush1.bf16.xpose.msra.mxu0 0
      %379 = vmatprep.subr.bf16.mxu0 0
      %380 = vmatpush1.bf16.xpose.msra.mxu0 0
      %381 = vmatprep.subr.bf16.mxu0 0
      %382 = vmatpush1.bf16.xpose.msra.mxu0 0
      %383 = vmatprep.subr.bf16.mxu0 0
      %384 = vmatpush1.bf16.xpose.msra.mxu0 0
      %385 = vmatprep.subr.bf16.mxu0 0
      %386 = vmatpush1.bf16.xpose.msra.mxu0 0
      %387 = vmatprep.subr.bf16.mxu0 0
      %388 = vmatpush1.bf16.xpose.msra.mxu0 0
      %389 = vmatprep.subr.bf16.mxu0 0
      %390 = vmatpush1.bf16.xpose.msra.mxu0 0
      %391 = vmatprep.subr.bf16.mxu0 0
      %392 = vmatpush1.bf16.xpose.msra.mxu0 0
      %393 = vmatprep.subr.bf16.mxu0 0
      %394 = vmatpush1.bf16.xpose.msra.mxu0 0
      %395 = vmatprep.subr.bf16.mxu0 0
      %396 = vmatpush1.bf16.xpose.msra.mxu0 0
      %397 = vmatprep.subr.bf16.mxu0 0
      %398 = vmatpush1.bf16.xpose.msra.mxu0 0
      %399 = vmatprep.subr.bf16.mxu0 0
      %400 = vmatpush1.bf16.xpose.msra.mxu0 0
      %401 = vmatprep.subr.bf16.mxu0 0
      %402 = vmatpush1.bf16.xpose.msra.mxu0 0
      %403 = vmatprep.mubr.bf16.mxu0 0
      %404 = vmatmul.mubr.bf16.gmra.mrb[0].mxu0 %v366
      %v405 = vpop.f32.mrb[0].mxu0
      %v406 = vadd.f32 %v270, %v405
      %v407 = vpop.f32.mrb[0].mxu0
      %v408 = vpop.f32.mrb[0].mxu0
      %v409 = vpop.f32.mrb[0].mxu0
      %410 = vdwg.mxu0
      %v412 = vsel %vm272, %v256, 0
      %v415 = vsel %vm272, %v260, 0
      %417 = vmatprep.subr.bf16.mxu0 0
      %418 = vmatpush1.bf16.xpose.msra.mxu0 %v415
      %419 = vmatprep.subr.bf16.mxu0 0
      %420 = vmatpush1.bf16.xpose.msra.mxu0 0
      %421 = vmatprep.subr.bf16.mxu0 0
      %422 = vmatpush1.bf16.xpose.msra.mxu0 0
      %423 = vmatprep.subr.bf16.mxu0 0
      %424 = vmatpush1.bf16.xpose.msra.mxu0 0
      %425 = vmatprep.subr.bf16.mxu0 0
      %426 = vmatpush1.bf16.xpose.msra.mxu0 0
      %427 = vmatprep.subr.bf16.mxu0 0
      %428 = vmatpush1.bf16.xpose.msra.mxu0 0
      %429 = vmatprep.subr.bf16.mxu0 0
      %430 = vmatpush1.bf16.xpose.msra.mxu0 0
      %431 = vmatprep.subr.bf16.mxu0 0
      %432 = vmatpush1.bf16.xpose.msra.mxu0 0
      %433 = vmatprep.subr.bf16.mxu0 0
      %434 = vmatpush1.bf16.xpose.msra.mxu0 0
      %435 = vmatprep.subr.bf16.mxu0 0
      %436 = vmatpush1.bf16.xpose.msra.mxu0 0
      %437 = vmatprep.subr.bf16.mxu0 0
      %438 = vmatpush1.bf16.xpose.msra.mxu0 0
      %439 = vmatprep.subr.bf16.mxu0 0
      %440 = vmatpush1.bf16.xpose.msra.mxu0 0
      %441 = vmatprep.subr.bf16.mxu0 0
      %442 = vmatpush1.bf16.xpose.msra.mxu0 0
      %443 = vmatprep.subr.bf16.mxu0 0
      %444 = vmatpush1.bf16.xpose.msra.mxu0 0
      %445 = vmatprep.subr.bf16.mxu0 0
      %446 = vmatpush1.bf16.xpose.msra.mxu0 0
      %447 = vmatprep.subr.bf16.mxu0 0
      %448 = vmatpush1.bf16.xpose.msra.mxu0 0
      %449 = vmatprep.mubr.bf16.mxu0 0
      %450 = vmatmul.mubr.bf16.gmra.mrb[0].mxu0 %v412
      %v451 = vpop.f32.mrb[0].mxu0
      %v452 = vadd.f32 %v270, %v451
      %v453 = vpop.f32.mrb[0].mxu0
      %v454 = vpop.f32.mrb[0].mxu0
      %v455 = vpop.f32.mrb[0].mxu0
      %456 = vdwg.mxu0
      %v457 = vsel %vm272, %v314, -inf
      %458 = vmax.xlane.f32.xlu0 %v457
      %v459 = vpop.xlane.xlu0 %458
      %v460 = vsel %vm272, %v360, -inf
      %461 = vmax.xlane.f32.xlu0 %v460
      %v462 = vpop.xlane.xlu0 %461
      %v463 = vsel %vm272, %v406, -inf
      %464 = vmax.xlane.f32.xlu0 %v463
      %v465 = vpop.xlane.xlu0 %464
      %v466 = vsel %vm272, %v452, -inf
      %467 = vmax.xlane.f32.xlu0 %v466
      %v468 = vpop.xlane.xlu0 %467
      %v469 = vsub.f32 %v314, %v459
      %v470 = vsub.f32 %v360, %v462
      %v471 = vsub.f32 %v406, %v465
      %v472 = vsub.f32 %v452, %v468
      %v473 = vmul.f32 %v469, 1.442695
      %v474 = vpow.pop %v473
      %v475 = vmul.f32 %v470, 1.442695
      %v476 = vpow.pop %v475
      %v477 = vmul.f32 %v471, 1.442695
      %v478 = vpow.pop %v477
      %v479 = vmul.f32 %v472, 1.442695
      %v480 = vpow.pop %v479
      %v481 = vsel %vm272, %v474, 0.0
      %482 = vadd.xlane.f32.xlu0 %v481
      %v483 = vpop.xlane.xlu0 %482
      %v484 = vsel %vm272, %v476, 0.0
      %485 = vadd.xlane.f32.xlu0 %v484
      %v486 = vpop.xlane.xlu0 %485
      %v487 = vsel %vm272, %v478, 0.0
      %488 = vadd.xlane.f32.xlu0 %v487
      %v489 = vpop.xlane.xlu0 %488
      %v490 = vsel %vm272, %v480, 0.0
      %491 = vadd.xlane.f32.xlu0 %v490
      %v492 = vpop.xlane.xlu0 %491
      %v493 = vrcp.pop %v483
      %v494 = vrcp.pop %v486
      %v495 = vrcp.pop %v489
      %v496 = vrcp.pop %v492
      %v497 = vmul.f32 %v474, %v493
      %v498 = vmul.f32 %v476, %v494
      %v499 = vmul.f32 %v478, %v495
      %v500 = vmul.f32 %v480, %v496
      %v501 = vpack.c.bf16 %v497, %v497
      %v502 = vpack.c.bf16 %v498, %v498
      %v503 = vpack.c.bf16 %v499, %v499
      %v504 = vpack.c.bf16 %v500, %v500
      %v506 = vsel %vm272, %v501, 0
      %vm508 = vcmask 1043456
      %v510 = vsel %vm508, %v261, 0
      %512 = vmatprep.subr.bf16.mxu0 0
      %513 = vmatpush1.bf16.msra.mxu0 %v510
      %514 = vmatprep.subr.bf16.mxu0 0
      %515 = vmatpush1.bf16.msra.mxu0 0
      %516 = vmatprep.subr.bf16.mxu0 0
      %517 = vmatpush1.bf16.msra.mxu0 0
      %518 = vmatprep.subr.bf16.mxu0 0
      %519 = vmatpush1.bf16.msra.mxu0 0
      %520 = vmatprep.subr.bf16.mxu0 0
      %521 = vmatpush1.bf16.msra.mxu0 0
      %522 = vmatprep.subr.bf16.mxu0 0
      %523 = vmatpush1.bf16.msra.mxu0 0
      %524 = vmatprep.subr.bf16.mxu0 0
      %525 = vmatpush1.bf16.msra.mxu0 0
      %526 = vmatprep.subr.bf16.mxu0 0
      %527 = vmatpush1.bf16.msra.mxu0 0
      %528 = vmatprep.subr.bf16.mxu0 0
      %529 = vmatpush1.bf16.msra.mxu0 0
      %530 = vmatprep.subr.bf16.mxu0 0
      %531 = vmatpush1.bf16.msra.mxu0 0
      %532 = vmatprep.subr.bf16.mxu0 0
      %533 = vmatpush1.bf16.msra.mxu0 0
      %534 = vmatprep.subr.bf16.mxu0 0
      %535 = vmatpush1.bf16.msra.mxu0 0
      %536 = vmatprep.subr.bf16.mxu0 0
      %537 = vmatpush1.bf16.msra.mxu0 0
      %538 = vmatprep.subr.bf16.mxu0 0
      %539 = vmatpush1.bf16.msra.mxu0 0
      %540 = vmatprep.subr.bf16.mxu0 0
      %541 = vmatpush1.bf16.msra.mxu0 0
      %542 = vmatprep.subr.bf16.mxu0 0
      %543 = vmatpush1.bf16.msra.mxu0 0
      %544 = vmatprep.mubr.bf16.mxu0 0
      %545 = vmatmul.mubr.bf16.gmra.mrb[0].mxu0 %v506
      %v546 = vpop.f32.mrb[0].mxu0
      %v547 = vadd.f32 0.0, %v546
      %v548 = vpop.f32.mrb[0].mxu0
      %v549 = vpop.f32.mrb[0].mxu0
      %v550 = vpop.f32.mrb[0].mxu0
      %551 = vdwg.mxu0
      %v553 = vsel %vm272, %v502, 0
      %v556 = vsel %vm508, %v262, 0
      %558 = vmatprep.subr.bf16.mxu0 0
      %559 = vmatpush1.bf16.msra.mxu0 %v556
      %560 = vmatprep.subr.bf16.mxu0 0
      %561 = vmatpush1.bf16.msra.mxu0 0
      %562 = vmatprep.subr.bf16.mxu0 0
      %563 = vmatpush1.bf16.msra.mxu0 0
      %564 = vmatprep.subr.bf16.mxu0 0
      %565 = vmatpush1.bf16.msra.mxu0 0
      %566 = vmatprep.subr.bf16.mxu0 0
      %567 = vmatpush1.bf16.msra.mxu0 0
      %568 = vmatprep.subr.bf16.mxu0 0
      %569 = vmatpush1.bf16.msra.mxu0 0
      %570 = vmatprep.subr.bf16.mxu0 0
      %571 = vmatpush1.bf16.msra.mxu0 0
      %572 = vmatprep.subr.bf16.mxu0 0
      %573 = vmatpush1.bf16.msra.mxu0 0
      %574 = vmatprep.subr.bf16.mxu0 0
      %575 = vmatpush1.bf16.msra.mxu0 0
      %576 = vmatprep.subr.bf16.mxu0 0
      %577 = vmatpush1.bf16.msra.mxu0 0
      %578 = vmatprep.subr.bf16.mxu0 0
      %579 = vmatpush1.bf16.msra.mxu0 0
      %580 = vmatprep.subr.bf16.mxu0 0
      %581 = vmatpush1.bf16.msra.mxu0 0
      %582 = vmatprep.subr.bf16.mxu0 0
      %583 = vmatpush1.bf16.msra.mxu0 0
      %584 = vmatprep.subr.bf16.mxu0 0
      %585 = vmatpush1.bf16.msra.mxu0 0
      %586 = vmatprep.subr.bf16.mxu0 0
      %587 = vmatpush1.bf16.msra.mxu0 0
      %588 = vmatprep.subr.bf16.mxu0 0
      %589 = vmatpush1.bf16.msra.mxu0 0
      %590 = vmatprep.mubr.bf16.mxu0 0
      %591 = vmatmul.mubr.bf16.gmra.mrb[0].mxu0 %v553
      %v592 = vpop.f32.mrb[0].mxu0
      %v593 = vadd.f32 0.0, %v592
      %v594 = vpop.f32.mrb[0].mxu0
      %v595 = vpop.f32.mrb[0].mxu0
      %v596 = vpop.f32.mrb[0].mxu0
      %597 = vdwg.mxu0
      %v599 = vsel %vm272, %v503, 0
      %v602 = vsel %vm508, %v263, 0
      %604 = vmatprep.subr.bf16.mxu0 0
      %605 = vmatpush1.bf16.msra.mxu0 %v602
      %606 = vmatprep.subr.bf16.mxu0 0
      %607 = vmatpush1.bf16.msra.mxu0 0
      %608 = vmatprep.subr.bf16.mxu0 0
      %609 = vmatpush1.bf16.msra.mxu0 0
      %610 = vmatprep.subr.bf16.mxu0 0
      %611 = vmatpush1.bf16.msra.mxu0 0
      %612 = vmatprep.subr.bf16.mxu0 0
      %613 = vmatpush1.bf16.msra.mxu0 0
      %614 = vmatprep.subr.bf16.mxu0 0
      %615 = vmatpush1.bf16.msra.mxu0 0
      %616 = vmatprep.subr.bf16.mxu0 0
      %617 = vmatpush1.bf16.msra.mxu0 0
      %618 = vmatprep.subr.bf16.mxu0 0
      %619 = vmatpush1.bf16.msra.mxu0 0
      %620 = vmatprep.subr.bf16.mxu0 0
      %621 = vmatpush1.bf16.msra.mxu0 0
      %622 = vmatprep.subr.bf16.mxu0 0
      %623 = vmatpush1.bf16.msra.mxu0 0
      %624 = vmatprep.subr.bf16.mxu0 0
      %625 = vmatpush1.bf16.msra.mxu0 0
      %626 = vmatprep.subr.bf16.mxu0 0
      %627 = vmatpush1.bf16.msra.mxu0 0
      %628 = vmatprep.subr.bf16.mxu0 0
      %629 = vmatpush1.bf16.msra.mxu0 0
      %630 = vmatprep.subr.bf16.mxu0 0
      %631 = vmatpush1.bf16.msra.mxu0 0
      %632 = vmatprep.subr.bf16.mxu0 0
      %633 = vmatpush1.bf16.msra.mxu0 0
      %634 = vmatprep.subr.bf16.mxu0 0
      %635 = vmatpush1.bf16.msra.mxu0 0
      %636 = vmatprep.mubr.bf16.mxu0 0
      %637 = vmatmul.mubr.bf16.gmra.mrb[0].mxu0 %v599
      %v638 = vpop.f32.mrb[0].mxu0
      %v639 = vadd.f32 0.0, %v638
      %v640 = vpop.f32.mrb[0].mxu0
      %v641 = vpop.f32.mrb[0].mxu0
      %v642 = vpop.f32.mrb[0].mxu0
      %643 = vdwg.mxu0
      %v645 = vsel %vm272, %v504, 0
      %v648 = vsel %vm508, %v264, 0
      %650 = vmatprep.subr.bf16.mxu0 0
      %651 = vmatpush1.bf16.msra.mxu0 %v648
      %652 = vmatprep.subr.bf16.mxu0 0
      %653 = vmatpush1.bf16.msra.mxu0 0
      %654 = vmatprep.subr.bf16.mxu0 0
      %655 = vmatpush1.bf16.msra.mxu0 0
      %656 = vmatprep.subr.bf16.mxu0 0
      %657 = vmatpush1.bf16.msra.mxu0 0
      %658 = vmatprep.subr.bf16.mxu0 0
      %659 = vmatpush1.bf16.msra.mxu0 0
      %660 = vmatprep.subr.bf16.mxu0 0
      %661 = vmatpush1.bf16.msra.mxu0 0
      %662 = vmatprep.subr.bf16.mxu0 0
      %663 = vmatpush1.bf16.msra.mxu0 0
      %664 = vmatprep.subr.bf16.mxu0 0
      %665 = vmatpush1.bf16.msra.mxu0 0
      %666 = vmatprep.subr.bf16.mxu0 0
      %667 = vmatpush1.bf16.msra.mxu0 0
      %668 = vmatprep.subr.bf16.mxu0 0
      %669 = vmatpush1.bf16.msra.mxu0 0
      %670 = vmatprep.subr.bf16.mxu0 0
      %671 = vmatpush1.bf16.msra.mxu0 0
      %672 = vmatprep.subr.bf16.mxu0 0
      %673 = vmatpush1.bf16.msra.mxu0 0
      %674 = vmatprep.subr.bf16.mxu0 0
      %675 = vmatpush1.bf16.msra.mxu0 0
      %676 = vmatprep.subr.bf16.mxu0 0
      %677 = vmatpush1.bf16.msra.mxu0 0
      %678 = vmatprep.subr.bf16.mxu0 0
      %679 = vmatpush1.bf16.msra.mxu0 0
      %680 = vmatprep.subr.bf16.mxu0 0
      %681 = vmatpush1.bf16.msra.mxu0 0
      %682 = vmatprep.mubr.bf16.mxu0 0
      %683 = vmatmul.mubr.bf16.gmra.mrb[0].mxu0 %v645
      %v684 = vpop.f32.mrb[0].mxu0
      %v685 = vadd.f32 0.0, %v684
      %v686 = vpop.f32.mrb[0].mxu0
      %v687 = vpop.f32.mrb[0].mxu0
      %v688 = vpop.f32.mrb[0].mxu0
      %689 = vdwg.mxu0
      %v690 = vpack.c.bf16 %v547, %v547
      %v691 = vpack.c.bf16 %v593, %v593
      %v692 = vpack.c.bf16 %v639, %v639
      %v693 = vpack.c.bf16 %v685, %v685
      %vm694 = vcmask 60416
      %695 = vst.msk [vmem:[%s251] sm:$0xf] %vm694, %v690
      %696 = vst.msk [vmem:[%s251 + $0x4] sm:$0xf] %vm694, %v691
      %697 = vst.msk [vmem:[%s251 + $0x8] sm:$0xf] %vm694, %v692
      %698 = vst.msk [vmem:[%s251 + $0xc] sm:$0xf] %vm694, %v693
      %p699 = scmp.lt.s32.totalorder %s15, 7
      %s700 = scalar_select %p699, %s15, 7
      %s701 = smul.addr %s700, 4
      %s702 = smul.addr %s701, 4
      %s703 = scalar_lea.vmem %s4, %s702
      // Predicated region
      $region37: #{coep_encoder_forward.32} parent=35 // pred_check
        %p704 = pneg %p137
      $region38: #{coep_encoder_forward.32} parent=35 // pred_check_branch
        %706 = sbr.rel (%p704) target = $region40
      $region39: #{coep_encoder_forward.32} parent=35 // pred_region
        _
      $region40: #{coep_encoder_forward.32} parent=35 // pred_fallthru
        _
    $region36: #{coep_encoder_forward.32} parent=5 // pred_fallthru
      _
    %p707 = scmp.le.s32.totalorder 2, %s10
    // Predicated region
    $region41: #{coep_encoder_forward.32} parent=5 // pred_check
      %p708 = pneg %p707
    $region42: #{coep_encoder_forward.32} parent=5 // pred_check_branch
      %710 = sbr.rel (%p708) target = $region44
    $region43: #{coep_encoder_forward.32} parent=5 // pred_region
      %s711 = ssub.s32 %s10, 2
      // Predicated region
      $region45: #{coep_encoder_forward.32} parent=43 // pred_check
        %p712 = pneg %p143
      $region46: #{coep_encoder_forward.32} parent=43 // pred_check_branch
        %714 = sbr.rel (%p712) target = $region48
      $region47: #{coep_encoder_forward.32} parent=43 // pred_region
        %p715 = scmp.lt.s32.totalorder %s16, 7
        %s716 = scalar_select %p715, %s16, 7
        %s717 = smul.addr %s716, 4
        %s718 = smul.addr %s717, 4
        %s719 = scalar_lea.vmem %s4, %s718
      $region48: #{coep_encoder_forward.32} parent=43 // pred_fallthru
        _
    $region44: #{coep_encoder_forward.32} parent=5 // pred_fallthru
      _
  $region6: #{coep_encoder_forward.32} parent=0 // loop_footer
    %s14 = sadd.s32 1, %s10
  $region7: #{coep_encoder_forward.32} parent=0 // loop_footer_branch
    %9 = sbr.rel target = $region3
  $region8: #{coep_encoder_forward.32} parent=0 // loop_exit
    _

// kernel: coep_encoder_forward.33
$region0: #{coep_encoder_forward.33}
  #allocation0 [shape = 'u32[]', space=smem, size = 0x4, offset = 0x4, fixed_abs, tag = 'smem constant byte address 0x4 - core index']
  #allocation1 [shape = 'u32[144,128]{1,0:T(1,128)}', space=vmem, size = 0x12000, scoped, tag = 'internal scratch']
  %s0 = inlined_call_operand.vmem [shape: bf16[64,32], index: 0, kind: input, shape index: {}]
  %s1 = inlined_call_operand.vmem [shape: bf16[32,32], index: 1, kind: input, shape index: {}]
  %s2 = inlined_call_operand.vmem [shape: f32[1,32], index: 2, kind: input, shape index: {}]
  %s3 = inlined_call_operand.vmem [shape: bf16[64,32], index: 3, kind: output, shape index: {}]
  %s4 = sld [smem:[#allocation0]]
  $region22: #{coep_encoder_forward.33} parent=0
    _
  %s6 = ssub.s32 1, %s4
  %s7 = scalar_select 0, %s6, %s4
  // Predicated region
  $region2: #{coep_encoder_forward.33} parent=0 // pred_check
    _
  $region3: #{coep_encoder_forward.33} parent=0 // pred_check_branch
    %9 = sbr.rel (0) target = $region5
  $region4: #{coep_encoder_forward.33} parent=0 // pred_region
    _
  $region5: #{coep_encoder_forward.33} parent=0 // pred_fallthru
    _
  // Predicated region
  $region6: #{coep_encoder_forward.33} parent=0 // pred_check
    _
  $region7: #{coep_encoder_forward.33} parent=0 // pred_check_branch
    %11 = sbr.rel (0) target = $region9
  $region8: #{coep_encoder_forward.33} parent=0 // pred_region
    _
  $region9: #{coep_encoder_forward.33} parent=0 // pred_fallthru
    _
  // Predicated region
  $region10: #{coep_encoder_forward.33} parent=0 // pred_check
    _
  $region11: #{coep_encoder_forward.33} parent=0 // pred_check_branch
    %13 = sbr.rel (0) target = $region13
  $region12: #{coep_encoder_forward.33} parent=0 // pred_region
    _
  $region13: #{coep_encoder_forward.33} parent=0 // pred_fallthru
    _
  %v15 = vld [vmem:[%s0] sm:$0xf]
  %v16 = vld [vmem:[%s0 + $0x4] sm:$0xf]
  %v17 = vld [vmem:[%s0 + $0x8] sm:$0xf]
  %v18 = vld [vmem:[%s0 + $0xc] sm:$0xf]
  %v19 = vld [vmem:[%s0 + $0x10] sm:$0xf]
  %v20 = vld [vmem:[%s0 + $0x14] sm:$0xf]
  %v21 = vld [vmem:[%s0 + $0x18] sm:$0xf]
  %v22 = vld [vmem:[%s0 + $0x1c] sm:$0xf]
  %v23 = vld [vmem:[%s1] sm:$0xf]
  %v24 = vld [vmem:[%s1 + $0x4] sm:$0xf]
  %v25 = vld [vmem:[%s1 + $0x8] sm:$0xf]
  %v26 = vld [vmem:[%s1 + $0xc] sm:$0xf]
  %v27 = vld [vmem:[%s2] sm:$0x1]
  %v29 = vlaneseq
  %v30 = vshrl.u32 %v29, 7
  %v31 = vsub.s32 0, %v30
  %v32 = vrot.slane %v27, %v31
  %v42 = vunpack.c.l.b16 %v15
  %v43 = vunpack.c.l.b16 %v16
  %v44 = vunpack.c.l.b16 %v17
  %v45 = vunpack.c.l.b16 %v18
  %v46 = vunpack.c.l.b16 %v19
  %v47 = vunpack.c.l.b16 %v20
  %v48 = vunpack.c.l.b16 %v21
  %v49 = vunpack.c.l.b16 %v22
  %v50 = vpack.c.b16 %v43, %v42
  %v51 = vpack.c.b16 %v45, %v44
  %v52 = vpack.c.b16 %v47, %v46
  %v53 = vpack.c.b16 %v49, %v48
  %v58 = vunpack.c.l.b16 %v23
  %v59 = vunpack.c.l.b16 %v24
  %v60 = vunpack.c.l.b16 %v25
  %v61 = vunpack.c.l.b16 %v26
  %v62 = vpack.c.b16 %v59, %v58
  %v63 = vpack.c.b16 %v61, %v60
  %vm66 = vcmask 261120
  %v68 = vsel %vm66, %v50, 0
  %v71 = vsel %vm66, %v51, 0
  %v74 = vsel %vm66, %v52, 0
  %v77 = vsel %vm66, %v53, 0
  %79 = vmatprep.subr.bf16.mxu0 0
  %80 = vmatpush1.bf16.msra.mxu0 %v62
  %81 = vmatprep.subr.bf16.mxu0 0
  %82 = vmatpush1.bf16.msra.mxu0 %v63
  %83 = vmatprep.subr.bf16.mxu0 0
  %84 = vmatpush1.bf16.msra.mxu0 0
  %85 = vmatprep.subr.bf16.mxu0 0
  %86 = vmatpush1.bf16.msra.mxu0 0
  %87 = vmatprep.subr.bf16.mxu0 0
  %88 = vmatpush1.bf16.msra.mxu0 0
  %89 = vmatprep.subr.bf16.mxu0 0
  %90 = vmatpush1.bf16.msra.mxu0 0
  %91 = vmatprep.subr.bf16.mxu0 0
  %92 = vmatpush1.bf16.msra.mxu0 0
  %93 = vmatprep.subr.bf16.mxu0 0
  %94 = vmatpush1.bf16.msra.mxu0 0
  %95 = vmatprep.subr.bf16.mxu0 0
  %96 = vmatpush1.bf16.msra.mxu0 0
  %97 = vmatprep.subr.bf16.mxu0 0
  %98 = vmatpush1.bf16.msra.mxu0 0
  %99 = vmatprep.subr.bf16.mxu0 0
  %100 = vmatpush1.bf16.msra.mxu0 0
  %101 = vmatprep.subr.bf16.mxu0 0
  %102 = vmatpush1.bf16.msra.mxu0 0
  %103 = vmatprep.subr.bf16.mxu0 0
  %104 = vmatpush1.bf16.msra.mxu0 0
  %105 = vmatprep.subr.bf16.mxu0 0
  %106 = vmatpush1.bf16.msra.mxu0 0
  %107 = vmatprep.subr.bf16.mxu0 0
  %108 = vmatpush1.bf16.msra.mxu0 0
  %109 = vmatprep.subr.bf16.mxu0 0
  %110 = vmatpush1.bf16.msra.mxu0 0
  %111 = vmatprep.mubr.bf16.mxu0 0
  %112 = vmatmul.mubr.bf16.gmra.mrb[0].mxu0 %v68
  %v113 = vpop.f32.mrb[0].mxu0
  %v114 = vadd.f32 %v32, %v113
  %v115 = vpop.f32.mrb[0].mxu0
  %v116 = vpop.f32.mrb[0].mxu0
  %v117 = vadd.f32 %v32, %v116
  %v118 = vpop.f32.mrb[0].mxu0
  %119 = vmatprep.mubr.bf16.mxu0 0
  %120 = vmatmul.mubr.bf16.gmra.mrb[0].mxu0 %v71
  %v121 = vpop.f32.mrb[0].mxu0
  %v122 = vadd.f32 %v32, %v121
  %v123 = vpop.f32.mrb[0].mxu0
  %v124 = vpop.f32.mrb[0].mxu0
  %v125 = vadd.f32 %v32, %v124
  %v126 = vpop.f32.mrb[0].mxu0
  %127 = vmatprep.mubr.bf16.mxu0 0
  %128 = vmatmul.mubr.bf16.gmra.mrb[0].mxu0 %v74
  %v129 = vpop.f32.mrb[0].mxu0
  %v130 = vadd.f32 %v32, %v129
  %v131 = vpop.f32.mrb[0].mxu0
  %v132 = vpop.f32.mrb[0].mxu0
  %v133 = vadd.f32 %v32, %v132
  %v134 = vpop.f32.mrb[0].mxu0
  %135 = vmatprep.mubr.bf16.mxu0 0
  %136 = vmatmul.mubr.bf16.gmra.mrb[0].mxu0 %v77
  %v137 = vpop.f32.mrb[0].mxu0
  %v138 = vadd.f32 %v32, %v137
  %v139 = vpop.f32.mrb[0].mxu0
  %v140 = vpop.f32.mrb[0].mxu0
  %v141 = vadd.f32 %v32, %v140
  %v142 = vpop.f32.mrb[0].mxu0
  %143 = vdwg.mxu0
  %v144 = vpack.c.bf16 %v117, %v114
  %v145 = vpack.c.bf16 %v125, %v122
  %v146 = vpack.c.bf16 %v133, %v130
  %v147 = vpack.c.bf16 %v141, %v138
  %v152 = vunpack.c.l.b16 %v144
  %v153 = vunpack.c.h.b16 %v144
  %v154 = vunpack.c.l.b16 %v145
  %v155 = vunpack.c.h.b16 %v145
  %v156 = vunpack.c.l.b16 %v146
  %v157 = vunpack.c.h.b16 %v146
  %v158 = vunpack.c.l.b16 %v147
  %v159 = vunpack.c.h.b16 %v147
  %v160 = vpack.c.b16 %v152, %v152
  %v161 = vpack.c.b16 %v153, %v153
  %v162 = vpack.c.b16 %v154, %v154
  %v163 = vpack.c.b16 %v155, %v155
  %v164 = vpack.c.b16 %v156, %v156
  %v165 = vpack.c.b16 %v157, %v157
  %v166 = vpack.c.b16 %v158, %v158
  %v167 = vpack.c.b16 %v159, %v159
  %vm176 = vcmask 257024
  %177 = vst.msk [vmem:[%s3] sm:$0xf] %vm176, %v160
  %178 = vst.msk [vmem:[%s3 + $0x4] sm:$0xf] %vm176, %v161
  %179 = vst.msk [vmem:[%s3 + $0x8] sm:$0xf] %vm176, %v162
  %180 = vst.msk [vmem:[%s3 + $0xc] sm:$0xf] %vm176, %v163
  %181 = vst.msk [vmem:[%s3 + $0x10] sm:$0xf] %vm176, %v164
  %182 = vst.msk [vmem:[%s3 + $0x14] sm:$0xf] %vm176, %v165
  %183 = vst.msk [vmem:[%s3 + $0x18] sm:$0xf] %vm176, %v166
  %184 = vst.msk [vmem:[%s3 + $0x1c] sm:$0xf] %vm176, %v167
  // Predicated region
  $region14: #{coep_encoder_forward.33} parent=0 // pred_check
    _
  $region15: #{coep_encoder_forward.33} parent=0 // pred_check_branch
    %186 = sbr.rel (0) target = $region17
  $region16: #{coep_encoder_forward.33} parent=0 // pred_region
    _
  $region17: #{coep_encoder_forward.33} parent=0 // pred_fallthru
    _
  // Predicated region
  $region18: #{coep_encoder_forward.33} parent=0 // pred_check
    _
  $region19: #{coep_encoder_forward.33} parent=0 // pred_check_branch
    %188 = sbr.rel (0) target = $region21
  $region20: #{coep_encoder_forward.33} parent=0 // pred_region
    _
  $region21: #{coep_encoder_forward.33} parent=0 // pred_fallthru
    _

// kernel: coep_encoder_forward.35
$region0: #{coep_encoder_forward.35}
  #allocation0 [shape = 'u32[]', space=smem, size = 0x4, offset = 0x4, fixed_abs, tag = 'smem constant byte address 0x4 - core index']
  #allocation1 [shape = 'u32[144,128]{1,0:T(1,128)}', space=vmem, size = 0x12000, scoped, tag = 'internal scratch']
  %s0 = inlined_call_operand.vmem [shape: bf16[64,32], index: 0, kind: input, shape index: {}]
  %s1 = inlined_call_operand.vmem [shape: bf16[32,64], index: 1, kind: input, shape index: {}]
  %s2 = inlined_call_operand.vmem [shape: f32[1,64], index: 2, kind: input, shape index: {}]
  %s3 = inlined_call_operand.vmem [shape: bf16[64,64], index: 3, kind: output, shape index: {}]
  %s4 = sld [smem:[#allocation0]]
  $region22: #{coep_encoder_forward.35} parent=0
    _
  %s6 = ssub.s32 1, %s4
  %s7 = scalar_select 0, %s6, %s4
  // Predicated region
  $region2: #{coep_encoder_forward.35} parent=0 // pred_check
    _
  $region3: #{coep_encoder_forward.35} parent=0 // pred_check_branch
    %9 = sbr.rel (0) target = $region5
  $region4: #{coep_encoder_forward.35} parent=0 // pred_region
    _
  $region5: #{coep_encoder_forward.35} parent=0 // pred_fallthru
    _
  // Predicated region
  $region6: #{coep_encoder_forward.35} parent=0 // pred_check
    _
  $region7: #{coep_encoder_forward.35} parent=0 // pred_check_branch
    %11 = sbr.rel (0) target = $region9
  $region8: #{coep_encoder_forward.35} parent=0 // pred_region
    _
  $region9: #{coep_encoder_forward.35} parent=0 // pred_fallthru
    _
  // Predicated region
  $region10: #{coep_encoder_forward.35} parent=0 // pred_check
    _
  $region11: #{coep_encoder_forward.35} parent=0 // pred_check_branch
    %13 = sbr.rel (0) target = $region13
  $region12: #{coep_encoder_forward.35} parent=0 // pred_region
    _
  $region13: #{coep_encoder_forward.35} parent=0 // pred_fallthru
    _
  %v15 = vld [vmem:[%s0] sm:$0xf]
  %v16 = vld [vmem:[%s0 + $0x4] sm:$0xf]
  %v17 = vld [vmem:[%s0 + $0x8] sm:$0xf]
  %v18 = vld [vmem:[%s0 + $0xc] sm:$0xf]
  %v19 = vld [vmem:[%s0 + $0x10] sm:$0xf]
  %v20 = vld [vmem:[%s0 + $0x14] sm:$0xf]
  %v21 = vld [vmem:[%s0 + $0x18] sm:$0xf]
  %v22 = vld [vmem:[%s0 + $0x1c] sm:$0xf]
  %v23 = vld [vmem:[%s1] sm:$0xf]
  %v24 = vld [vmem:[%s1 + $0x4] sm:$0xf]
  %v25 = vld [vmem:[%s1 + $0x8] sm:$0xf]
  %v26 = vld [vmem:[%s1 + $0xc] sm:$0xf]
  %v27 = vld [vmem:[%s2] sm:$0x1]
  %v29 = vlaneseq
  %v30 = vshrl.u32 %v29, 7
  %v31 = vsub.s32 0, %v30
  %v32 = vrot.slane %v27, %v31
  %v42 = vunpack.c.l.b16 %v15
  %v43 = vunpack.c.l.b16 %v16
  %v44 = vunpack.c.l.b16 %v17
  %v45 = vunpack.c.l.b16 %v18
  %v46 = vunpack.c.l.b16 %v19
  %v47 = vunpack.c.l.b16 %v20
  %v48 = vunpack.c.l.b16 %v21
  %v49 = vunpack.c.l.b16 %v22
  %v50 = vpack.c.b16 %v43, %v42
  %v51 = vpack.c.b16 %v45, %v44
  %v52 = vpack.c.b16 %v47, %v46
  %v53 = vpack.c.b16 %v49, %v48
  %v58 = vunpack.c.l.b16 %v23
  %v59 = vunpack.c.l.b16 %v24
  %v60 = vunpack.c.l.b16 %v25
  %v61 = vunpack.c.l.b16 %v26
  %v62 = vpack.c.b16 %v59, %v58
  %v63 = vpack.c.b16 %v61, %v60
  %vm66 = vcmask 261120
  %v68 = vsel %vm66, %v50, 0
  %v71 = vsel %vm66, %v51, 0
  %v74 = vsel %vm66, %v52, 0
  %v77 = vsel %vm66, %v53, 0
  %79 = vmatprep.subr.bf16.mxu0 0
  %80 = vmatpush1.bf16.msra.mxu0 %v62
  %81 = vmatprep.subr.bf16.mxu0 0
  %82 = vmatpush1.bf16.msra.mxu0 %v63
  %83 = vmatprep.subr.bf16.mxu0 0
  %84 = vmatpush1.bf16.msra.mxu0 0
  %85 = vmatprep.subr.bf16.mxu0 0
  %86 = vmatpush1.bf16.msra.mxu0 0
  %87 = vmatprep.subr.bf16.mxu0 0
  %88 = vmatpush1.bf16.msra.mxu0 0
  %89 = vmatprep.subr.bf16.mxu0 0
  %90 = vmatpush1.bf16.msra.mxu0 0
  %91 = vmatprep.subr.bf16.mxu0 0
  %92 = vmatpush1.bf16.msra.mxu0 0
  %93 = vmatprep.subr.bf16.mxu0 0
  %94 = vmatpush1.bf16.msra.mxu0 0
  %95 = vmatprep.subr.bf16.mxu0 0
  %96 = vmatpush1.bf16.msra.mxu0 0
  %97 = vmatprep.subr.bf16.mxu0 0
  %98 = vmatpush1.bf16.msra.mxu0 0
  %99 = vmatprep.subr.bf16.mxu0 0
  %100 = vmatpush1.bf16.msra.mxu0 0
  %101 = vmatprep.subr.bf16.mxu0 0
  %102 = vmatpush1.bf16.msra.mxu0 0
  %103 = vmatprep.subr.bf16.mxu0 0
  %104 = vmatpush1.bf16.msra.mxu0 0
  %105 = vmatprep.subr.bf16.mxu0 0
  %106 = vmatpush1.bf16.msra.mxu0 0
  %107 = vmatprep.subr.bf16.mxu0 0
  %108 = vmatpush1.bf16.msra.mxu0 0
  %109 = vmatprep.subr.bf16.mxu0 0
  %110 = vmatpush1.bf16.msra.mxu0 0
  %111 = vmatprep.mubr.bf16.mxu0 0
  %112 = vmatmul.mubr.bf16.gmra.mrb[0].mxu0 %v68
  %v113 = vpop.f32.mrb[0].mxu0
  %v114 = vadd.f32 %v32, %v113
  %v115 = vpop.f32.mrb[0].mxu0
  %v116 = vpop.f32.mrb[0].mxu0
  %v117 = vadd.f32 %v32, %v116
  %v118 = vpop.f32.mrb[0].mxu0
  %119 = vmatprep.mubr.bf16.mxu0 0
  %120 = vmatmul.mubr.bf16.gmra.mrb[0].mxu0 %v71
  %v121 = vpop.f32.mrb[0].mxu0
  %v122 = vadd.f32 %v32, %v121
  %v123 = vpop.f32.mrb[0].mxu0
  %v124 = vpop.f32.mrb[0].mxu0
  %v125 = vadd.f32 %v32, %v124
  %v126 = vpop.f32.mrb[0].mxu0
  %127 = vmatprep.mubr.bf16.mxu0 0
  %128 = vmatmul.mubr.bf16.gmra.mrb[0].mxu0 %v74
  %v129 = vpop.f32.mrb[0].mxu0
  %v130 = vadd.f32 %v32, %v129
  %v131 = vpop.f32.mrb[0].mxu0
  %v132 = vpop.f32.mrb[0].mxu0
  %v133 = vadd.f32 %v32, %v132
  %v134 = vpop.f32.mrb[0].mxu0
  %135 = vmatprep.mubr.bf16.mxu0 0
  %136 = vmatmul.mubr.bf16.gmra.mrb[0].mxu0 %v77
  %v137 = vpop.f32.mrb[0].mxu0
  %v138 = vadd.f32 %v32, %v137
  %v139 = vpop.f32.mrb[0].mxu0
  %v140 = vpop.f32.mrb[0].mxu0
  %v141 = vadd.f32 %v32, %v140
  %v142 = vpop.f32.mrb[0].mxu0
  %143 = vdwg.mxu0
  %v144 = vpack.c.bf16 %v117, %v114
  %v145 = vpack.c.bf16 %v125, %v122
  %v146 = vpack.c.bf16 %v133, %v130
  %v147 = vpack.c.bf16 %v141, %v138
  %v152 = vunpack.c.l.b16 %v144
  %v153 = vunpack.c.h.b16 %v144
  %v154 = vunpack.c.l.b16 %v145
  %v155 = vunpack.c.h.b16 %v145
  %v156 = vunpack.c.l.b16 %v146
  %v157 = vunpack.c.h.b16 %v146
  %v158 = vunpack.c.l.b16 %v147
  %v159 = vunpack.c.h.b16 %v147
  %v160 = vpack.c.b16 %v152, %v152
  %v161 = vpack.c.b16 %v153, %v153
  %v162 = vpack.c.b16 %v154, %v154
  %v163 = vpack.c.b16 %v155, %v155
  %v164 = vpack.c.b16 %v156, %v156
  %v165 = vpack.c.b16 %v157, %v157
  %v166 = vpack.c.b16 %v158, %v158
  %v167 = vpack.c.b16 %v159, %v159
  %vm176 = vcmask 519168
  %177 = vst.msk [vmem:[%s3] sm:$0xf] %vm176, %v160
  %178 = vst.msk [vmem:[%s3 + $0x4] sm:$0xf] %vm176, %v161
  %179 = vst.msk [vmem:[%s3 + $0x8] sm:$0xf] %vm176, %v162
  %180 = vst.msk [vmem:[%s3 + $0xc] sm:$0xf] %vm176, %v163
  %181 = vst.msk [vmem:[%s3 + $0x10] sm:$0xf] %vm176, %v164
  %182 = vst.msk [vmem:[%s3 + $0x14] sm:$0xf] %vm176, %v165
  %183 = vst.msk [vmem:[%s3 + $0x18] sm:$0xf] %vm176, %v166
  %184 = vst.msk [vmem:[%s3 + $0x1c] sm:$0xf] %vm176, %v167
  // Predicated region
  $region14: #{coep_encoder_forward.35} parent=0 // pred_check
    _
  $region15: #{coep_encoder_forward.35} parent=0 // pred_check_branch
    %186 = sbr.rel (0) target = $region17
  $region16: #{coep_encoder_forward.35} parent=0 // pred_region
    _
  $region17: #{coep_encoder_forward.35} parent=0 // pred_fallthru
    _
  // Predicated region
  $region18: #{coep_encoder_forward.35} parent=0 // pred_check
    _
  $region19: #{coep_encoder_forward.35} parent=0 // pred_check_branch
    %188 = sbr.rel (0) target = $region21
  $region20: #{coep_encoder_forward.35} parent=0 // pred_region
    _
  $region21: #{coep_encoder_forward.35} parent=0 // pred_fallthru
    _

// kernel: coep_encoder_forward.34
$region0: #{coep_encoder_forward.34}
  #allocation0 [shape = 'u32[]', space=smem, size = 0x4, offset = 0x4, fixed_abs, tag = 'smem constant byte address 0x4 - core index']
  #allocation1 [shape = 'u32[144,128]{1,0:T(1,128)}', space=vmem, size = 0x12000, scoped, tag = 'internal scratch']
  %s0 = inlined_call_operand.vmem [shape: bf16[64,32], index: 0, kind: input, shape index: {}]
  %s1 = inlined_call_operand.vmem [shape: bf16[64,32], index: 1, kind: input, shape index: {}]
  %s2 = inlined_call_operand.vmem [shape: f32[1,32], index: 2, kind: input, shape index: {}]
  %s3 = inlined_call_operand.vmem [shape: f32[1,32], index: 3, kind: input, shape index: {}]
  %s4 = inlined_call_operand.vmem [shape: bf16[64,32], index: 4, kind: output, shape index: {}]
  %s5 = sld [smem:[#allocation0]]
  $region26: #{coep_encoder_forward.34} parent=0
    _
  %s7 = ssub.s32 1, %s5
  %s8 = scalar_select 0, %s7, %s5
  // Predicated region
  $region2: #{coep_encoder_forward.34} parent=0 // pred_check
    _
  $region3: #{coep_encoder_forward.34} parent=0 // pred_check_branch
    %10 = sbr.rel (0) target = $region5
  $region4: #{coep_encoder_forward.34} parent=0 // pred_region
    _
  $region5: #{coep_encoder_forward.34} parent=0 // pred_fallthru
    _
  // Predicated region
  $region6: #{coep_encoder_forward.34} parent=0 // pred_check
    _
  $region7: #{coep_encoder_forward.34} parent=0 // pred_check_branch
    %12 = sbr.rel (0) target = $region9
  $region8: #{coep_encoder_forward.34} parent=0 // pred_region
    _
  $region9: #{coep_encoder_forward.34} parent=0 // pred_fallthru
    _
  // Predicated region
  $region10: #{coep_encoder_forward.34} parent=0 // pred_check
    _
  $region11: #{coep_encoder_forward.34} parent=0 // pred_check_branch
    %14 = sbr.rel (0) target = $region13
  $region12: #{coep_encoder_forward.34} parent=0 // pred_region
    _
  $region13: #{coep_encoder_forward.34} parent=0 // pred_fallthru
    _
  // Predicated region
  $region14: #{coep_encoder_forward.34} parent=0 // pred_check
    _
  $region15: #{coep_encoder_forward.34} parent=0 // pred_check_branch
    %16 = sbr.rel (0) target = $region17
  $region16: #{coep_encoder_forward.34} parent=0 // pred_region
    _
  $region17: #{coep_encoder_forward.34} parent=0 // pred_fallthru
    _
  %v17 = vld [vmem:[%s0] sm:$0xf]
  %v18 = vld [vmem:[%s0 + $0x4] sm:$0xf]
  %v19 = vld [vmem:[%s0 + $0x8] sm:$0xf]
  %v20 = vld [vmem:[%s0 + $0xc] sm:$0xf]
  %v21 = vld [vmem:[%s0 + $0x10] sm:$0xf]
  %v22 = vld [vmem:[%s0 + $0x14] sm:$0xf]
  %v23 = vld [vmem:[%s0 + $0x18] sm:$0xf]
  %v24 = vld [vmem:[%s0 + $0x1c] sm:$0xf]
  %v25 = vunpack.c.l.bf16 %v17
  %v26 = vunpack.c.l.bf16 %v18
  %v27 = vunpack.c.l.bf16 %v19
  %v28 = vunpack.c.l.bf16 %v20
  %v29 = vunpack.c.l.bf16 %v21
  %v30 = vunpack.c.l.bf16 %v22
  %v31 = vunpack.c.l.bf16 %v23
  %v32 = vunpack.c.l.bf16 %v24
  %v33 = vld [vmem:[%s1] sm:$0xf]
  %v34 = vld [vmem:[%s1 + $0x4] sm:$0xf]
  %v35 = vld [vmem:[%s1 + $0x8] sm:$0xf]
  %v36 = vld [vmem:[%s1 + $0xc] sm:$0xf]
  %v37 = vld [vmem:[%s1 + $0x10] sm:$0xf]
  %v38 = vld [vmem:[%s1 + $0x14] sm:$0xf]
  %v39 = vld [vmem:[%s1 + $0x18] sm:$0xf]
  %v40 = vld [vmem:[%s1 + $0x1c] sm:$0xf]
  %v41 = vunpack.c.l.bf16 %v33
  %v42 = vunpack.c.l.bf16 %v34
  %v43 = vunpack.c.l.bf16 %v35
  %v44 = vunpack.c.l.bf16 %v36
  %v45 = vunpack.c.l.bf16 %v37
  %v46 = vunpack.c.l.bf16 %v38
  %v47 = vunpack.c.l.bf16 %v39
  %v48 = vunpack.c.l.bf16 %v40
  %v49 = vadd.f32 %v25, %v41
  %v50 = vadd.f32 %v26, %v42
  %v51 = vadd.f32 %v27, %v43
  %v52 = vadd.f32 %v28, %v44
  %v53 = vadd.f32 %v29, %v45
  %v54 = vadd.f32 %v30, %v46
  %v55 = vadd.f32 %v31, %v47
  %v56 = vadd.f32 %v32, %v48
  %vm57 = vcmask 261120
  %v58 = vsel %vm57, %v49, 0.0
  %59 = vadd.xlane.f32.xlu0 %v58
  %v60 = vpop.xlane.xlu0 %59
  %v61 = vsel %vm57, %v50, 0.0
  %62 = vadd.xlane.f32.xlu0 %v61
  %v63 = vpop.xlane.xlu0 %62
  %v64 = vsel %vm57, %v51, 0.0
  %65 = vadd.xlane.f32.xlu0 %v64
  %v66 = vpop.xlane.xlu0 %65
  %v67 = vsel %vm57, %v52, 0.0
  %68 = vadd.xlane.f32.xlu0 %v67
  %v69 = vpop.xlane.xlu0 %68
  %v70 = vsel %vm57, %v53, 0.0
  %71 = vadd.xlane.f32.xlu0 %v70
  %v72 = vpop.xlane.xlu0 %71
  %v73 = vsel %vm57, %v54, 0.0
  %74 = vadd.xlane.f32.xlu0 %v73
  %v75 = vpop.xlane.xlu0 %74
  %v76 = vsel %vm57, %v55, 0.0
  %77 = vadd.xlane.f32.xlu0 %v76
  %v78 = vpop.xlane.xlu0 %77
  %v79 = vsel %vm57, %v56, 0.0
  %80 = vadd.xlane.f32.xlu0 %v79
  %v81 = vpop.xlane.xlu0 %80
  %v82 = vrcp.pop 32.0
  %v83 = vmul.f32 %v60, %v82
  %v84 = vmul.f32 %v63, %v82
  %v85 = vmul.f32 %v66, %v82
  %v86 = vmul.f32 %v69, %v82
  %v87 = vmul.f32 %v72, %v82
  %v88 = vmul.f32 %v75, %v82
  %v89 = vmul.f32 %v78, %v82
  %v90 = vmul.f32 %v81, %v82
  %v91 = vsub.f32 %v49, %v83
  %v92 = vsub.f32 %v50, %v84
  %v93 = vsub.f32 %v51, %v85
  %v94 = vsub.f32 %v52, %v86
  %v95 = vsub.f32 %v53, %v87
  %v96 = vsub.f32 %v54, %v88
  %v97 = vsub.f32 %v55, %v89
  %v98 = vsub.f32 %v56, %v90
  %v99 = vmul.f32 %v91, %v91
  %v100 = vmul.f32 %v92, %v92
  %v101 = vmul.f32 %v93, %v93
  %v102 = vmul.f32 %v94, %v94
  %v103 = vmul.f32 %v95, %v95
  %v104 = vmul.f32 %v96, %v96
  %v105 = vmul.f32 %v97, %v97
  %v106 = vmul.f32 %v98, %v98
  %v107 = vsel %vm57, %v99, 0.0
  %108 = vadd.xlane.f32.xlu0 %v107
  %v109 = vpop.xlane.xlu0 %108
  %v110 = vsel %vm57, %v100, 0.0
  %111 = vadd.xlane.f32.xlu0 %v110
  %v112 = vpop.xlane.xlu0 %111
  %v113 = vsel %vm57, %v101, 0.0
  %114 = vadd.xlane.f32.xlu0 %v113
  %v115 = vpop.xlane.xlu0 %114
  %v116 = vsel %vm57, %v102, 0.0
  %117 = vadd.xlane.f32.xlu0 %v116
  %v118 = vpop.xlane.xlu0 %117
  %v119 = vsel %vm57, %v103, 0.0
  %120 = vadd.xlane.f32.xlu0 %v119
  %v121 = vpop.xlane.xlu0 %120
  %v122 = vsel %vm57, %v104, 0.0
  %123 = vadd.xlane.f32.xlu0 %v122
  %v124 = vpop.xlane.xlu0 %123
  %v125 = vsel %vm57, %v105, 0.0
  %126 = vadd.xlane.f32.xlu0 %v125
  %v127 = vpop.xlane.xlu0 %126
  %v128 = vsel %vm57, %v106, 0.0
  %129 = vadd.xlane.f32.xlu0 %v128
  %v130 = vpop.xlane.xlu0 %129
  %v131 = vmul.f32 %v109, %v82
  %v132 = vmul.f32 %v112, %v82
  %v133 = vmul.f32 %v115, %v82
  %v134 = vmul.f32 %v118, %v82
  %v135 = vmul.f32 %v121, %v82
  %v136 = vmul.f32 %v124, %v82
  %v137 = vmul.f32 %v127, %v82
  %v138 = vmul.f32 %v130, %v82
  %v139 = vadd.f32 %v131, 1e-05
  %v140 = vadd.f32 %v132, 1e-05
  %v141 = vadd.f32 %v133, 1e-05
  %v142 = vadd.f32 %v134, 1e-05
  %v143 = vadd.f32 %v135, 1e-05
  %v144 = vadd.f32 %v136, 1e-05
  %v145 = vadd.f32 %v137, 1e-05
  %v146 = vadd.f32 %v138, 1e-05
  %v147 = vrsqrt.pop %v139
  %v148 = vrsqrt.pop %v140
  %v149 = vrsqrt.pop %v141
  %v150 = vrsqrt.pop %v142
  %v151 = vrsqrt.pop %v143
  %v152 = vrsqrt.pop %v144
  %v153 = vrsqrt.pop %v145
  %v154 = vrsqrt.pop %v146
  %v155 = vmul.f32 %v91, %v147
  %v156 = vmul.f32 %v92, %v148
  %v157 = vmul.f32 %v93, %v149
  %v158 = vmul.f32 %v94, %v150
  %v159 = vmul.f32 %v95, %v151
  %v160 = vmul.f32 %v96, %v152
  %v161 = vmul.f32 %v97, %v153
  %v162 = vmul.f32 %v98, %v154
  %v163 = vld [vmem:[%s2] sm:$0x1]
  %v165 = vlaneseq
  %v166 = vshrl.u32 %v165, 7
  %v167 = vsub.s32 0, %v166
  %v168 = vrot.slane %v163, %v167
  %v170 = vmul.f32 %v155, %v168
  %v171 = vmul.f32 %v156, %v168
  %v172 = vmul.f32 %v157, %v168
  %v173 = vmul.f32 %v158, %v168
  %v174 = vmul.f32 %v159, %v168
  %v175 = vmul.f32 %v160, %v168
  %v176 = vmul.f32 %v161, %v168
  %v177 = vmul.f32 %v162, %v168
  %v178 = vld [vmem:[%s3] sm:$0x1]
  %v180 = vlaneseq
  %v181 = vshrl.u32 %v180, 7
  %v182 = vsub.s32 0, %v181
  %v183 = vrot.slane %v178, %v182
  %v185 = vadd.f32 %v170, %v183
  %v186 = vadd.f32 %v171, %v183
  %v187 = vadd.f32 %v172, %v183
  %v188 = vadd.f32 %v173, %v183
  %v189 = vadd.f32 %v174, %v183
  %v190 = vadd.f32 %v175, %v183
  %v191 = vadd.f32 %v176, %v183
  %v192 = vadd.f32 %v177, %v183
  %v193 = vpack.c.bf16 %v186, %v185
  %v194 = vpack.c.bf16 %v188, %v187
  %v195 = vpack.c.bf16 %v190, %v189
  %v196 = vpack.c.bf16 %v192, %v191
  %v201 = vunpack.c.l.b16 %v193
  %v202 = vunpack.c.h.b16 %v193
  %v203 = vunpack.c.l.b16 %v194
  %v204 = vunpack.c.h.b16 %v194
  %v205 = vunpack.c.l.b16 %v195
  %v206 = vunpack.c.h.b16 %v195
  %v207 = vunpack.c.l.b16 %v196
  %v208 = vunpack.c.h.b16 %v196
  %v209 = vpack.c.b16 %v201, %v201
  %v210 = vpack.c.b16 %v202, %v202
  %v211 = vpack.c.b16 %v203, %v203
  %v212 = vpack.c.b16 %v204, %v204
  %v213 = vpack.c.b16 %v205, %v205
  %v214 = vpack.c.b16 %v206, %v206
  %v215 = vpack.c.b16 %v207, %v207
  %v216 = vpack.c.b16 %v208, %v208
  %vm225 = vcmask 257024
  %226 = vst.msk [vmem:[%s4] sm:$0xf] %vm225, %v209
  %227 = vst.msk [vmem:[%s4 + $0x4] sm:$0xf] %vm225, %v210
  %228 = vst.msk [vmem:[%s4 + $0x8] sm:$0xf] %vm225, %v211
  %229 = vst.msk [vmem:[%s4 + $0xc] sm:$0xf] %vm225, %v212
  %230 = vst.msk [vmem:[%s4 + $0x10] sm:$0xf] %vm225, %v213
  %231 = vst.msk [vmem:[%s4 + $0x14] sm:$0xf] %vm225, %v214
  %232 = vst.msk [vmem:[%s4 + $0x18] sm:$0xf] %vm225, %v215
  %233 = vst.msk [vmem:[%s4 + $0x1c] sm:$0xf] %vm225, %v216
  // Predicated region
  $region18: #{coep_encoder_forward.34} parent=0 // pred_check
    _
  $region19: #{coep_encoder_forward.34} parent=0 // pred_check_branch
    %235 = sbr.rel (0) target = $region21
  $region20: #{coep_encoder_forward.34} parent=0 // pred_region
    _
  $region21: #{coep_encoder_forward.34} parent=0 // pred_fallthru
    _
  // Predicated region
  $region22: #{coep_encoder_forward.34} parent=0 // pred_check
    _
  $region23: #{coep_encoder_forward.34} parent=0 // pred_check_branch
    %237 = sbr.rel (0) target = $region25
  $region24: #{coep_encoder_forward.34} parent=0 // pred_region
    _
  $region25: #{coep_encoder_forward.34} parent=0 // pred_fallthru
    _

// kernel: coep_encoder_forward.36
$region0: #{coep_encoder_forward.36}
  #allocation0 [shape = 'u32[]', space=smem, size = 0x4, offset = 0x4, fixed_abs, tag = 'smem constant byte address 0x4 - core index']
  #allocation1 [shape = 'u32[144,128]{1,0:T(1,128)}', space=vmem, size = 0x12000, scoped, tag = 'internal scratch']
  %s0 = inlined_call_operand.vmem [shape: bf16[64,64], index: 0, kind: input, shape index: {}]
  %s1 = inlined_call_operand.vmem [shape: bf16[64,32], index: 1, kind: input, shape index: {}]
  %s2 = inlined_call_operand.vmem [shape: f32[1,32], index: 2, kind: input, shape index: {}]
  %s3 = inlined_call_operand.vmem [shape: bf16[64,32], index: 3, kind: output, shape index: {}]
  %s4 = sld [smem:[#allocation0]]
  $region22: #{coep_encoder_forward.36} parent=0
    _
  %s6 = ssub.s32 1, %s4
  %s7 = scalar_select 0, %s6, %s4
  // Predicated region
  $region2: #{coep_encoder_forward.36} parent=0 // pred_check
    _
  $region3: #{coep_encoder_forward.36} parent=0 // pred_check_branch
    %9 = sbr.rel (0) target = $region5
  $region4: #{coep_encoder_forward.36} parent=0 // pred_region
    _
  $region5: #{coep_encoder_forward.36} parent=0 // pred_fallthru
    _
  // Predicated region
  $region6: #{coep_encoder_forward.36} parent=0 // pred_check
    _
  $region7: #{coep_encoder_forward.36} parent=0 // pred_check_branch
    %11 = sbr.rel (0) target = $region9
  $region8: #{coep_encoder_forward.36} parent=0 // pred_region
    _
  $region9: #{coep_encoder_forward.36} parent=0 // pred_fallthru
    _
  // Predicated region
  $region10: #{coep_encoder_forward.36} parent=0 // pred_check
    _
  $region11: #{coep_encoder_forward.36} parent=0 // pred_check_branch
    %13 = sbr.rel (0) target = $region13
  $region12: #{coep_encoder_forward.36} parent=0 // pred_region
    _
  $region13: #{coep_encoder_forward.36} parent=0 // pred_fallthru
    _
  %v15 = vld [vmem:[%s0] sm:$0xf]
  %v16 = vld [vmem:[%s0 + $0x4] sm:$0xf]
  %v17 = vld [vmem:[%s0 + $0x8] sm:$0xf]
  %v18 = vld [vmem:[%s0 + $0xc] sm:$0xf]
  %v19 = vld [vmem:[%s0 + $0x10] sm:$0xf]
  %v20 = vld [vmem:[%s0 + $0x14] sm:$0xf]
  %v21 = vld [vmem:[%s0 + $0x18] sm:$0xf]
  %v22 = vld [vmem:[%s0 + $0x1c] sm:$0xf]
  %v23 = vld [vmem:[%s1] sm:$0xf]
  %v24 = vld [vmem:[%s1 + $0x4] sm:$0xf]
  %v25 = vld [vmem:[%s1 + $0x8] sm:$0xf]
  %v26 = vld [vmem:[%s1 + $0xc] sm:$0xf]
  %v27 = vld [vmem:[%s1 + $0x10] sm:$0xf]
  %v28 = vld [vmem:[%s1 + $0x14] sm:$0xf]
  %v29 = vld [vmem:[%s1 + $0x18] sm:$0xf]
  %v30 = vld [vmem:[%s1 + $0x1c] sm:$0xf]
  %v31 = vld [vmem:[%s2] sm:$0x1]
  %v33 = vlaneseq
  %v34 = vshrl.u32 %v33, 7
  %v35 = vsub.s32 0, %v34
  %v36 = vrot.slane %v31, %v35
  %v46 = vunpack.c.l.b16 %v15
  %v47 = vunpack.c.l.b16 %v16
  %v48 = vunpack.c.l.b16 %v17
  %v49 = vunpack.c.l.b16 %v18
  %v50 = vunpack.c.l.b16 %v19
  %v51 = vunpack.c.l.b16 %v20
  %v52 = vunpack.c.l.b16 %v21
  %v53 = vunpack.c.l.b16 %v22
  %v54 = vpack.c.b16 %v47, %v46
  %v55 = vpack.c.b16 %v49, %v48
  %v56 = vpack.c.b16 %v51, %v50
  %v57 = vpack.c.b16 %v53, %v52
  %v66 = vunpack.c.l.b16 %v23
  %v67 = vunpack.c.l.b16 %v24
  %v68 = vunpack.c.l.b16 %v25
  %v69 = vunpack.c.l.b16 %v26
  %v70 = vunpack.c.l.b16 %v27
  %v71 = vunpack.c.l.b16 %v28
  %v72 = vunpack.c.l.b16 %v29
  %v73 = vunpack.c.l.b16 %v30
  %v74 = vpack.c.b16 %v67, %v66
  %v75 = vpack.c.b16 %v69, %v68
  %v76 = vpack.c.b16 %v71, %v70
  %v77 = vpack.c.b16 %v73, %v72
  %vm82 = vcmask 523264
  %v84 = vsel %vm82, %v54, 0
  %v87 = vsel %vm82, %v55, 0
  %v90 = vsel %vm82, %v56, 0
  %v93 = vsel %vm82, %v57, 0
  %95 = vmatprep.subr.bf16.mxu0 0
  %96 = vmatpush1.bf16.msra.mxu0 %v74
  %97 = vmatprep.subr.bf16.mxu0 0
  %98 = vmatpush1.bf16.msra.mxu0 %v75
  %99 = vmatprep.subr.bf16.mxu0 0
  %100 = vmatpush1.bf16.msra.mxu0 %v76
  %101 = vmatprep.subr.bf16.mxu0 0
  %102 = vmatpush1.bf16.msra.mxu0 %v77
  %103 = vmatprep.subr.bf16.mxu0 0
  %104 = vmatpush1.bf16.msra.mxu0 0
  %105 = vmatprep.subr.bf16.mxu0 0
  %106 = vmatpush1.bf16.msra.mxu0 0
  %107 = vmatprep.subr.bf16.mxu0 0
  %108 = vmatpush1.bf16.msra.mxu0 0
  %109 = vmatprep.subr.bf16.mxu0 0
  %110 = vmatpush1.bf16.msra.mxu0 0
  %111 = vmatprep.subr.bf16.mxu0 0
  %112 = vmatpush1.bf16.msra.mxu0 0
  %113 = vmatprep.subr.bf16.mxu0 0
  %114 = vmatpush1.bf16.msra.mxu0 0
  %115 = vmatprep.subr.bf16.mxu0 0
  %116 = vmatpush1.bf16.msra.mxu0 0
  %117 = vmatprep.subr.bf16.mxu0 0
  %118 = vmatpush1.bf16.msra.mxu0 0
  %119 = vmatprep.subr.bf16.mxu0 0
  %120 = vmatpush1.bf16.msra.mxu0 0
  %121 = vmatprep.subr.bf16.mxu0 0
  %122 = vmatpush1.bf16.msra.mxu0 0
  %123 = vmatprep.subr.bf16.mxu0 0
  %124 = vmatpush1.bf16.msra.mxu0 0
  %125 = vmatprep.subr.bf16.mxu0 0
  %126 = vmatpush1.bf16.msra.mxu0 0
  %127 = vmatprep.mubr.bf16.mxu0 0
  %128 = vmatmul.mubr.bf16.gmra.mrb[0].mxu0 %v84
  %v129 = vpop.f32.mrb[0].mxu0
  %v130 = vadd.f32 %v36, %v129
  %v131 = vpop.f32.mrb[0].mxu0
  %v132 = vpop.f32.mrb[0].mxu0
  %v133 = vadd.f32 %v36, %v132
  %v134 = vpop.f32.mrb[0].mxu0
  %135 = vmatprep.mubr.bf16.mxu0 0
  %136 = vmatmul.mubr.bf16.gmra.mrb[0].mxu0 %v87
  %v137 = vpop.f32.mrb[0].mxu0
  %v138 = vadd.f32 %v36, %v137
  %v139 = vpop.f32.mrb[0].mxu0
  %v140 = vpop.f32.mrb[0].mxu0
  %v141 = vadd.f32 %v36, %v140
  %v142 = vpop.f32.mrb[0].mxu0
  %143 = vmatprep.mubr.bf16.mxu0 0
  %144 = vmatmul.mubr.bf16.gmra.mrb[0].mxu0 %v90
  %v145 = vpop.f32.mrb[0].mxu0
  %v146 = vadd.f32 %v36, %v145
  %v147 = vpop.f32.mrb[0].mxu0
  %v148 = vpop.f32.mrb[0].mxu0
  %v149 = vadd.f32 %v36, %v148
  %v150 = vpop.f32.mrb[0].mxu0
  %151 = vmatprep.mubr.bf16.mxu0 0
  %152 = vmatmul.mubr.bf16.gmra.mrb[0].mxu0 %v93
  %v153 = vpop.f32.mrb[0].mxu0
  %v154 = vadd.f32 %v36, %v153
  %v155 = vpop.f32.mrb[0].mxu0
  %v156 = vpop.f32.mrb[0].mxu0
  %v157 = vadd.f32 %v36, %v156
  %v158 = vpop.f32.mrb[0].mxu0
  %159 = vdwg.mxu0
  %v160 = vpack.c.bf16 %v133, %v130
  %v161 = vpack.c.bf16 %v141, %v138
  %v162 = vpack.c.bf16 %v149, %v146
  %v163 = vpack.c.bf16 %v157, %v154
  %v168 = vunpack.c.l.b16 %v160
  %v169 = vunpack.c.h.b16 %v160
  %v170 = vunpack.c.l.b16 %v161
  %v171 = vunpack.c.h.b16 %v161
  %v172 = vunpack.c.l.b16 %v162
  %v173 = vunpack.c.h.b16 %v162
  %v174 = vunpack.c.l.b16 %v163
  %v175 = vunpack.c.h.b16 %v163
  %v176 = vpack.c.b16 %v168, %v168
  %v177 = vpack.c.b16 %v169, %v169
  %v178 = vpack.c.b16 %v170, %v170
  %v179 = vpack.c.b16 %v171, %v171
  %v180 = vpack.c.b16 %v172, %v172
  %v181 = vpack.c.b16 %v173, %v173
  %v182 = vpack.c.b16 %v174, %v174
  %v183 = vpack.c.b16 %v175, %v175
  %vm192 = vcmask 257024
  %193 = vst.msk [vmem:[%s3] sm:$0xf] %vm192, %v176
  %194 = vst.msk [vmem:[%s3 + $0x4] sm:$0xf] %vm192, %v177
  %195 = vst.msk [vmem:[%s3 + $0x8] sm:$0xf] %vm192, %v178
  %196 = vst.msk [vmem:[%s3 + $0xc] sm:$0xf] %vm192, %v179
  %197 = vst.msk [vmem:[%s3 + $0x10] sm:$0xf] %vm192, %v180
  %198 = vst.msk [vmem:[%s3 + $0x14] sm:$0xf] %vm192, %v181
  %199 = vst.msk [vmem:[%s3 + $0x18] sm:$0xf] %vm192, %v182
  %200 = vst.msk [vmem:[%s3 + $0x1c] sm:$0xf] %vm192, %v183
  // Predicated region
  $region14: #{coep_encoder_forward.36} parent=0 // pred_check
    _
  $region15: #{coep_encoder_forward.36} parent=0 // pred_check_branch
    %202 = sbr.rel (0) target = $region17
  $region16: #{coep_encoder_forward.36} parent=0 // pred_region
    _
  $region17: #{coep_encoder_forward.36} parent=0 // pred_fallthru
    _
  // Predicated region
  $region18: #{coep_encoder_forward.36} parent=0 // pred_check
    _
  $region19: #{coep_encoder_forward.36} parent=0 // pred_check_branch
    %204 = sbr.rel (0) target = $region21
  $region20: #{coep_encoder_forward.36} parent=0 // pred_region
    _
  $region21: #{coep_encoder_forward.36} parent=0 // pred_fallthru
    _

// kernel: coep_encoder_forward.45
$region0: #{coep_encoder_forward.45}
  #allocation0 [shape = 'u32[]', space=smem, size = 0x4, offset = 0x4, fixed_abs, tag = 'smem constant byte address 0x4 - core index']
  #allocation1 [shape = 'u32[144,128]{1,0:T(1,128)}', space=vmem, size = 0x12000, scoped, tag = 'internal scratch']
  %s0 = inlined_call_operand.vmem [shape: f32[16,32], index: 0, kind: input, shape index: {}]
  %s1 = inlined_call_operand.vmem [shape: f32[1,32], index: 1, kind: input, shape index: {}]
  %s2 = inlined_call_operand.vmem [shape: f32[1,32], index: 2, kind: input, shape index: {}]
  %s3 = inlined_call_operand.vmem [shape: bf16[16,32], index: 3, kind: output, shape index: {}]
  %s4 = sld [smem:[#allocation0]]
  $region22: #{coep_encoder_forward.45} parent=0
    _
  %s6 = ssub.s32 1, %s4
  %s7 = scalar_select 0, %s6, %s4
  // Predicated region
  $region2: #{coep_encoder_forward.45} parent=0 // pred_check
    _
  $region3: #{coep_encoder_forward.45} parent=0 // pred_check_branch
    %9 = sbr.rel (0) target = $region5
  $region4: #{coep_encoder_forward.45} parent=0 // pred_region
    _
  $region5: #{coep_encoder_forward.45} parent=0 // pred_fallthru
    _
  // Predicated region
  $region6: #{coep_encoder_forward.45} parent=0 // pred_check
    _
  $region7: #{coep_encoder_forward.45} parent=0 // pred_check_branch
    %11 = sbr.rel (0) target = $region9
  $region8: #{coep_encoder_forward.45} parent=0 // pred_region
    _
  $region9: #{coep_encoder_forward.45} parent=0 // pred_fallthru
    _
  // Predicated region
  $region10: #{coep_encoder_forward.45} parent=0 // pred_check
    _
  $region11: #{coep_encoder_forward.45} parent=0 // pred_check_branch
    %13 = sbr.rel (0) target = $region13
  $region12: #{coep_encoder_forward.45} parent=0 // pred_region
    _
  $region13: #{coep_encoder_forward.45} parent=0 // pred_fallthru
    _
  %v14 = vld [vmem:[%s0] sm:$0xff]
  %v15 = vld [vmem:[%s0 + $0x8] sm:$0xff]
  %vm16 = vcmask 261120
  %v17 = vsel %vm16, %v14, 0.0
  %18 = vadd.xlane.f32.xlu0 %v17
  %v19 = vpop.xlane.xlu0 %18
  %v20 = vsel %vm16, %v15, 0.0
  %21 = vadd.xlane.f32.xlu0 %v20
  %v22 = vpop.xlane.xlu0 %21
  %v23 = vrcp.pop 32.0
  %v24 = vmul.f32 %v19, %v23
  %v25 = vmul.f32 %v22, %v23
  %v26 = vsub.f32 %v14, %v24
  %v27 = vsub.f32 %v15, %v25
  %v28 = vmul.f32 %v26, %v26
  %v29 = vmul.f32 %v27, %v27
  %v30 = vsel %vm16, %v28, 0.0
  %31 = vadd.xlane.f32.xlu0 %v30
  %v32 = vpop.xlane.xlu0 %31
  %v33 = vsel %vm16, %v29, 0.0
  %34 = vadd.xlane.f32.xlu0 %v33
  %v35 = vpop.xlane.xlu0 %34
  %v36 = vmul.f32 %v32, %v23
  %v37 = vmul.f32 %v35, %v23
  %v38 = vadd.f32 %v36, 1e-05
  %v39 = vadd.f32 %v37, 1e-05
  %v40 = vrsqrt.pop %v38
  %v41 = vrsqrt.pop %v39
  %v42 = vmul.f32 %v26, %v40
  %v43 = vmul.f32 %v27, %v41
  %v44 = vld [vmem:[%s1] sm:$0x1]
  %v46 = vlaneseq
  %v47 = vshrl.u32 %v46, 7
  %v48 = vsub.s32 0, %v47
  %v49 = vrot.slane %v44, %v48
  %v51 = vmul.f32 %v42, %v49
  %v52 = vmul.f32 %v43, %v49
  %v53 = vld [vmem:[%s2] sm:$0x1]
  %v55 = vlaneseq
  %v56 = vshrl.u32 %v55, 7
  %v57 = vsub.s32 0, %v56
  %v58 = vrot.slane %v53, %v57
  %v60 = vadd.f32 %v51, %v58
  %v61 = vadd.f32 %v52, %v58
  %v62 = vpack.c.bf16 %v61, %v60
  %v64 = vunpack.c.l.b16 %v62
  %v65 = vunpack.c.h.b16 %v62
  %v66 = vpack.c.b16 %v64, %v64
  %v67 = vpack.c.b16 %v65, %v65
  %vm70 = vcmask 257024
  %71 = vst.msk [vmem:[%s3] sm:$0xf] %vm70, %v66
  %72 = vst.msk [vmem:[%s3 + $0x4] sm:$0xf] %vm70, %v67
  // Predicated region
  $region14: #{coep_encoder_forward.45} parent=0 // pred_check
    _
  $region15: #{coep_encoder_forward.45} parent=0 // pred_check_branch
    %74 = sbr.rel (0) target = $region17
  $region16: #{coep_encoder_forward.45} parent=0 // pred_region
    _
  $region17: #{coep_encoder_forward.45} parent=0 // pred_fallthru
    _
  // Predicated region
  $region18: #{coep_encoder_forward.45} parent=0 // pred_check
    _
  $region19: #{coep_encoder_forward.45} parent=0 // pred_check_branch
    %76 = sbr.rel (0) target = $region21
  $region20: #{coep_encoder_forward.45} parent=0 // pred_region
    _
  $region21: #{coep_encoder_forward.45} parent=0 // pred_fallthru
    _

// kernel: coep_encoder_forward.46
$region0: #{coep_encoder_forward.46}
  #allocation0 [shape = 'u32[]', space=smem, size = 0x4, offset = 0x4, fixed_abs, tag = 'smem constant byte address 0x4 - core index']
  #allocation1 [shape = 'u32[144,128]{1,0:T(1,128)}', space=vmem, size = 0x12000, scoped, tag = 'internal scratch']
  %s0 = inlined_call_operand.vmem [shape: bf16[16,32], index: 0, kind: input, shape index: {}]
  %s1 = inlined_call_operand.vmem [shape: bf16[32,96], index: 1, kind: input, shape index: {}]
  %s2 = inlined_call_operand.vmem [shape: f32[1,96], index: 2, kind: input, shape index: {}]
  %s3 = inlined_call_operand.vmem [shape: bf16[16,96], index: 3, kind: output, shape index: {}]
  %s4 = sld [smem:[#allocation0]]
  $region22: #{coep_encoder_forward.46} parent=0
    _
  %s6 = ssub.s32 1, %s4
  %s7 = scalar_select 0, %s6, %s4
  // Predicated region
  $region2: #{coep_encoder_forward.46} parent=0 // pred_check
    _
  $region3: #{coep_encoder_forward.46} parent=0 // pred_check_branch
    %9 = sbr.rel (0) target = $region5
  $region4: #{coep_encoder_forward.46} parent=0 // pred_region
    _
  $region5: #{coep_encoder_forward.46} parent=0 // pred_fallthru
    _
  // Predicated region
  $region6: #{coep_encoder_forward.46} parent=0 // pred_check
    _
  $region7: #{coep_encoder_forward.46} parent=0 // pred_check_branch
    %11 = sbr.rel (0) target = $region9
  $region8: #{coep_encoder_forward.46} parent=0 // pred_region
    _
  $region9: #{coep_encoder_forward.46} parent=0 // pred_fallthru
    _
  // Predicated region
  $region10: #{coep_encoder_forward.46} parent=0 // pred_check
    _
  $region11: #{coep_encoder_forward.46} parent=0 // pred_check_branch
    %13 = sbr.rel (0) target = $region13
  $region12: #{coep_encoder_forward.46} parent=0 // pred_region
    _
  $region13: #{coep_encoder_forward.46} parent=0 // pred_fallthru
    _
  %v15 = vld [vmem:[%s0] sm:$0xf]
  %v16 = vld [vmem:[%s0 + $0x4] sm:$0xf]
  %v17 = vld [vmem:[%s1] sm:$0xf]
  %v18 = vld [vmem:[%s1 + $0x4] sm:$0xf]
  %v19 = vld [vmem:[%s1 + $0x8] sm:$0xf]
  %v20 = vld [vmem:[%s1 + $0xc] sm:$0xf]
  %v21 = vld [vmem:[%s2] sm:$0x1]
  %v23 = vlaneseq
  %v24 = vshrl.u32 %v23, 7
  %v25 = vsub.s32 0, %v24
  %v26 = vrot.slane %v21, %v25
  %v30 = vunpack.c.l.b16 %v15
  %v31 = vunpack.c.l.b16 %v16
  %v32 = vpack.c.b16 %v31, %v30
  %v37 = vunpack.c.l.b16 %v17
  %v38 = vunpack.c.l.b16 %v18
  %v39 = vunpack.c.l.b16 %v19
  %v40 = vunpack.c.l.b16 %v20
  %v41 = vpack.c.b16 %v38, %v37
  %v42 = vpack.c.b16 %v40, %v39
  %vm45 = vcmask 261120
  %v47 = vsel %vm45, %v32, 0
  %49 = vmatprep.subr.bf16.mxu0 0
  %50 = vmatpush1.bf16.msra.mxu0 %v41
  %51 = vmatprep.subr.bf16.mxu0 0
  %52 = vmatpush1.bf16.msra.mxu0 %v42
  %53 = vmatprep.subr.bf16.mxu0 0
  %54 = vmatpush1.bf16.msra.mxu0 0
  %55 = vmatprep.subr.bf16.mxu0 0
  %56 = vmatpush1.bf16.msra.mxu0 0
  %57 = vmatprep.subr.bf16.mxu0 0
  %58 = vmatpush1.bf16.msra.mxu0 0
  %59 = vmatprep.subr.bf16.mxu0 0
  %60 = vmatpush1.bf16.msra.mxu0 0
  %61 = vmatprep.subr.bf16.mxu0 0
  %62 = vmatpush1.bf16.msra.mxu0 0
  %63 = vmatprep.subr.bf16.mxu0 0
  %64 = vmatpush1.bf16.msra.mxu0 0
  %65 = vmatprep.subr.bf16.mxu0 0
  %66 = vmatpush1.bf16.msra.mxu0 0
  %67 = vmatprep.subr.bf16.mxu0 0
  %68 = vmatpush1.bf16.msra.mxu0 0
  %69 = vmatprep.subr.bf16.mxu0 0
  %70 = vmatpush1.bf16.msra.mxu0 0
  %71 = vmatprep.subr.bf16.mxu0 0
  %72 = vmatpush1.bf16.msra.mxu0 0
  %73 = vmatprep.subr.bf16.mxu0 0
  %74 = vmatpush1.bf16.msra.mxu0 0
  %75 = vmatprep.subr.bf16.mxu0 0
  %76 = vmatpush1.bf16.msra.mxu0 0
  %77 = vmatprep.subr.bf16.mxu0 0
  %78 = vmatpush1.bf16.msra.mxu0 0
  %79 = vmatprep.subr.bf16.mxu0 0
  %80 = vmatpush1.bf16.msra.mxu0 0
  %81 = vmatprep.mubr.bf16.mxu0 0
  %82 = vmatmul.mubr.bf16.gmra.mrb[0].mxu0 %v47
  %v83 = vpop.f32.mrb[0].mxu0
  %v84 = vadd.f32 %v26, %v83
  %v85 = vpop.f32.mrb[0].mxu0
  %v86 = vpop.f32.mrb[0].mxu0
  %v87 = vadd.f32 %v26, %v86
  %v88 = vpop.f32.mrb[0].mxu0
  %89 = vdwg.mxu0
  %v90 = vpack.c.bf16 %v87, %v84
  %v92 = vunpack.c.l.b16 %v90
  %v93 = vunpack.c.h.b16 %v90
  %v94 = vpack.c.b16 %v92, %v92
  %v95 = vpack.c.b16 %v93, %v93
  %vm98 = vcmask 781312
  %99 = vst.msk [vmem:[%s3] sm:$0xf] %vm98, %v94
  %100 = vst.msk [vmem:[%s3 + $0x4] sm:$0xf] %vm98, %v95
  // Predicated region
  $region14: #{coep_encoder_forward.46} parent=0 // pred_check
    _
  $region15: #{coep_encoder_forward.46} parent=0 // pred_check_branch
    %102 = sbr.rel (0) target = $region17
  $region16: #{coep_encoder_forward.46} parent=0 // pred_region
    _
  $region17: #{coep_encoder_forward.46} parent=0 // pred_fallthru
    _
  // Predicated region
  $region18: #{coep_encoder_forward.46} parent=0 // pred_check
    _
  $region19: #{coep_encoder_forward.46} parent=0 // pred_check_branch
    %104 = sbr.rel (0) target = $region21
  $region20: #{coep_encoder_forward.46} parent=0 // pred_region
    _
  $region21: #{coep_encoder_forward.46} parent=0 // pred_fallthru
    _

// kernel: coep_encoder_forward.48
$region0: #{coep_encoder_forward.48}
  #allocation0 [shape = 'u32[]', space=smem, size = 0x4, offset = 0x4, fixed_abs, tag = 'smem constant byte address 0x4 - core index']
  #allocation1 [shape = 'u32[144,128]{1,0:T(1,128)}', space=vmem, size = 0x12000, scoped, tag = 'internal scratch']
  %s0 = inlined_call_operand.vmem [shape: bf16[16,32], index: 0, kind: input, shape index: {}]
  %s1 = inlined_call_operand.vmem [shape: bf16[32,32], index: 1, kind: input, shape index: {}]
  %s2 = inlined_call_operand.vmem [shape: f32[1,32], index: 2, kind: input, shape index: {}]
  %s3 = inlined_call_operand.vmem [shape: bf16[16,32], index: 3, kind: output, shape index: {}]
  %s4 = sld [smem:[#allocation0]]
  $region22: #{coep_encoder_forward.48} parent=0
    _
  %s6 = ssub.s32 1, %s4
  %s7 = scalar_select 0, %s6, %s4
  // Predicated region
  $region2: #{coep_encoder_forward.48} parent=0 // pred_check
    _
  $region3: #{coep_encoder_forward.48} parent=0 // pred_check_branch
    %9 = sbr.rel (0) target = $region5
  $region4: #{coep_encoder_forward.48} parent=0 // pred_region
    _
  $region5: #{coep_encoder_forward.48} parent=0 // pred_fallthru
    _
  // Predicated region
  $region6: #{coep_encoder_forward.48} parent=0 // pred_check
    _
  $region7: #{coep_encoder_forward.48} parent=0 // pred_check_branch
    %11 = sbr.rel (0) target = $region9
  $region8: #{coep_encoder_forward.48} parent=0 // pred_region
    _
  $region9: #{coep_encoder_forward.48} parent=0 // pred_fallthru
    _
  // Predicated region
  $region10: #{coep_encoder_forward.48} parent=0 // pred_check
    _
  $region11: #{coep_encoder_forward.48} parent=0 // pred_check_branch
    %13 = sbr.rel (0) target = $region13
  $region12: #{coep_encoder_forward.48} parent=0 // pred_region
    _
  $region13: #{coep_encoder_forward.48} parent=0 // pred_fallthru
    _
  %v15 = vld [vmem:[%s0] sm:$0xf]
  %v16 = vld [vmem:[%s0 + $0x4] sm:$0xf]
  %v17 = vld [vmem:[%s1] sm:$0xf]
  %v18 = vld [vmem:[%s1 + $0x4] sm:$0xf]
  %v19 = vld [vmem:[%s1 + $0x8] sm:$0xf]
  %v20 = vld [vmem:[%s1 + $0xc] sm:$0xf]
  %v21 = vld [vmem:[%s2] sm:$0x1]
  %v23 = vlaneseq
  %v24 = vshrl.u32 %v23, 7
  %v25 = vsub.s32 0, %v24
  %v26 = vrot.slane %v21, %v25
  %v30 = vunpack.c.l.b16 %v15
  %v31 = vunpack.c.l.b16 %v16
  %v32 = vpack.c.b16 %v31, %v30
  %v37 = vunpack.c.l.b16 %v17
  %v38 = vunpack.c.l.b16 %v18
  %v39 = vunpack.c.l.b16 %v19
  %v40 = vunpack.c.l.b16 %v20
  %v41 = vpack.c.b16 %v38, %v37
  %v42 = vpack.c.b16 %v40, %v39
  %vm45 = vcmask 261120
  %v47 = vsel %vm45, %v32, 0
  %49 = vmatprep.subr.bf16.mxu0 0
  %50 = vmatpush1.bf16.msra.mxu0 %v41
  %51 = vmatprep.subr.bf16.mxu0 0
  %52 = vmatpush1.bf16.msra.mxu0 %v42
  %53 = vmatprep.subr.bf16.mxu0 0
  %54 = vmatpush1.bf16.msra.mxu0 0
  %55 = vmatprep.subr.bf16.mxu0 0
  %56 = vmatpush1.bf16.msra.mxu0 0
  %57 = vmatprep.subr.bf16.mxu0 0
  %58 = vmatpush1.bf16.msra.mxu0 0
  %59 = vmatprep.subr.bf16.mxu0 0
  %60 = vmatpush1.bf16.msra.mxu0 0
  %61 = vmatprep.subr.bf16.mxu0 0
  %62 = vmatpush1.bf16.msra.mxu0 0
  %63 = vmatprep.subr.bf16.mxu0 0
  %64 = vmatpush1.bf16.msra.mxu0 0
  %65 = vmatprep.subr.bf16.mxu0 0
  %66 = vmatpush1.bf16.msra.mxu0 0
  %67 = vmatprep.subr.bf16.mxu0 0
  %68 = vmatpush1.bf16.msra.mxu0 0
  %69 = vmatprep.subr.bf16.mxu0 0
  %70 = vmatpush1.bf16.msra.mxu0 0
  %71 = vmatprep.subr.bf16.mxu0 0
  %72 = vmatpush1.bf16.msra.mxu0 0
  %73 = vmatprep.subr.bf16.mxu0 0
  %74 = vmatpush1.bf16.msra.mxu0 0
  %75 = vmatprep.subr.bf16.mxu0 0
  %76 = vmatpush1.bf16.msra.mxu0 0
  %77 = vmatprep.subr.bf16.mxu0 0
  %78 = vmatpush1.bf16.msra.mxu0 0
  %79 = vmatprep.subr.bf16.mxu0 0
  %80 = vmatpush1.bf16.msra.mxu0 0
  %81 = vmatprep.mubr.bf16.mxu0 0
  %82 = vmatmul.mubr.bf16.gmra.mrb[0].mxu0 %v47
  %v83 = vpop.f32.mrb[0].mxu0
  %v84 = vadd.f32 %v26, %v83
  %v85 = vpop.f32.mrb[0].mxu0
  %v86 = vpop.f32.mrb[0].mxu0
  %v87 = vadd.f32 %v26, %v86
  %v88 = vpop.f32.mrb[0].mxu0
  %89 = vdwg.mxu0
  %v90 = vpack.c.bf16 %v87, %v84
  %v92 = vunpack.c.l.b16 %v90
  %v93 = vunpack.c.h.b16 %v90
  %v94 = vpack.c.b16 %v92, %v92
  %v95 = vpack.c.b16 %v93, %v93
  %vm98 = vcmask 257024
  %99 = vst.msk [vmem:[%s3] sm:$0xf] %vm98, %v94
  %100 = vst.msk [vmem:[%s3 + $0x4] sm:$0xf] %vm98, %v95
  // Predicated region
  $region14: #{coep_encoder_forward.48} parent=0 // pred_check
    _
  $region15: #{coep_encoder_forward.48} parent=0 // pred_check_branch
    %102 = sbr.rel (0) target = $region17
  $region16: #{coep_encoder_forward.48} parent=0 // pred_region
    _
  $region17: #{coep_encoder_forward.48} parent=0 // pred_fallthru
    _
  // Predicated region
  $region18: #{coep_encoder_forward.48} parent=0 // pred_check
    _
  $region19: #{coep_encoder_forward.48} parent=0 // pred_check_branch
    %104 = sbr.rel (0) target = $region21
  $region20: #{coep_encoder_forward.48} parent=0 // pred_region
    _
  $region21: #{coep_encoder_forward.48} parent=0 // pred_fallthru
    _

// kernel: coep_encoder_forward.47
$region0: #{coep_encoder_forward.47}
  #allocation0 [shape = 'u32[]', space=smem, size = 0x4, offset = 0x4, fixed_abs, tag = 'smem constant byte address 0x4 - core index']
  #allocation1 [shape = 'u32[144,128]{1,0:T(1,128)}', space=vmem, size = 0x12000, scoped, tag = 'internal scratch']
  %s0 = inlined_call_operand.vmem [shape: bf16[2,4,8,8], index: 0, kind: input, shape index: {}]
  %s1 = inlined_call_operand.vmem [shape: bf16[2,4,8,8], index: 1, kind: input, shape index: {}]
  %s2 = inlined_call_operand.vmem [shape: bf16[2,4,8,8], index: 2, kind: input, shape index: {}]
  %s3 = inlined_call_operand.vmem [shape: f32[2,1,8], index: 3, kind: input, shape index: {}]
  %s4 = inlined_call_operand.vmem [shape: bf16[2,4,8,8], index: 4, kind: output, shape index: {}]
  %s5 = sld [smem:[#allocation0]]
  $region49: #{coep_encoder_forward.47} parent=0
    _
  %s7 = ssub.s32 1, %s5
  %s8 = scalar_select 0, %s7, %s5
  loop: start=0, step=1, limit=4
  $region2: #{coep_encoder_forward.47} parent=0 // loop_pre_header
    _
  $region3: #{coep_encoder_forward.47} parent=0 // loop_header
    %s10 = sphi 0, %s14
    %p11 = scmp.ge.s32.totalorder %s10, 4
    %s20 = sphi 0, %s22
    %s23 = sphi 0, %s20
    %s24 = sphi 0, %s23
    %s40 = sphi 0, %s24
    %s46 = sphi 0, %s48
    %s49 = sphi 0, %s46
    %s50 = sphi 0, %s49
    %s66 = sphi 0, %s50
    %s72 = sphi 0, %s74
    %s75 = sphi 0, %s72
    %s76 = sphi 0, %s75
    %s92 = sphi 0, %s76
    %s98 = sphi 0, %s100
    %s101 = sphi 0, %s98
    %s102 = sphi 0, %s101
    %s118 = sphi 0, %s102
    %s124 = sphi 0, %s126
    %s127 = sphi 0, %s124
    %s128 = sphi 0, %s127
    %s144 = sphi 0, %s128
  $region4: #{coep_encoder_forward.47} parent=0 // loop_header_branch
    %13 = sbr.rel (%p11) target = $region8
  $region5: #{coep_encoder_forward.47} parent=0 // loop_body
    %s15 = ssub.s32 %s10, 1
    %s16 = ssub.s32 %s10, 2
    %s17 = sadd.s32 %s10, 1
    %s18 = ssub.s32 %s10, %s17
    %p19 = scmp.eq.s32.totalorder %s18, 0
    %s21 = sadd.s32 %s20, 1
    %s22 = scalar_select %p19, %s20, %s21
    %p25 = pneg %p19
    %p26 = scmp.eq.s32.totalorder %s10, 1
    %p27 = por %p25, %p26
    %p28 = scmp.ne.s32.totalorder %s20, %s23
    %p29 = scmp.eq.s32.totalorder %s10, 0
    %p30 = por %p28, %p29
    %p31 = scmp.ne.s32.totalorder %s20, %s23
    %p32 = scmp.eq.s32.totalorder %s15, 1
    %p33 = por %p31, %p32
    %p34 = scmp.ne.s32.totalorder %s23, %s24
    %p35 = scmp.eq.s32.totalorder %s15, 0
    %p36 = por %p34, %p35
    %p37 = scmp.ne.s32.totalorder %s23, %s24
    %p38 = scmp.eq.s32.totalorder %s16, 1
    %p39 = por %p37, %p38
    %p41 = scmp.ne.s32.totalorder %s24, %s40
    %p42 = scmp.eq.s32.totalorder %s16, 0
    %p43 = por %p41, %p42
    %s44 = ssub.s32 %s10, %s17
    %p45 = scmp.eq.s32.totalorder %s44, 0
    %s47 = sadd.s32 %s46, 1
    %s48 = scalar_select %p45, %s46, %s47
    %p51 = pneg %p45
    %p52 = scmp.eq.s32.totalorder %s10, 1
    %p53 = por %p51, %p52
    %p54 = scmp.ne.s32.totalorder %s46, %s49
    %p55 = scmp.eq.s32.totalorder %s10, 0
    %p56 = por %p54, %p55
    %p57 = scmp.ne.s32.totalorder %s46, %s49
    %p58 = scmp.eq.s32.totalorder %s15, 1
    %p59 = por %p57, %p58
    %p60 = scmp.ne.s32.totalorder %s49, %s50
    %p61 = scmp.eq.s32.totalorder %s15, 0
    %p62 = por %p60, %p61
    %p63 = scmp.ne.s32.totalorder %s49, %s50
    %p64 = scmp.eq.s32.totalorder %s16, 1
    %p65 = por %p63, %p64
    %p67 = scmp.ne.s32.totalorder %s50, %s66
    %p68 = scmp.eq.s32.totalorder %s16, 0
    %p69 = por %p67, %p68
    %s70 = ssub.s32 %s10, %s17
    %p71 = scmp.eq.s32.totalorder %s70, 0
    %s73 = sadd.s32 %s72, 1
    %s74 = scalar_select %p71, %s72, %s73
    %p77 = pneg %p71
    %p78 = scmp.eq.s32.totalorder %s10, 1
    %p79 = por %p77, %p78
    %p80 = scmp.ne.s32.totalorder %s72, %s75
    %p81 = scmp.eq.s32.totalorder %s10, 0
    %p82 = por %p80, %p81
    %p83 = scmp.ne.s32.totalorder %s72, %s75
    %p84 = scmp.eq.s32.totalorder %s15, 1
    %p85 = por %p83, %p84
    %p86 = scmp.ne.s32.totalorder %s75, %s76
    %p87 = scmp.eq.s32.totalorder %s15, 0
    %p88 = por %p86, %p87
    %p89 = scmp.ne.s32.totalorder %s75, %s76
    %p90 = scmp.eq.s32.totalorder %s16, 1
    %p91 = por %p89, %p90
    %p93 = scmp.ne.s32.totalorder %s76, %s92
    %p94 = scmp.eq.s32.totalorder %s16, 0
    %p95 = por %p93, %p94
    %s96 = ssub.s32 %s10, %s17
    %p97 = scmp.eq.s32.totalorder %s96, 0
    %s99 = sadd.s32 %s98, 1
    %s100 = scalar_select %p97, %s98, %s99
    %p103 = pneg %p97
    %p104 = scmp.eq.s32.totalorder %s10, 1
    %p105 = por %p103, %p104
    %p106 = scmp.ne.s32.totalorder %s98, %s101
    %p107 = scmp.eq.s32.totalorder %s10, 0
    %p108 = por %p106, %p107
    %p109 = scmp.ne.s32.totalorder %s98, %s101
    %p110 = scmp.eq.s32.totalorder %s15, 1
    %p111 = por %p109, %p110
    %p112 = scmp.ne.s32.totalorder %s101, %s102
    %p113 = scmp.eq.s32.totalorder %s15, 0
    %p114 = por %p112, %p113
    %p115 = scmp.ne.s32.totalorder %s101, %s102
    %p116 = scmp.eq.s32.totalorder %s16, 1
    %p117 = por %p115, %p116
    %p119 = scmp.ne.s32.totalorder %s102, %s118
    %p120 = scmp.eq.s32.totalorder %s16, 0
    %p121 = por %p119, %p120
    %s122 = ssub.s32 %s10, %s17
    %p123 = scmp.eq.s32.totalorder %s122, 0
    %s125 = sadd.s32 %s124, 1
    %s126 = scalar_select %p123, %s124, %s125
    %p129 = pneg %p123
    %p130 = scmp.eq.s32.totalorder %s10, 1
    %p131 = por %p129, %p130
    %p132 = scmp.ne.s32.totalorder %s124, %s127
    %p133 = scmp.eq.s32.totalorder %s10, 0
    %p134 = por %p132, %p133
    %p135 = scmp.ne.s32.totalorder %s124, %s127
    %p136 = scmp.eq.s32.totalorder %s15, 1
    %p137 = por %p135, %p136
    %p138 = scmp.ne.s32.totalorder %s127, %s128
    %p139 = scmp.eq.s32.totalorder %s15, 0
    %p140 = por %p138, %p139
    %p141 = scmp.ne.s32.totalorder %s127, %s128
    %p142 = scmp.eq.s32.totalorder %s16, 1
    %p143 = por %p141, %p142
    %p145 = scmp.ne.s32.totalorder %s128, %s144
    %p146 = scmp.eq.s32.totalorder %s16, 0
    %p147 = por %p145, %p146
    %p148 = scmp.le.s32.totalorder 1, %s10
    %p149 = scmp.lt.s32.totalorder %s10, 3
    %p150 = pnand %p148, %p149
    %p151 = pneg %p150
    // Predicated region
    $region9: #{coep_encoder_forward.47} parent=5 // pred_check
      _
    $region10: #{coep_encoder_forward.47} parent=5 // pred_check_branch
      %153 = sbr.rel (%p150) target = $region12
    $region11: #{coep_encoder_forward.47} parent=5 // pred_region
      %s154 = ssub.s32 %s10, 1
    $region12: #{coep_encoder_forward.47} parent=5 // pred_fallthru
      _
    %p155 = scmp.lt.s32.totalorder %s10, 2
    // Predicated region
    $region13: #{coep_encoder_forward.47} parent=5 // pred_check
      %p156 = pneg %p155
    $region14: #{coep_encoder_forward.47} parent=5 // pred_check_branch
      %158 = sbr.rel (%p156) target = $region16
    $region15: #{coep_encoder_forward.47} parent=5 // pred_region
      // Predicated region
      $region17: #{coep_encoder_forward.47} parent=15 // pred_check
        %p159 = pneg %p30
      $region18: #{coep_encoder_forward.47} parent=15 // pred_check_branch
        %161 = sbr.rel (%p159) target = $region20
      $region19: #{coep_encoder_forward.47} parent=15 // pred_region
        %p162 = scmp.lt.s32.totalorder %s10, 1
        %s163 = scalar_select %p162, %s10, 1
        %s164 = smul.addr %s163, 4
        %s165 = smul.addr %s164, 4
        %s166 = scalar_lea.vmem %s0, %s165
      $region20: #{coep_encoder_forward.47} parent=15 // pred_fallthru
        _
      // Predicated region
      $region21: #{coep_encoder_forward.47} parent=15 // pred_check
        %p167 = pneg %p56
      $region22: #{coep_encoder_forward.47} parent=15 // pred_check_branch
        %169 = sbr.rel (%p167) target = $region24
      $region23: #{coep_encoder_forward.47} parent=15 // pred_region
        %p170 = scmp.lt.s32.totalorder %s10, 1
        %s171 = scalar_select %p170, %s10, 1
        %s172 = smul.addr %s171, 4
        %s173 = smul.addr %s172, 4
        %s174 = scalar_lea.vmem %s1, %s173
      $region24: #{coep_encoder_forward.47} parent=15 // pred_fallthru
        _
      // Predicated region
      $region25: #{coep_encoder_forward.47} parent=15 // pred_check
        %p175 = pneg %p82
      $region26: #{coep_encoder_forward.47} parent=15 // pred_check_branch
        %177 = sbr.rel (%p175) target = $region28
      $region27: #{coep_encoder_forward.47} parent=15 // pred_region
        %p178 = scmp.lt.s32.totalorder %s10, 1
        %s179 = scalar_select %p178, %s10, 1
        %s180 = smul.addr %s179, 4
        %s181 = smul.addr %s180, 4
        %s182 = scalar_lea.vmem %s2, %s181
      $region28: #{coep_encoder_forward.47} parent=15 // pred_fallthru
        _
      // Predicated region
      $region29: #{coep_encoder_forward.47} parent=15 // pred_check
        %p183 = pneg %p108
      $region30: #{coep_encoder_forward.47} parent=15 // pred_check_branch
        %185 = sbr.rel (%p183) target = $region32
      $region31: #{coep_encoder_forward.47} parent=15 // pred_region
        %p186 = scmp.lt.s32.totalorder %s10, 1
        %s187 = scalar_select %p186, %s10, 1
        %s188 = scalar_lea.vmem %s3, %s187
      $region32: #{coep_encoder_forward.47} parent=15 // pred_fallthru
        _
    $region16: #{coep_encoder_forward.47} parent=5 // pred_fallthru
      _
    %p189 = scmp.le.s32.totalorder 1, %s10
    %p190 = scmp.lt.s32.totalorder %s10, 3
    %p191 = pnand %p189, %p190
    %p192 = pneg %p191
    // Predicated region
    $region33: #{coep_encoder_forward.47} parent=5 // pred_check
      _
    $region34: #{coep_encoder_forward.47} parent=5 // pred_check_branch
      %194 = sbr.rel (%p191) target = $region36
    $region35: #{coep_encoder_forward.47} parent=5 // pred_region
      %s195 = ssub.s32 %s10, 1
      %p196 = scmp.lt.s32.totalorder %s15, 1
      %s197 = scalar_select %p196, %s15, 1
      %s198 = smul.addr %s197, 4
      %s199 = smul.addr %s198, 4
      %s200 = scalar_lea.vmem %s0, %s199
      %p201 = pneg %p36
      %p202 = pneg %p33
      %p203 = scmp.lt.s32.totalorder %s15, 1
      %s204 = scalar_select %p203, %s15, 1
      %s205 = smul.addr %s204, 4
      %s206 = smul.addr %s205, 4
      %s207 = scalar_lea.vmem %s1, %s206
      %p208 = pneg %p62
      %p209 = pneg %p59
      %p210 = scmp.lt.s32.totalorder %s15, 1
      %s211 = scalar_select %p210, %s15, 1
      %s212 = smul.addr %s211, 4
      %s213 = smul.addr %s212, 4
      %s214 = scalar_lea.vmem %s2, %s213
      %p215 = pneg %p88
      %p216 = pneg %p85
      %p217 = scmp.lt.s32.totalorder %s15, 1
      %s218 = scalar_select %p217, %s15, 1
      %s219 = scalar_lea.vmem %s3, %s218
      %p220 = pneg %p114
      %p221 = pneg %p111
      %p222 = pneg %p140
      %p223 = pneg %p137
      %p224 = scmp.lt.s32.totalorder %s15, 1
      %s225 = scalar_select %p224, %s15, 1
      %s226 = smul.addr %s225, 4
      %s227 = smul.addr %s226, 4
      %s228 = scalar_lea.vmem %s4, %s227
      %p229 = scmp.lt.s32.totalorder %s15, 1
      %s230 = scalar_select %p229, %s15, 1
      %s231 = smul.addr %s230, 4
      %s232 = smul.addr %s231, 4
      %s233 = scalar_lea.vmem %s0, %s232
      %p234 = scmp.lt.s32.totalorder %s15, 1
      %s235 = scalar_select %p234, %s15, 1
      %s236 = smul.addr %s235, 4
      %s237 = smul.addr %s236, 4
      %s238 = scalar_lea.vmem %s1, %s237
      %p239 = scmp.lt.s32.totalorder %s15, 1
      %s240 = scalar_select %p239, %s15, 1
      %s241 = smul.addr %s240, 4
      %s242 = smul.addr %s241, 4
      %s243 = scalar_lea.vmem %s2, %s242
      %p244 = scmp.lt.s32.totalorder %s15, 1
      %s245 = scalar_select %p244, %s15, 1
      %s246 = scalar_lea.vmem %s3, %s245
      %p247 = scmp.lt.s32.totalorder %s15, 1
      %s248 = scalar_select %p247, %s15, 1
      %s249 = smul.addr %s248, 4
      %s250 = smul.addr %s249, 4
      %s251 = scalar_lea.vmem %s4, %s250
      %v253 = vld [vmem:[%s233] sm:$0xf]
      %v254 = vld [vmem:[%s233 + $0x4] sm:$0xf]
      %v255 = vld [vmem:[%s233 + $0x8] sm:$0xf]
      %v256 = vld [vmem:[%s233 + $0xc] sm:$0xf]
      %v257 = vld [vmem:[%s238] sm:$0xf]
      %v258 = vld [vmem:[%s238 + $0x4] sm:$0xf]
      %v259 = vld [vmem:[%s238 + $0x8] sm:$0xf]
      %v260 = vld [vmem:[%s238 + $0xc] sm:$0xf]
      %v261 = vld [vmem:[%s243] sm:$0xf]
      %v262 = vld [vmem:[%s243 + $0x4] sm:$0xf]
      %v263 = vld [vmem:[%s243 + $0x8] sm:$0xf]
      %v264 = vld [vmem:[%s243 + $0xc] sm:$0xf]
      %v265 = vld [vmem:[%s246] sm:$0x1]
      %v267 = vlaneseq
      %v268 = vshrl.u32 %v267, 7
      %v269 = vsub.s32 0, %v268
      %v270 = vrot.slane %v265, %v269
      %vm272 = vcmask 64512
      %v274 = vsel %vm272, %v253, 0
      %v277 = vsel %vm272, %v257, 0
      %279 = vmatprep.subr.bf16.mxu0 0
      %280 = vmatpush1.bf16.xpose.msra.mxu0 %v277
      %281 = vmatprep.subr.bf16.mxu0 0
      %282 = vmatpush1.bf16.xpose.msra.mxu0 0
      %283 = vmatprep.subr.bf16.mxu0 0
      %284 = vmatpush1.bf16.xpose.msra.mxu0 0
      %285 = vmatprep.subr.bf16.mxu0 0
      %286 = vmatpush1.bf16.xpose.msra.mxu0 0
      %287 = vmatprep.subr.bf16.mxu0 0
      %288 = vmatpush1.bf16.xpose.msra.mxu0 0
      %289 = vmatprep.subr.bf16.mxu0 0
      %290 = vmatpush1.bf16.xpose.msra.mxu0 0
      %291 = vmatprep.subr.bf16.mxu0 0
      %292 = vmatpush1.bf16.xpose.msra.mxu0 0
      %293 = vmatprep.subr.bf16.mxu0 0
      %294 = vmatpush1.bf16.xpose.msra.mxu0 0
      %295 = vmatprep.subr.bf16.mxu0 0
      %296 = vmatpush1.bf16.xpose.msra.mxu0 0
      %297 = vmatprep.subr.bf16.mxu0 0
      %298 = vmatpush1.bf16.xpose.msra.mxu0 0
      %299 = vmatprep.subr.bf16.mxu0 0
      %300 = vmatpush1.bf16.xpose.msra.mxu0 0
      %301 = vmatprep.subr.bf16.mxu0 0
      %302 = vmatpush1.bf16.xpose.msra.mxu0 0
      %303 = vmatprep.subr.bf16.mxu0 0
      %304 = vmatpush1.bf16.xpose.msra.mxu0 0
      %305 = vmatprep.subr.bf16.mxu0 0
      %306 = vmatpush1.bf16.xpose.msra.mxu0 0
      %307 = vmatprep.subr.bf16.mxu0 0
      %308 = vmatpush1.bf16.xpose.msra.mxu0 0
      %309 = vmatprep.subr.bf16.mxu0 0
      %310 = vmatpush1.bf16.xpose.msra.mxu0 0
      %311 = vmatprep.mubr.bf16.mxu0 0
      %312 = vmatmul.mubr.bf16.gmra.mrb[0].mxu0 %v274
      %v313 = vpop.f32.mrb[0].mxu0
      %v314 = vadd.f32 %v270, %v313
      %v315 = vpop.f32.mrb[0].mxu0
      %v316 = vpop.f32.mrb[0].mxu0
      %v317 = vpop.f32.mrb[0].mxu0
      %318 = vdwg.mxu0
      %v320 = vsel %vm272, %v254, 0
      %v323 = vsel %vm272, %v258, 0
      %325 = vmatprep.subr.bf16.mxu0 0
      %326 = vmatpush1.bf16.xpose.msra.mxu0 %v323
      %327 = vmatprep.subr.bf16.mxu0 0
      %328 = vmatpush1.bf16.xpose.msra.mxu0 0
      %329 = vmatprep.subr.bf16.mxu0 0
      %330 = vmatpush1.bf16.xpose.msra.mxu0 0
      %331 = vmatprep.subr.bf16.mxu0 0
      %332 = vmatpush1.bf16.xpose.msra.mxu0 0
      %333 = vmatprep.subr.bf16.mxu0 0
      %334 = vmatpush1.bf16.xpose.msra.mxu0 0
      %335 = vmatprep.subr.bf16.mxu0 0
      %336 = vmatpush1.bf16.xpose.msra.mxu0 0
      %337 = vmatprep.subr.bf16.mxu0 0
      %338 = vmatpush1.bf16.xpose.msra.mxu0 0
      %339 = vmatprep.subr.bf16.mxu0 0
      %340 = vmatpush1.bf16.xpose.msra.mxu0 0
      %341 = vmatprep.subr.bf16.mxu0 0
      %342 = vmatpush1.bf16.xpose.msra.mxu0 0
      %343 = vmatprep.subr.bf16.mxu0 0
      %344 = vmatpush1.bf16.xpose.msra.mxu0 0
      %345 = vmatprep.subr.bf16.mxu0 0
      %346 = vmatpush1.bf16.xpose.msra.mxu0 0
      %347 = vmatprep.subr.bf16.mxu0 0
      %348 = vmatpush1.bf16.xpose.msra.mxu0 0
      %349 = vmatprep.subr.bf16.mxu0 0
      %350 = vmatpush1.bf16.xpose.msra.mxu0 0
      %351 = vmatprep.subr.bf16.mxu0 0
      %352 = vmatpush1.bf16.xpose.msra.mxu0 0
      %353 = vmatprep.subr.bf16.mxu0 0
      %354 = vmatpush1.bf16.xpose.msra.mxu0 0
      %355 = vmatprep.subr.bf16.mxu0 0
      %356 = vmatpush1.bf16.xpose.msra.mxu0 0
      %357 = vmatprep.mubr.bf16.mxu0 0
      %358 = vmatmul.mubr.bf16.gmra.mrb[0].mxu0 %v320
      %v359 = vpop.f32.mrb[0].mxu0
      %v360 = vadd.f32 %v270, %v359
      %v361 = vpop.f32.mrb[0].mxu0
      %v362 = vpop.f32.mrb[0].mxu0
      %v363 = vpop.f32.mrb[0].mxu0
      %364 = vdwg.mxu0
      %v366 = vsel %vm272, %v255, 0
      %v369 = vsel %vm272, %v259, 0
      %371 = vmatprep.subr.bf16.mxu0 0
      %372 = vmatpush1.bf16.xpose.msra.mxu0 %v369
      %373 = vmatprep.subr.bf16.mxu0 0
      %374 = vmatpush1.bf16.xpose.msra.mxu0 0
      %375 = vmatprep.subr.bf16.mxu0 0
      %376 = vmatpush1.bf16.xpose.msra.mxu0 0
      %377 = vmatprep.subr.bf16.mxu0 0
      %378 = vmatpush1.bf16.xpose.msra.mxu0 0
      %379 = vmatprep.subr.bf16.mxu0 0
      %380 = vmatpush1.bf16.xpose.msra.mxu0 0
      %381 = vmatprep.subr.bf16.mxu0 0
      %382 = vmatpush1.bf16.xpose.msra.mxu0 0
      %383 = vmatprep.subr.bf16.mxu0 0
      %384 = vmatpush1.bf16.xpose.msra.mxu0 0
      %385 = vmatprep.subr.bf16.mxu0 0
      %386 = vmatpush1.bf16.xpose.msra.mxu0 0
      %387 = vmatprep.subr.bf16.mxu0 0
      %388 = vmatpush1.bf16.xpose.msra.mxu0 0
      %389 = vmatprep.subr.bf16.mxu0 0
      %390 = vmatpush1.bf16.xpose.msra.mxu0 0
      %391 = vmatprep.subr.bf16.mxu0 0
      %392 = vmatpush1.bf16.xpose.msra.mxu0 0
      %393 = vmatprep.subr.bf16.mxu0 0
      %394 = vmatpush1.bf16.xpose.msra.mxu0 0
      %395 = vmatprep.subr.bf16.mxu0 0
      %396 = vmatpush1.bf16.xpose.msra.mxu0 0
      %397 = vmatprep.subr.bf16.mxu0 0
      %398 = vmatpush1.bf16.xpose.msra.mxu0 0
      %399 = vmatprep.subr.bf16.mxu0 0
      %400 = vmatpush1.bf16.xpose.msra.mxu0 0
      %401 = vmatprep.subr.bf16.mxu0 0
      %402 = vmatpush1.bf16.xpose.msra.mxu0 0
      %403 = vmatprep.mubr.bf16.mxu0 0
      %404 = vmatmul.mubr.bf16.gmra.mrb[0].mxu0 %v366
      %v405 = vpop.f32.mrb[0].mxu0
      %v406 = vadd.f32 %v270, %v405
      %v407 = vpop.f32.mrb[0].mxu0
      %v408 = vpop.f32.mrb[0].mxu0
      %v409 = vpop.f32.mrb[0].mxu0
      %410 = vdwg.mxu0
      %v412 = vsel %vm272, %v256, 0
      %v415 = vsel %vm272, %v260, 0
      %417 = vmatprep.subr.bf16.mxu0 0
      %418 = vmatpush1.bf16.xpose.msra.mxu0 %v415
      %419 = vmatprep.subr.bf16.mxu0 0
      %420 = vmatpush1.bf16.xpose.msra.mxu0 0
      %421 = vmatprep.subr.bf16.mxu0 0
      %422 = vmatpush1.bf16.xpose.msra.mxu0 0
      %423 = vmatprep.subr.bf16.mxu0 0
      %424 = vmatpush1.bf16.xpose.msra.mxu0 0
      %425 = vmatprep.subr.bf16.mxu0 0
      %426 = vmatpush1.bf16.xpose.msra.mxu0 0
      %427 = vmatprep.subr.bf16.mxu0 0
      %428 = vmatpush1.bf16.xpose.msra.mxu0 0
      %429 = vmatprep.subr.bf16.mxu0 0
      %430 = vmatpush1.bf16.xpose.msra.mxu0 0
      %431 = vmatprep.subr.bf16.mxu0 0
      %432 = vmatpush1.bf16.xpose.msra.mxu0 0
      %433 = vmatprep.subr.bf16.mxu0 0
      %434 = vmatpush1.bf16.xpose.msra.mxu0 0
      %435 = vmatprep.subr.bf16.mxu0 0
      %436 = vmatpush1.bf16.xpose.msra.mxu0 0
      %437 = vmatprep.subr.bf16.mxu0 0
      %438 = vmatpush1.bf16.xpose.msra.mxu0 0
      %439 = vmatprep.subr.bf16.mxu0 0
      %440 = vmatpush1.bf16.xpose.msra.mxu0 0
      %441 = vmatprep.subr.bf16.mxu0 0
      %442 = vmatpush1.bf16.xpose.msra.mxu0 0
      %443 = vmatprep.subr.bf16.mxu0 0
      %444 = vmatpush1.bf16.xpose.msra.mxu0 0
      %445 = vmatprep.subr.bf16.mxu0 0
      %446 = vmatpush1.bf16.xpose.msra.mxu0 0
      %447 = vmatprep.subr.bf16.mxu0 0
      %448 = vmatpush1.bf16.xpose.msra.mxu0 0
      %449 = vmatprep.mubr.bf16.mxu0 0
      %450 = vmatmul.mubr.bf16.gmra.mrb[0].mxu0 %v412
      %v451 = vpop.f32.mrb[0].mxu0
      %v452 = vadd.f32 %v270, %v451
      %v453 = vpop.f32.mrb[0].mxu0
      %v454 = vpop.f32.mrb[0].mxu0
      %v455 = vpop.f32.mrb[0].mxu0
      %456 = vdwg.mxu0
      %v457 = vsel %vm272, %v314, -inf
      %458 = vmax.xlane.f32.xlu0 %v457
      %v459 = vpop.xlane.xlu0 %458
      %v460 = vsel %vm272, %v360, -inf
      %461 = vmax.xlane.f32.xlu0 %v460
      %v462 = vpop.xlane.xlu0 %461
      %v463 = vsel %vm272, %v406, -inf
      %464 = vmax.xlane.f32.xlu0 %v463
      %v465 = vpop.xlane.xlu0 %464
      %v466 = vsel %vm272, %v452, -inf
      %467 = vmax.xlane.f32.xlu0 %v466
      %v468 = vpop.xlane.xlu0 %467
      %v469 = vsub.f32 %v314, %v459
      %v470 = vsub.f32 %v360, %v462
      %v471 = vsub.f32 %v406, %v465
      %v472 = vsub.f32 %v452, %v468
      %v473 = vmul.f32 %v469, 1.442695
      %v474 = vpow.pop %v473
      %v475 = vmul.f32 %v470, 1.442695
      %v476 = vpow.pop %v475
      %v477 = vmul.f32 %v471, 1.442695
      %v478 = vpow.pop %v477
      %v479 = vmul.f32 %v472, 1.442695
      %v480 = vpow.pop %v479
      %v481 = vsel %vm272, %v474, 0.0
      %482 = vadd.xlane.f32.xlu0 %v481
      %v483 = vpop.xlane.xlu0 %482
      %v484 = vsel %vm272, %v476, 0.0
      %485 = vadd.xlane.f32.xlu0 %v484
      %v486 = vpop.xlane.xlu0 %485
      %v487 = vsel %vm272, %v478, 0.0
      %488 = vadd.xlane.f32.xlu0 %v487
      %v489 = vpop.xlane.xlu0 %488
      %v490 = vsel %vm272, %v480, 0.0
      %491 = vadd.xlane.f32.xlu0 %v490
      %v492 = vpop.xlane.xlu0 %491
      %v493 = vrcp.pop %v483
      %v494 = vrcp.pop %v486
      %v495 = vrcp.pop %v489
      %v496 = vrcp.pop %v492
      %v497 = vmul.f32 %v474, %v493
      %v498 = vmul.f32 %v476, %v494
      %v499 = vmul.f32 %v478, %v495
      %v500 = vmul.f32 %v480, %v496
      %v501 = vpack.c.bf16 %v497, %v497
      %v502 = vpack.c.bf16 %v498, %v498
      %v503 = vpack.c.bf16 %v499, %v499
      %v504 = vpack.c.bf16 %v500, %v500
      %v506 = vsel %vm272, %v501, 0
      %vm508 = vcmask 1043456
      %v510 = vsel %vm508, %v261, 0
      %512 = vmatprep.subr.bf16.mxu0 0
      %513 = vmatpush1.bf16.msra.mxu0 %v510
      %514 = vmatprep.subr.bf16.mxu0 0
      %515 = vmatpush1.bf16.msra.mxu0 0
      %516 = vmatprep.subr.bf16.mxu0 0
      %517 = vmatpush1.bf16.msra.mxu0 0
      %518 = vmatprep.subr.bf16.mxu0 0
      %519 = vmatpush1.bf16.msra.mxu0 0
      %520 = vmatprep.subr.bf16.mxu0 0
      %521 = vmatpush1.bf16.msra.mxu0 0
      %522 = vmatprep.subr.bf16.mxu0 0
      %523 = vmatpush1.bf16.msra.mxu0 0
      %524 = vmatprep.subr.bf16.mxu0 0
      %525 = vmatpush1.bf16.msra.mxu0 0
      %526 = vmatprep.subr.bf16.mxu0 0
      %527 = vmatpush1.bf16.msra.mxu0 0
      %528 = vmatprep.subr.bf16.mxu0 0
      %529 = vmatpush1.bf16.msra.mxu0 0
      %530 = vmatprep.subr.bf16.mxu0 0
      %531 = vmatpush1.bf16.msra.mxu0 0
      %532 = vmatprep.subr.bf16.mxu0 0
      %533 = vmatpush1.bf16.msra.mxu0 0
      %534 = vmatprep.subr.bf16.mxu0 0
      %535 = vmatpush1.bf16.msra.mxu0 0
      %536 = vmatprep.subr.bf16.mxu0 0
      %537 = vmatpush1.bf16.msra.mxu0 0
      %538 = vmatprep.subr.bf16.mxu0 0
      %539 = vmatpush1.bf16.msra.mxu0 0
      %540 = vmatprep.subr.bf16.mxu0 0
      %541 = vmatpush1.bf16.msra.mxu0 0
      %542 = vmatprep.subr.bf16.mxu0 0
      %543 = vmatpush1.bf16.msra.mxu0 0
      %544 = vmatprep.mubr.bf16.mxu0 0
      %545 = vmatmul.mubr.bf16.gmra.mrb[0].mxu0 %v506
      %v546 = vpop.f32.mrb[0].mxu0
      %v547 = vadd.f32 0.0, %v546
      %v548 = vpop.f32.mrb[0].mxu0
      %v549 = vpop.f32.mrb[0].mxu0
      %v550 = vpop.f32.mrb[0].mxu0
      %551 = vdwg.mxu0
      %v553 = vsel %vm272, %v502, 0
      %v556 = vsel %vm508, %v262, 0
      %558 = vmatprep.subr.bf16.mxu0 0
      %559 = vmatpush1.bf16.msra.mxu0 %v556
      %560 = vmatprep.subr.bf16.mxu0 0
      %561 = vmatpush1.bf16.msra.mxu0 0
      %562 = vmatprep.subr.bf16.mxu0 0
      %563 = vmatpush1.bf16.msra.mxu0 0
      %564 = vmatprep.subr.bf16.mxu0 0
      %565 = vmatpush1.bf16.msra.mxu0 0
      %566 = vmatprep.subr.bf16.mxu0 0
      %567 = vmatpush1.bf16.msra.mxu0 0
      %568 = vmatprep.subr.bf16.mxu0 0
      %569 = vmatpush1.bf16.msra.mxu0 0
      %570 = vmatprep.subr.bf16.mxu0 0
      %571 = vmatpush1.bf16.msra.mxu0 0
      %572 = vmatprep.subr.bf16.mxu0 0
      %573 = vmatpush1.bf16.msra.mxu0 0
      %574 = vmatprep.subr.bf16.mxu0 0
      %575 = vmatpush1.bf16.msra.mxu0 0
      %576 = vmatprep.subr.bf16.mxu0 0
      %577 = vmatpush1.bf16.msra.mxu0 0
      %578 = vmatprep.subr.bf16.mxu0 0
      %579 = vmatpush1.bf16.msra.mxu0 0
      %580 = vmatprep.subr.bf16.mxu0 0
      %581 = vmatpush1.bf16.msra.mxu0 0
      %582 = vmatprep.subr.bf16.mxu0 0
      %583 = vmatpush1.bf16.msra.mxu0 0
      %584 = vmatprep.subr.bf16.mxu0 0
      %585 = vmatpush1.bf16.msra.mxu0 0
      %586 = vmatprep.subr.bf16.mxu0 0
      %587 = vmatpush1.bf16.msra.mxu0 0
      %588 = vmatprep.subr.bf16.mxu0 0
      %589 = vmatpush1.bf16.msra.mxu0 0
      %590 = vmatprep.mubr.bf16.mxu0 0
      %591 = vmatmul.mubr.bf16.gmra.mrb[0].mxu0 %v553
      %v592 = vpop.f32.mrb[0].mxu0
      %v593 = vadd.f32 0.0, %v592
      %v594 = vpop.f32.mrb[0].mxu0
      %v595 = vpop.f32.mrb[0].mxu0
      %v596 = vpop.f32.mrb[0].mxu0
      %597 = vdwg.mxu0
      %v599 = vsel %vm272, %v503, 0
      %v602 = vsel %vm508, %v263, 0
      %604 = vmatprep.subr.bf16.mxu0 0
      %605 = vmatpush1.bf16.msra.mxu0 %v602
      %606 = vmatprep.subr.bf16.mxu0 0
      %607 = vmatpush1.bf16.msra.mxu0 0
      %608 = vmatprep.subr.bf16.mxu0 0
      %609 = vmatpush1.bf16.msra.mxu0 0
      %610 = vmatprep.subr.bf16.mxu0 0
      %611 = vmatpush1.bf16.msra.mxu0 0
      %612 = vmatprep.subr.bf16.mxu0 0
      %613 = vmatpush1.bf16.msra.mxu0 0
      %614 = vmatprep.subr.bf16.mxu0 0
      %615 = vmatpush1.bf16.msra.mxu0 0
      %616 = vmatprep.subr.bf16.mxu0 0
      %617 = vmatpush1.bf16.msra.mxu0 0
      %618 = vmatprep.subr.bf16.mxu0 0
      %619 = vmatpush1.bf16.msra.mxu0 0
      %620 = vmatprep.subr.bf16.mxu0 0
      %621 = vmatpush1.bf16.msra.mxu0 0
      %622 = vmatprep.subr.bf16.mxu0 0
      %623 = vmatpush1.bf16.msra.mxu0 0
      %624 = vmatprep.subr.bf16.mxu0 0
      %625 = vmatpush1.bf16.msra.mxu0 0
      %626 = vmatprep.subr.bf16.mxu0 0
      %627 = vmatpush1.bf16.msra.mxu0 0
      %628 = vmatprep.subr.bf16.mxu0 0
      %629 = vmatpush1.bf16.msra.mxu0 0
      %630 = vmatprep.subr.bf16.mxu0 0
      %631 = vmatpush1.bf16.msra.mxu0 0
      %632 = vmatprep.subr.bf16.mxu0 0
      %633 = vmatpush1.bf16.msra.mxu0 0
      %634 = vmatprep.subr.bf16.mxu0 0
      %635 = vmatpush1.bf16.msra.mxu0 0
      %636 = vmatprep.mubr.bf16.mxu0 0
      %637 = vmatmul.mubr.bf16.gmra.mrb[0].mxu0 %v599
      %v638 = vpop.f32.mrb[0].mxu0
      %v639 = vadd.f32 0.0, %v638
      %v640 = vpop.f32.mrb[0].mxu0
      %v641 = vpop.f32.mrb[0].mxu0
      %v642 = vpop.f32.mrb[0].mxu0
      %643 = vdwg.mxu0
      %v645 = vsel %vm272, %v504, 0
      %v648 = vsel %vm508, %v264, 0
      %650 = vmatprep.subr.bf16.mxu0 0
      %651 = vmatpush1.bf16.msra.mxu0 %v648
      %652 = vmatprep.subr.bf16.mxu0 0
      %653 = vmatpush1.bf16.msra.mxu0 0
      %654 = vmatprep.subr.bf16.mxu0 0
      %655 = vmatpush1.bf16.msra.mxu0 0
      %656 = vmatprep.subr.bf16.mxu0 0
      %657 = vmatpush1.bf16.msra.mxu0 0
      %658 = vmatprep.subr.bf16.mxu0 0
      %659 = vmatpush1.bf16.msra.mxu0 0
      %660 = vmatprep.subr.bf16.mxu0 0
      %661 = vmatpush1.bf16.msra.mxu0 0
      %662 = vmatprep.subr.bf16.mxu0 0
      %663 = vmatpush1.bf16.msra.mxu0 0
      %664 = vmatprep.subr.bf16.mxu0 0
      %665 = vmatpush1.bf16.msra.mxu0 0
      %666 = vmatprep.subr.bf16.mxu0 0
      %667 = vmatpush1.bf16.msra.mxu0 0
      %668 = vmatprep.subr.bf16.mxu0 0
      %669 = vmatpush1.bf16.msra.mxu0 0
      %670 = vmatprep.subr.bf16.mxu0 0
      %671 = vmatpush1.bf16.msra.mxu0 0
      %672 = vmatprep.subr.bf16.mxu0 0
      %673 = vmatpush1.bf16.msra.mxu0 0
      %674 = vmatprep.subr.bf16.mxu0 0
      %675 = vmatpush1.bf16.msra.mxu0 0
      %676 = vmatprep.subr.bf16.mxu0 0
      %677 = vmatpush1.bf16.msra.mxu0 0
      %678 = vmatprep.subr.bf16.mxu0 0
      %679 = vmatpush1.bf16.msra.mxu0 0
      %680 = vmatprep.subr.bf16.mxu0 0
      %681 = vmatpush1.bf16.msra.mxu0 0
      %682 = vmatprep.mubr.bf16.mxu0 0
      %683 = vmatmul.mubr.bf16.gmra.mrb[0].mxu0 %v645
      %v684 = vpop.f32.mrb[0].mxu0
      %v685 = vadd.f32 0.0, %v684
      %v686 = vpop.f32.mrb[0].mxu0
      %v687 = vpop.f32.mrb[0].mxu0
      %v688 = vpop.f32.mrb[0].mxu0
      %689 = vdwg.mxu0
      %v690 = vpack.c.bf16 %v547, %v547
      %v691 = vpack.c.bf16 %v593, %v593
      %v692 = vpack.c.bf16 %v639, %v639
      %v693 = vpack.c.bf16 %v685, %v685
      %vm694 = vcmask 60416
      %695 = vst.msk [vmem:[%s251] sm:$0xf] %vm694, %v690
      %696 = vst.msk [vmem:[%s251 + $0x4] sm:$0xf] %vm694, %v691
      %697 = vst.msk [vmem:[%s251 + $0x8] sm:$0xf] %vm694, %v692
      %698 = vst.msk [vmem:[%s251 + $0xc] sm:$0xf] %vm694, %v693
      %p699 = scmp.lt.s32.totalorder %s15, 1
      %s700 = scalar_select %p699, %s15, 1
      %s701 = smul.addr %s700, 4
      %s702 = smul.addr %s701, 4
      %s703 = scalar_lea.vmem %s4, %s702
      // Predicated region
      $region37: #{coep_encoder_forward.47} parent=35 // pred_check
        %p704 = pneg %p137
      $region38: #{coep_encoder_forward.47} parent=35 // pred_check_branch
        %706 = sbr.rel (%p704) target = $region40
      $region39: #{coep_encoder_forward.47} parent=35 // pred_region
        _
      $region40: #{coep_encoder_forward.47} parent=35 // pred_fallthru
        _
    $region36: #{coep_encoder_forward.47} parent=5 // pred_fallthru
      _
    %p707 = scmp.le.s32.totalorder 2, %s10
    // Predicated region
    $region41: #{coep_encoder_forward.47} parent=5 // pred_check
      %p708 = pneg %p707
    $region42: #{coep_encoder_forward.47} parent=5 // pred_check_branch
      %710 = sbr.rel (%p708) target = $region44
    $region43: #{coep_encoder_forward.47} parent=5 // pred_region
      %s711 = ssub.s32 %s10, 2
      // Predicated region
      $region45: #{coep_encoder_forward.47} parent=43 // pred_check
        %p712 = pneg %p143
      $region46: #{coep_encoder_forward.47} parent=43 // pred_check_branch
        %714 = sbr.rel (%p712) target = $region48
      $region47: #{coep_encoder_forward.47} parent=43 // pred_region
        %p715 = scmp.lt.s32.totalorder %s16, 1
        %s716 = scalar_select %p715, %s16, 1
        %s717 = smul.addr %s716, 4
        %s718 = smul.addr %s717, 4
        %s719 = scalar_lea.vmem %s4, %s718
      $region48: #{coep_encoder_forward.47} parent=43 // pred_fallthru
        _
    $region44: #{coep_encoder_forward.47} parent=5 // pred_fallthru
      _
  $region6: #{coep_encoder_forward.47} parent=0 // loop_footer
    %s14 = sadd.s32 1, %s10
  $region7: #{coep_encoder_forward.47} parent=0 // loop_footer_branch
    %9 = sbr.rel target = $region3
  $region8: #{coep_encoder_forward.47} parent=0 // loop_exit
    _

// kernel: coep_encoder_forward.50
$region0: #{coep_encoder_forward.50}
  #allocation0 [shape = 'u32[]', space=smem, size = 0x4, offset = 0x4, fixed_abs, tag = 'smem constant byte address 0x4 - core index']
  #allocation1 [shape = 'u32[144,128]{1,0:T(1,128)}', space=vmem, size = 0x12000, scoped, tag = 'internal scratch']
  %s0 = inlined_call_operand.vmem [shape: bf16[16,32], index: 0, kind: input, shape index: {}]
  %s1 = inlined_call_operand.vmem [shape: bf16[32,64], index: 1, kind: input, shape index: {}]
  %s2 = inlined_call_operand.vmem [shape: f32[1,64], index: 2, kind: input, shape index: {}]
  %s3 = inlined_call_operand.vmem [shape: bf16[16,64], index: 3, kind: output, shape index: {}]
  %s4 = sld [smem:[#allocation0]]
  $region22: #{coep_encoder_forward.50} parent=0
    _
  %s6 = ssub.s32 1, %s4
  %s7 = scalar_select 0, %s6, %s4
  // Predicated region
  $region2: #{coep_encoder_forward.50} parent=0 // pred_check
    _
  $region3: #{coep_encoder_forward.50} parent=0 // pred_check_branch
    %9 = sbr.rel (0) target = $region5
  $region4: #{coep_encoder_forward.50} parent=0 // pred_region
    _
  $region5: #{coep_encoder_forward.50} parent=0 // pred_fallthru
    _
  // Predicated region
  $region6: #{coep_encoder_forward.50} parent=0 // pred_check
    _
  $region7: #{coep_encoder_forward.50} parent=0 // pred_check_branch
    %11 = sbr.rel (0) target = $region9
  $region8: #{coep_encoder_forward.50} parent=0 // pred_region
    _
  $region9: #{coep_encoder_forward.50} parent=0 // pred_fallthru
    _
  // Predicated region
  $region10: #{coep_encoder_forward.50} parent=0 // pred_check
    _
  $region11: #{coep_encoder_forward.50} parent=0 // pred_check_branch
    %13 = sbr.rel (0) target = $region13
  $region12: #{coep_encoder_forward.50} parent=0 // pred_region
    _
  $region13: #{coep_encoder_forward.50} parent=0 // pred_fallthru
    _
  %v15 = vld [vmem:[%s0] sm:$0xf]
  %v16 = vld [vmem:[%s0 + $0x4] sm:$0xf]
  %v17 = vld [vmem:[%s1] sm:$0xf]
  %v18 = vld [vmem:[%s1 + $0x4] sm:$0xf]
  %v19 = vld [vmem:[%s1 + $0x8] sm:$0xf]
  %v20 = vld [vmem:[%s1 + $0xc] sm:$0xf]
  %v21 = vld [vmem:[%s2] sm:$0x1]
  %v23 = vlaneseq
  %v24 = vshrl.u32 %v23, 7
  %v25 = vsub.s32 0, %v24
  %v26 = vrot.slane %v21, %v25
  %v30 = vunpack.c.l.b16 %v15
  %v31 = vunpack.c.l.b16 %v16
  %v32 = vpack.c.b16 %v31, %v30
  %v37 = vunpack.c.l.b16 %v17
  %v38 = vunpack.c.l.b16 %v18
  %v39 = vunpack.c.l.b16 %v19
  %v40 = vunpack.c.l.b16 %v20
  %v41 = vpack.c.b16 %v38, %v37
  %v42 = vpack.c.b16 %v40, %v39
  %vm45 = vcmask 261120
  %v47 = vsel %vm45, %v32, 0
  %49 = vmatprep.subr.bf16.mxu0 0
  %50 = vmatpush1.bf16.msra.mxu0 %v41
  %51 = vmatprep.subr.bf16.mxu0 0
  %52 = vmatpush1.bf16.msra.mxu0 %v42
  %53 = vmatprep.subr.bf16.mxu0 0
  %54 = vmatpush1.bf16.msra.mxu0 0
  %55 = vmatprep.subr.bf16.mxu0 0
  %56 = vmatpush1.bf16.msra.mxu0 0
  %57 = vmatprep.subr.bf16.mxu0 0
  %58 = vmatpush1.bf16.msra.mxu0 0
  %59 = vmatprep.subr.bf16.mxu0 0
  %60 = vmatpush1.bf16.msra.mxu0 0
  %61 = vmatprep.subr.bf16.mxu0 0
  %62 = vmatpush1.bf16.msra.mxu0 0
  %63 = vmatprep.subr.bf16.mxu0 0
  %64 = vmatpush1.bf16.msra.mxu0 0
  %65 = vmatprep.subr.bf16.mxu0 0
  %66 = vmatpush1.bf16.msra.mxu0 0
  %67 = vmatprep.subr.bf16.mxu0 0
  %68 = vmatpush1.bf16.msra.mxu0 0
  %69 = vmatprep.subr.bf16.mxu0 0
  %70 = vmatpush1.bf16.msra.mxu0 0
  %71 = vmatprep.subr.bf16.mxu0 0
  %72 = vmatpush1.bf16.msra.mxu0 0
  %73 = vmatprep.subr.bf16.mxu0 0
  %74 = vmatpush1.bf16.msra.mxu0 0
  %75 = vmatprep.subr.bf16.mxu0 0
  %76 = vmatpush1.bf16.msra.mxu0 0
  %77 = vmatprep.subr.bf16.mxu0 0
  %78 = vmatpush1.bf16.msra.mxu0 0
  %79 = vmatprep.subr.bf16.mxu0 0
  %80 = vmatpush1.bf16.msra.mxu0 0
  %81 = vmatprep.mubr.bf16.mxu0 0
  %82 = vmatmul.mubr.bf16.gmra.mrb[0].mxu0 %v47
  %v83 = vpop.f32.mrb[0].mxu0
  %v84 = vadd.f32 %v26, %v83
  %v85 = vpop.f32.mrb[0].mxu0
  %v86 = vpop.f32.mrb[0].mxu0
  %v87 = vadd.f32 %v26, %v86
  %v88 = vpop.f32.mrb[0].mxu0
  %89 = vdwg.mxu0
  %v90 = vpack.c.bf16 %v87, %v84
  %v92 = vunpack.c.l.b16 %v90
  %v93 = vunpack.c.h.b16 %v90
  %v94 = vpack.c.b16 %v92, %v92
  %v95 = vpack.c.b16 %v93, %v93
  %vm98 = vcmask 519168
  %99 = vst.msk [vmem:[%s3] sm:$0xf] %vm98, %v94
  %100 = vst.msk [vmem:[%s3 + $0x4] sm:$0xf] %vm98, %v95
  // Predicated region
  $region14: #{coep_encoder_forward.50} parent=0 // pred_check
    _
  $region15: #{coep_encoder_forward.50} parent=0 // pred_check_branch
    %102 = sbr.rel (0) target = $region17
  $region16: #{coep_encoder_forward.50} parent=0 // pred_region
    _
  $region17: #{coep_encoder_forward.50} parent=0 // pred_fallthru
    _
  // Predicated region
  $region18: #{coep_encoder_forward.50} parent=0 // pred_check
    _
  $region19: #{coep_encoder_forward.50} parent=0 // pred_check_branch
    %104 = sbr.rel (0) target = $region21
  $region20: #{coep_encoder_forward.50} parent=0 // pred_region
    _
  $region21: #{coep_encoder_forward.50} parent=0 // pred_fallthru
    _

// kernel: coep_encoder_forward.49
$region0: #{coep_encoder_forward.49}
  #allocation0 [shape = 'u32[]', space=smem, size = 0x4, offset = 0x4, fixed_abs, tag = 'smem constant byte address 0x4 - core index']
  #allocation1 [shape = 'u32[144,128]{1,0:T(1,128)}', space=vmem, size = 0x12000, scoped, tag = 'internal scratch']
  %s0 = inlined_call_operand.vmem [shape: bf16[16,32], index: 0, kind: input, shape index: {}]
  %s1 = inlined_call_operand.vmem [shape: bf16[16,32], index: 1, kind: input, shape index: {}]
  %s2 = inlined_call_operand.vmem [shape: f32[1,32], index: 2, kind: input, shape index: {}]
  %s3 = inlined_call_operand.vmem [shape: f32[1,32], index: 3, kind: input, shape index: {}]
  %s4 = inlined_call_operand.vmem [shape: bf16[16,32], index: 4, kind: output, shape index: {}]
  %s5 = sld [smem:[#allocation0]]
  $region26: #{coep_encoder_forward.49} parent=0
    _
  %s7 = ssub.s32 1, %s5
  %s8 = scalar_select 0, %s7, %s5
  // Predicated region
  $region2: #{coep_encoder_forward.49} parent=0 // pred_check
    _
  $region3: #{coep_encoder_forward.49} parent=0 // pred_check_branch
    %10 = sbr.rel (0) target = $region5
  $region4: #{coep_encoder_forward.49} parent=0 // pred_region
    _
  $region5: #{coep_encoder_forward.49} parent=0 // pred_fallthru
    _
  // Predicated region
  $region6: #{coep_encoder_forward.49} parent=0 // pred_check
    _
  $region7: #{coep_encoder_forward.49} parent=0 // pred_check_branch
    %12 = sbr.rel (0) target = $region9
  $region8: #{coep_encoder_forward.49} parent=0 // pred_region
    _
  $region9: #{coep_encoder_forward.49} parent=0 // pred_fallthru
    _
  // Predicated region
  $region10: #{coep_encoder_forward.49} parent=0 // pred_check
    _
  $region11: #{coep_encoder_forward.49} parent=0 // pred_check_branch
    %14 = sbr.rel (0) target = $region13
  $region12: #{coep_encoder_forward.49} parent=0 // pred_region
    _
  $region13: #{coep_encoder_forward.49} parent=0 // pred_fallthru
    _
  // Predicated region
  $region14: #{coep_encoder_forward.49} parent=0 // pred_check
    _
  $region15: #{coep_encoder_forward.49} parent=0 // pred_check_branch
    %16 = sbr.rel (0) target = $region17
  $region16: #{coep_encoder_forward.49} parent=0 // pred_region
    _
  $region17: #{coep_encoder_forward.49} parent=0 // pred_fallthru
    _
  %v17 = vld [vmem:[%s0] sm:$0xf]
  %v18 = vld [vmem:[%s0 + $0x4] sm:$0xf]
  %v19 = vunpack.c.l.bf16 %v17
  %v20 = vunpack.c.l.bf16 %v18
  %v21 = vld [vmem:[%s1] sm:$0xf]
  %v22 = vld [vmem:[%s1 + $0x4] sm:$0xf]
  %v23 = vunpack.c.l.bf16 %v21
  %v24 = vunpack.c.l.bf16 %v22
  %v25 = vadd.f32 %v19, %v23
  %v26 = vadd.f32 %v20, %v24
  %vm27 = vcmask 261120
  %v28 = vsel %vm27, %v25, 0.0
  %29 = vadd.xlane.f32.xlu0 %v28
  %v30 = vpop.xlane.xlu0 %29
  %v31 = vsel %vm27, %v26, 0.0
  %32 = vadd.xlane.f32.xlu0 %v31
  %v33 = vpop.xlane.xlu0 %32
  %v34 = vrcp.pop 32.0
  %v35 = vmul.f32 %v30, %v34
  %v36 = vmul.f32 %v33, %v34
  %v37 = vsub.f32 %v25, %v35
  %v38 = vsub.f32 %v26, %v36
  %v39 = vmul.f32 %v37, %v37
  %v40 = vmul.f32 %v38, %v38
  %v41 = vsel %vm27, %v39, 0.0
  %42 = vadd.xlane.f32.xlu0 %v41
  %v43 = vpop.xlane.xlu0 %42
  %v44 = vsel %vm27, %v40, 0.0
  %45 = vadd.xlane.f32.xlu0 %v44
  %v46 = vpop.xlane.xlu0 %45
  %v47 = vmul.f32 %v43, %v34
  %v48 = vmul.f32 %v46, %v34
  %v49 = vadd.f32 %v47, 1e-05
  %v50 = vadd.f32 %v48, 1e-05
  %v51 = vrsqrt.pop %v49
  %v52 = vrsqrt.pop %v50
  %v53 = vmul.f32 %v37, %v51
  %v54 = vmul.f32 %v38, %v52
  %v55 = vld [vmem:[%s2] sm:$0x1]
  %v57 = vlaneseq
  %v58 = vshrl.u32 %v57, 7
  %v59 = vsub.s32 0, %v58
  %v60 = vrot.slane %v55, %v59
  %v62 = vmul.f32 %v53, %v60
  %v63 = vmul.f32 %v54, %v60
  %v64 = vld [vmem:[%s3] sm:$0x1]
  %v66 = vlaneseq
  %v67 = vshrl.u32 %v66, 7
  %v68 = vsub.s32 0, %v67
  %v69 = vrot.slane %v64, %v68
  %v71 = vadd.f32 %v62, %v69
  %v72 = vadd.f32 %v63, %v69
  %v73 = vpack.c.bf16 %v72, %v71
  %v75 = vunpack.c.l.b16 %v73
  %v76 = vunpack.c.h.b16 %v73
  %v77 = vpack.c.b16 %v75, %v75
  %v78 = vpack.c.b16 %v76, %v76
  %vm81 = vcmask 257024
  %82 = vst.msk [vmem:[%s4] sm:$0xf] %vm81, %v77
  %83 = vst.msk [vmem:[%s4 + $0x4] sm:$0xf] %vm81, %v78
  // Predicated region
  $region18: #{coep_encoder_forward.49} parent=0 // pred_check
    _
  $region19: #{coep_encoder_forward.49} parent=0 // pred_check_branch
    %85 = sbr.rel (0) target = $region21
  $region20: #{coep_encoder_forward.49} parent=0 // pred_region
    _
  $region21: #{coep_encoder_forward.49} parent=0 // pred_fallthru
    _
  // Predicated region
  $region22: #{coep_encoder_forward.49} parent=0 // pred_check
    _
  $region23: #{coep_encoder_forward.49} parent=0 // pred_check_branch
    %87 = sbr.rel (0) target = $region25
  $region24: #{coep_encoder_forward.49} parent=0 // pred_region
    _
  $region25: #{coep_encoder_forward.49} parent=0 // pred_fallthru
    _

// kernel: coep_encoder_forward.51
$region0: #{coep_encoder_forward.51}
  #allocation0 [shape = 'u32[]', space=smem, size = 0x4, offset = 0x4, fixed_abs, tag = 'smem constant byte address 0x4 - core index']
  #allocation1 [shape = 'u32[144,128]{1,0:T(1,128)}', space=vmem, size = 0x12000, scoped, tag = 'internal scratch']
  %s0 = inlined_call_operand.vmem [shape: bf16[16,64], index: 0, kind: input, shape index: {}]
  %s1 = inlined_call_operand.vmem [shape: bf16[64,32], index: 1, kind: input, shape index: {}]
  %s2 = inlined_call_operand.vmem [shape: f32[1,32], index: 2, kind: input, shape index: {}]
  %s3 = inlined_call_operand.vmem [shape: bf16[16,32], index: 3, kind: output, shape index: {}]
  %s4 = sld [smem:[#allocation0]]
  $region22: #{coep_encoder_forward.51} parent=0
    _
  %s6 = ssub.s32 1, %s4
  %s7 = scalar_select 0, %s6, %s4
  // Predicated region
  $region2: #{coep_encoder_forward.51} parent=0 // pred_check
    _
  $region3: #{coep_encoder_forward.51} parent=0 // pred_check_branch
    %9 = sbr.rel (0) target = $region5
  $region4: #{coep_encoder_forward.51} parent=0 // pred_region
    _
  $region5: #{coep_encoder_forward.51} parent=0 // pred_fallthru
    _
  // Predicated region
  $region6: #{coep_encoder_forward.51} parent=0 // pred_check
    _
  $region7: #{coep_encoder_forward.51} parent=0 // pred_check_branch
    %11 = sbr.rel (0) target = $region9
  $region8: #{coep_encoder_forward.51} parent=0 // pred_region
    _
  $region9: #{coep_encoder_forward.51} parent=0 // pred_fallthru
    _
  // Predicated region
  $region10: #{coep_encoder_forward.51} parent=0 // pred_check
    _
  $region11: #{coep_encoder_forward.51} parent=0 // pred_check_branch
    %13 = sbr.rel (0) target = $region13
  $region12: #{coep_encoder_forward.51} parent=0 // pred_region
    _
  $region13: #{coep_encoder_forward.51} parent=0 // pred_fallthru
    _
  %v15 = vld [vmem:[%s0] sm:$0xf]
  %v16 = vld [vmem:[%s0 + $0x4] sm:$0xf]
  %v17 = vld [vmem:[%s1] sm:$0xf]
  %v18 = vld [vmem:[%s1 + $0x4] sm:$0xf]
  %v19 = vld [vmem:[%s1 + $0x8] sm:$0xf]
  %v20 = vld [vmem:[%s1 + $0xc] sm:$0xf]
  %v21 = vld [vmem:[%s1 + $0x10] sm:$0xf]
  %v22 = vld [vmem:[%s1 + $0x14] sm:$0xf]
  %v23 = vld [vmem:[%s1 + $0x18] sm:$0xf]
  %v24 = vld [vmem:[%s1 + $0x1c] sm:$0xf]
  %v25 = vld [vmem:[%s2] sm:$0x1]
  %v27 = vlaneseq
  %v28 = vshrl.u32 %v27, 7
  %v29 = vsub.s32 0, %v28
  %v30 = vrot.slane %v25, %v29
  %v34 = vunpack.c.l.b16 %v15
  %v35 = vunpack.c.l.b16 %v16
  %v36 = vpack.c.b16 %v35, %v34
  %v45 = vunpack.c.l.b16 %v17
  %v46 = vunpack.c.l.b16 %v18
  %v47 = vunpack.c.l.b16 %v19
  %v48 = vunpack.c.l.b16 %v20
  %v49 = vunpack.c.l.b16 %v21
  %v50 = vunpack.c.l.b16 %v22
  %v51 = vunpack.c.l.b16 %v23
  %v52 = vunpack.c.l.b16 %v24
  %v53 = vpack.c.b16 %v46, %v45
  %v54 = vpack.c.b16 %v48, %v47
  %v55 = vpack.c.b16 %v50, %v49
  %v56 = vpack.c.b16 %v52, %v51
  %vm61 = vcmask 523264
  %v63 = vsel %vm61, %v36, 0
  %65 = vmatprep.subr.bf16.mxu0 0
  %66 = vmatpush1.bf16.msra.mxu0 %v53
  %67 = vmatprep.subr.bf16.mxu0 0
  %68 = vmatpush1.bf16.msra.mxu0 %v54
  %69 = vmatprep.subr.bf16.mxu0 0
  %70 = vmatpush1.bf16.msra.mxu0 %v55
  %71 = vmatprep.subr.bf16.mxu0 0
  %72 = vmatpush1.bf16.msra.mxu0 %v56
  %73 = vmatprep.subr.bf16.mxu0 0
  %74 = vmatpush1.bf16.msra.mxu0 0
  %75 = vmatprep.subr.bf16.mxu0 0
  %76 = vmatpush1.bf16.msra.mxu0 0
  %77 = vmatprep.subr.bf16.mxu0 0
  %78 = vmatpush1.bf16.msra.mxu0 0
  %79 = vmatprep.subr.bf16.mxu0 0
  %80 = vmatpush1.bf16.msra.mxu0 0
  %81 = vmatprep.subr.bf16.mxu0 0
  %82 = vmatpush1.bf16.msra.mxu0 0
  %83 = vmatprep.subr.bf16.mxu0 0
  %84 = vmatpush1.bf16.msra.mxu0 0
  %85 = vmatprep.subr.bf16.mxu0 0
  %86 = vmatpush1.bf16.msra.mxu0 0
  %87 = vmatprep.subr.bf16.mxu0 0
  %88 = vmatpush1.bf16.msra.mxu0 0
  %89 = vmatprep.subr.bf16.mxu0 0
  %90 = vmatpush1.bf16.msra.mxu0 0
  %91 = vmatprep.subr.bf16.mxu0 0
  %92 = vmatpush1.bf16.msra.mxu0 0
  %93 = vmatprep.subr.bf16.mxu0 0
  %94 = vmatpush1.bf16.msra.mxu0 0
  %95 = vmatprep.subr.bf16.mxu0 0
  %96 = vmatpush1.bf16.msra.mxu0 0
  %97 = vmatprep.mubr.bf16.mxu0 0
  %98 = vmatmul.mubr.bf16.gmra.mrb[0].mxu0 %v63
  %v99 = vpop.f32.mrb[0].mxu0
  %v100 = vadd.f32 %v30, %v99
  %v101 = vpop.f32.mrb[0].mxu0
  %v102 = vpop.f32.mrb[0].mxu0
  %v103 = vadd.f32 %v30, %v102
  %v104 = vpop.f32.mrb[0].mxu0
  %105 = vdwg.mxu0
  %v106 = vpack.c.bf16 %v103, %v100
  %v108 = vunpack.c.l.b16 %v106
  %v109 = vunpack.c.h.b16 %v106
  %v110 = vpack.c.b16 %v108, %v108
  %v111 = vpack.c.b16 %v109, %v109
  %vm114 = vcmask 257024
  %115 = vst.msk [vmem:[%s3] sm:$0xf] %vm114, %v110
  %116 = vst.msk [vmem:[%s3 + $0x4] sm:$0xf] %vm114, %v111
  // Predicated region
  $region14: #{coep_encoder_forward.51} parent=0 // pred_check
    _
  $region15: #{coep_encoder_forward.51} parent=0 // pred_check_branch
    %118 = sbr.rel (0) target = $region17
  $region16: #{coep_encoder_forward.51} parent=0 // pred_region
    _
  $region17: #{coep_encoder_forward.51} parent=0 // pred_fallthru
    _
  // Predicated region
  $region18: #{coep_encoder_forward.51} parent=0 // pred_check
    _
  $region19: #{coep_encoder_forward.51} parent=0 // pred_check_branch
    %120 = sbr.rel (0) target = $region21
  $region20: #{coep_encoder_forward.51} parent=0 // pred_region
    _
  $region21: #{coep_encoder_forward.51} parent=0 // pred_fallthru
    _

</llo_original>
